<compile_context>
chip_gen: v6e
topology: v6e:2x2x1
jax: 0.10.0
libtpu: 0.0.40
codegen_flags: <defaults>
</compile_context>

<pallas_src>
import math
import jax
import jax.numpy as jnp
from jax.experimental import pallas as pl
from jax.experimental.pallas import tpu as pltpu

# ---------------- config (small, consistent with SiglipVisionConfig) ----------
IMAGE_SIZE = 16
PATCH_SIZE = 4
NUM_CHANNELS = 3
HIDDEN = 128
NUM_LAYERS = 2
NUM_HEADS = 4
HEAD_DIM = HIDDEN // NUM_HEADS
INTERMEDIATE = 256
LN_EPS = 1e-6
NUM_PATCHES = (IMAGE_SIZE // PATCH_SIZE) ** 2          # 16
PATCH_DIM = NUM_CHANNELS * PATCH_SIZE * PATCH_SIZE     # 48
PATCH_DIM_PAD = 128                                    # lane-aligned im2col dim
BATCH = 2
SCALE = HEAD_DIM ** (-0.5)


# ---------------- in-kernel helpers -------------------------------------------
def _layernorm(x, g, b):
    mu = jnp.mean(x, axis=-1, keepdims=True)
    var = jnp.mean((x - mu) ** 2, axis=-1, keepdims=True)
    return (x - mu) * jax.lax.rsqrt(var + LN_EPS) * g + b


def _gelu_tanh(x):
    c = math.sqrt(2.0 / math.pi)
    return 0.5 * x * (1.0 + jnp.tanh(c * (x + 0.044715 * x * x * x)))


# ---------------- fully fused forward kernel -----------------------------------
def siglip_fwd_kernel(patches_ref,          # (1, N, 128)  bf16
                      pw_ref,               # (128, HIDDEN) bf16 (zero-padded rows)
                      posb_ref,             # (N, HIDDEN)   f32 (pos_emb + patch bias)
                      wqkv_ref,             # (L, HIDDEN, 3*HIDDEN) bf16
                      bqkv_ref,             # (L, 1, 3*HIDDEN)      f32
                      woh_ref,              # (L, NUM_HEADS, HEAD_DIM, HIDDEN) bf16
                      w1_ref,               # (L, HIDDEN, INTERMEDIATE) bf16
                      b1_ref,               # (L, 1, INTERMEDIATE)      f32
                      w2_ref,               # (L, INTERMEDIATE, HIDDEN) bf16
                      vec_ref,              # (L, 8, HIDDEN) f32: ln1g,ln1b,ln2g,ln2b,bo,b_fc2,pad,pad
                      postln_ref,           # (2, HIDDEN) f32: gamma, beta
                      out_ref):             # (1, N, HIDDEN) f32
    bf16 = jnp.bfloat16
    f32 = jnp.float32

    # ---- patch embedding + position embedding ----
    x = jnp.dot(patches_ref[0], pw_ref[...], preferred_element_type=f32)
    x = x + posb_ref[...]                                   # (N, HIDDEN) f32

    # ---- encoder layers (unrolled) ----
    for l in range(NUM_LAYERS):
        vec = vec_ref[l]                                    # (8, HIDDEN)
        ln1_g, ln1_b = vec[0:1], vec[1:2]
        ln2_g, ln2_b = vec[2:3], vec[3:4]
        bo, b_fc2 = vec[4:5], vec[5:6]

        # LayerNorm 1 + fused QKV projection
        h = _layernorm(x, ln1_g, ln1_b)
        qkv = jnp.dot(h.astype(bf16), wqkv_ref[l],
                      preferred_element_type=f32) + bqkv_ref[l]   # (N, 3*HIDDEN)

        # per-head attention; accumulate directly through per-head Wo slices
        # (no lane-concatenate of head outputs).
        attn = jnp.zeros((NUM_PATCHES, HIDDEN), f32)
        for hd in range(NUM_HEADS):
            q = qkv[:, hd * HEAD_DIM:(hd + 1) * HEAD_DIM]                       # (N, 32)
            k = qkv[:, HIDDEN + hd * HEAD_DIM:HIDDEN + (hd + 1) * HEAD_DIM]
            v = qkv[:, 2 * HIDDEN + hd * HEAD_DIM:2 * HIDDEN + (hd + 1) * HEAD_DIM]
            s = jnp.dot(q, k.T, preferred_element_type=f32) * SCALE             # (N, N)
            s = s - jnp.max(s, axis=-1, keepdims=True)
            p = jnp.exp(s)
            p = p * pl.reciprocal(jnp.sum(p, axis=-1, keepdims=True), approx=True)
            o = jnp.dot(p, v, preferred_element_type=f32)                       # (N, 32)
            attn = attn + jnp.dot(o.astype(bf16), woh_ref[l, hd],
                                  preferred_element_type=f32)                   # (N, HIDDEN)
        x = x + attn + bo                                   # residual 1

        # LayerNorm 2 + MLP (gelu-tanh)
        h2 = _layernorm(x, ln2_g, ln2_b)
        m = jnp.dot(h2.astype(bf16), w1_ref[l],
                    preferred_element_type=f32) + b1_ref[l]                     # (N, INTER)
        m = _gelu_tanh(m)
        m = jnp.dot(m.astype(bf16), w2_ref[l],
                    preferred_element_type=f32) + b_fc2                         # (N, HIDDEN)
        x = x + m                                           # residual 2

    # ---- final post layernorm ----
    pln = postln_ref[...]
    out_ref[0] = _layernorm(x, pln[0:1], pln[1:2])


# ---------------- spec helpers ---------------------------------------------------
def _full_spec(shape):
    nd = len(shape)
    return pl.BlockSpec(shape, lambda b, _nd=nd: (0,) * _nd)


# ---------------- wrapper ---------------------------------------------------------
def siglip_vision_model(pixel_values, packed):
    """pixel_values: (B, C, H, W) float32 (NCHW, same as PyTorch)."""
    B, C, H, W = pixel_values.shape
    hp, wp = H // PATCH_SIZE, W // PATCH_SIZE
    # im2col: (B, C, hp, P, wp, P) -> (B, hp, wp, C, P, P) -> (B, N, C*P*P)
    patches = pixel_values.reshape(B, C, hp, PATCH_SIZE, wp, PATCH_SIZE)
    patches = patches.transpose(0, 2, 4, 1, 3, 5).reshape(B, hp * wp, PATCH_DIM)
    # lane-align the feature dim (48 -> 128) with zeros; patch_w rows are padded too
    patches = jnp.pad(patches, ((0, 0), (0, 0), (0, PATCH_DIM_PAD - PATCH_DIM)))
    patches = patches.astype(jnp.bfloat16)

    args = (patches, packed["pw"], packed["posb"], packed["wqkv"], packed["bqkv"],
            packed["woh"], packed["w1"], packed["b1"], packed["w2"],
            packed["vec"], packed["post_ln"])

    in_specs = [pl.BlockSpec((1, NUM_PATCHES, PATCH_DIM_PAD), lambda b: (b, 0, 0))]
    in_specs += [_full_spec(a.shape) for a in args[1:]]

    return pl.pallas_call(
        siglip_fwd_kernel,
        out_shape=jax.ShapeDtypeStruct((B, NUM_PATCHES, HIDDEN), jnp.float32),
        grid=(B,),
        in_specs=in_specs,
        out_specs=pl.BlockSpec((1, NUM_PATCHES, HIDDEN), lambda b: (b, 0, 0)),
        compiler_params=pltpu.CompilerParams(dimension_semantics=("parallel",)),
    )(*args)


# ---------------- parameter init (PyTorch layouts) + packing -----------------------
def init_params(key):
    """Parameters in PyTorch module layout: Linear weights (out, in), conv (out, C, P, P)."""
    def nrm(k, shape, scale=0.02):
        return (scale * jax.random.normal(k, shape)).astype(jnp.float32)

    keys = jax.random.split(key, 2 + NUM_LAYERS)
    params = {
        "patch_w": nrm(keys[0], (HIDDEN, NUM_CHANNELS, PATCH_SIZE, PATCH_SIZE)),
        "patch_b": jnp.zeros((HIDDEN,), jnp.float32),
        "pos_emb": nrm(keys[1], (NUM_PATCHES, HIDDEN)),
        "post_ln_g": jnp.ones((HIDDEN,), jnp.float32),
        "post_ln_b": jnp.zeros((HIDDEN,), jnp.float32),
        "layers": [],
    }
    for li in range(NUM_LAYERS):
        lk = jax.random.split(keys[2 + li], 6)
        params["layers"].append({
            "ln1_g": jnp.ones((HIDDEN,), jnp.float32),
            "ln1_b": jnp.zeros((HIDDEN,), jnp.float32),
            "wq": nrm(lk[0], (HIDDEN, HIDDEN)), "bq": jnp.zeros((HIDDEN,), jnp.float32),
            "wk": nrm(lk[1], (HIDDEN, HIDDEN)), "bk": jnp.zeros((HIDDEN,), jnp.float32),
            "wv": nrm(lk[2], (HIDDEN, HIDDEN)), "bv": jnp.zeros((HIDDEN,), jnp.float32),
            "wo": nrm(lk[3], (HIDDEN, HIDDEN)), "bo": jnp.zeros((HIDDEN,), jnp.float32),
            "ln2_g": jnp.ones((HIDDEN,), jnp.float32),
            "ln2_b": jnp.zeros((HIDDEN,), jnp.float32),
            "w1": nrm(lk[4], (INTERMEDIATE, HIDDEN)),
            "b1": jnp.zeros((INTERMEDIATE,), jnp.float32),
            "w2": nrm(lk[5], (HIDDEN, INTERMEDIATE)),
            "b2": jnp.zeros((HIDDEN,), jnp.float32),
        })
    return params


def pack_params(p):
    """Fuse / stack / pad / bf16-cast parameters into the kernel layout."""
    f32, bf16 = jnp.float32, jnp.bfloat16
    zero_row = jnp.zeros((HIDDEN,), f32)

    # patch conv -> matmul weight with (c, i, j) feature order, padded 48 -> 128
    pw = p["patch_w"].reshape(HIDDEN, PATCH_DIM).T                      # (48, HIDDEN)
    pw = jnp.pad(pw, ((0, PATCH_DIM_PAD - PATCH_DIM), (0, 0))).astype(bf16)
    posb = (p["pos_emb"] + p["patch_b"][None, :]).astype(f32)           # (N, HIDDEN)

    wqkv, bqkv, woh, w1, b1, w2, vec = [], [], [], [], [], [], []
    for lp in p["layers"]:
        wqkv.append(jnp.concatenate([lp["wq"].T, lp["wk"].T, lp["wv"].T], axis=1))
        bqkv.append(jnp.concatenate([lp["bq"], lp["bk"], lp["bv"]])[None, :])
        woh.append(lp["wo"].T.reshape(NUM_HEADS, HEAD_DIM, HIDDEN))
        w1.append(lp["w1"].T)                                           # (HIDDEN, INTER)
        b1.append(lp["b1"][None, :])
        w2.append(lp["w2"].T)                                           # (INTER, HIDDEN)
        vec.append(jnp.stack([lp["ln1_g"], lp["ln1_b"], lp["ln2_g"], lp["ln2_b"],
                              lp["bo"], lp["b2"], zero_row, zero_row]))

    return {
        "pw": pw,
        "posb": posb,
        "wqkv": jnp.stack(wqkv).astype(bf16),       # (L, HIDDEN, 3*HIDDEN)
        "bqkv": jnp.stack(bqkv).astype(f32),        # (L, 1, 3*HIDDEN)
        "woh": jnp.stack(woh).astype(bf16),         # (L, NH, HEAD_DIM, HIDDEN)
        "w1": jnp.stack(w1).astype(bf16),           # (L, HIDDEN, INTER)
        "b1": jnp.stack(b1).astype(f32),            # (L, 1, INTER)
        "w2": jnp.stack(w2).astype(bf16),           # (L, INTER, HIDDEN)
        "vec": jnp.stack(vec).astype(f32),          # (L, 8, HIDDEN)
        "post_ln": jnp.stack([p["post_ln_g"], p["post_ln_b"]]).astype(f32),  # (2, HIDDEN)
    }


if __name__ == "__main__":
    key = jax.random.PRNGKey(0)
    pkey, xkey = jax.random.split(key)
    params = init_params(pkey)
    packed = pack_params(params)
    pixel_values = jax.random.normal(
        xkey, (BATCH, NUM_CHANNELS, IMAGE_SIZE, IMAGE_SIZE), dtype=jnp.float32)

    fwd = jax.jit(siglip_vision_model)
    out = fwd(pixel_values, packed)
    out = jax.block_until_ready(out)
    assert out.shape == (BATCH, NUM_PATCHES, HIDDEN)
    assert jnp.all(jnp.isfinite(out))
    print("KERNEL_OK")
</pallas_src>

<mosaic_0001>
module attributes {stable_mosaic.version = 11 : i64} {
  func.func @siglip_fwd_kernel(%arg0: i32, %arg1: memref<1x16x128xbf16, #tpu.memory_space<vmem>>, %arg2: memref<128x128xbf16, #tpu.memory_space<vmem>>, %arg3: memref<16x128xf32, #tpu.memory_space<vmem>>, %arg4: memref<2x128x384xbf16, #tpu.memory_space<vmem>>, %arg5: memref<2x1x384xf32, #tpu.memory_space<vmem>>, %arg6: memref<2x4x32x128xbf16, #tpu.memory_space<vmem>>, %arg7: memref<2x128x256xbf16, #tpu.memory_space<vmem>>, %arg8: memref<2x1x256xf32, #tpu.memory_space<vmem>>, %arg9: memref<2x256x128xbf16, #tpu.memory_space<vmem>>, %arg10: memref<2x8x128xf32, #tpu.memory_space<vmem>>, %arg11: memref<2x128xf32, #tpu.memory_space<vmem>>, %arg12: memref<1x16x128xf32, #tpu.memory_space<vmem>>) attributes {dimension_semantics = [#tpu.dimension_semantics<parallel>], iteration_bounds = array<i64: 2>, scalar_prefetch = 0 : i64, scratch_operands = 0 : i64, tpu.core_type = #tpu.core_type<tc>, window_params = [{transform_indices = @transform_0, window_bounds = array<i64: 1, 16, 128>}, {pipeline_mode = #tpu.pipeline_mode<synchronous>, transform_indices = @transform_1, window_bounds = array<i64: 128, 128>}, {pipeline_mode = #tpu.pipeline_mode<synchronous>, transform_indices = @transform_2, window_bounds = array<i64: 16, 128>}, {pipeline_mode = #tpu.pipeline_mode<synchronous>, transform_indices = @transform_3, window_bounds = array<i64: 2, 128, 384>}, {pipeline_mode = #tpu.pipeline_mode<synchronous>, transform_indices = @transform_4, window_bounds = array<i64: 2, 1, 384>}, {pipeline_mode = #tpu.pipeline_mode<synchronous>, transform_indices = @transform_5, window_bounds = array<i64: 2, 4, 32, 128>}, {pipeline_mode = #tpu.pipeline_mode<synchronous>, transform_indices = @transform_6, window_bounds = array<i64: 2, 128, 256>}, {pipeline_mode = #tpu.pipeline_mode<synchronous>, transform_indices = @transform_7, window_bounds = array<i64: 2, 1, 256>}, {pipeline_mode = #tpu.pipeline_mode<synchronous>, transform_indices = @transform_8, window_bounds = array<i64: 2, 256, 128>}, {pipeline_mode = #tpu.pipeline_mode<synchronous>, transform_indices = @transform_9, window_bounds = array<i64: 2, 8, 128>}, {pipeline_mode = #tpu.pipeline_mode<synchronous>, transform_indices = @transform_10, window_bounds = array<i64: 2, 128>}, {transform_indices = @transform_11, window_bounds = array<i64: 1, 16, 128>}]} {
    %c0 = arith.constant 0 : index
    %c0_0 = arith.constant 0 : index
    %c0_1 = arith.constant 0 : index
    %0 = vector.load %arg1[%c0, %c0_0, %c0_1] : memref<1x16x128xbf16, #tpu.memory_space<vmem>>, vector<1x16x128xbf16>
    %1 = vector.shape_cast %0 : vector<1x16x128xbf16> to vector<16x128xbf16>
    %c0_2 = arith.constant 0 : index
    %c0_3 = arith.constant 0 : index
    %2 = vector.load %arg2[%c0_2, %c0_3] : memref<128x128xbf16, #tpu.memory_space<vmem>>, vector<128x128xbf16>
    %cst = arith.constant dense<0.000000e+00> : vector<16x128xf32>
    %3 = tpu.matmul %1, %2, %cst {dimension_numbers = #tpu.dot_dimension_numbers<[1], [0], [0], [1], [0, 0, 1, 1], [], []>} : vector<16x128xbf16>, vector<128x128xbf16>, vector<16x128xf32> -> vector<16x128xf32>
    %c0_4 = arith.constant 0 : index
    %c0_5 = arith.constant 0 : index
    %4 = vector.load %arg3[%c0_4, %c0_5] : memref<16x128xf32, #tpu.memory_space<vmem>>, vector<16x128xf32>
    %5 = arith.addf %3, %4 : vector<16x128xf32>
    %c0_6 = arith.constant 0 : index
    %c0_7 = arith.constant 0 : index
    %c0_8 = arith.constant 0 : index
    %6 = vector.load %arg10[%c0_6, %c0_7, %c0_8] : memref<2x8x128xf32, #tpu.memory_space<vmem>>, vector<1x8x128xf32>
    %7 = vector.shape_cast %6 : vector<1x8x128xf32> to vector<8x128xf32>
    %8 = vector.extract_strided_slice %7 {offsets = [0, 0], sizes = [1, 128], strides = [1, 1]} : vector<8x128xf32> to vector<1x128xf32>
    %9 = vector.extract_strided_slice %7 {offsets = [1, 0], sizes = [1, 128], strides = [1, 1]} : vector<8x128xf32> to vector<1x128xf32>
    %10 = vector.extract_strided_slice %7 {offsets = [2, 0], sizes = [1, 128], strides = [1, 1]} : vector<8x128xf32> to vector<1x128xf32>
    %11 = vector.extract_strided_slice %7 {offsets = [3, 0], sizes = [1, 128], strides = [1, 1]} : vector<8x128xf32> to vector<1x128xf32>
    %12 = vector.extract_strided_slice %7 {offsets = [4, 0], sizes = [1, 128], strides = [1, 1]} : vector<8x128xf32> to vector<1x128xf32>
    %13 = vector.extract_strided_slice %7 {offsets = [5, 0], sizes = [1, 128], strides = [1, 1]} : vector<8x128xf32> to vector<1x128xf32>
    %cst_9 = arith.constant dense<0.000000e+00> : vector<16xf32>
    %14 = vector.multi_reduction <add>, %5, %cst_9 [1] : vector<16x128xf32> to vector<16xf32>
    %15 = vector.shape_cast %14 : vector<16xf32> to vector<16x1xf32>
    %cst_10 = arith.constant 1.280000e+02 : f32
    %16 = vector.broadcast %cst_10 : f32 to vector<16x1xf32>
    %17 = arith.divf %15, %16 : vector<16x1xf32>
    %18 = vector.broadcast %17 : vector<16x1xf32> to vector<16x128xf32>
    %19 = arith.subf %5, %18 : vector<16x128xf32>
    %20 = arith.mulf %19, %19 : vector<16x128xf32>
    %cst_11 = arith.constant dense<0.000000e+00> : vector<16xf32>
    %21 = vector.multi_reduction <add>, %20, %cst_11 [1] : vector<16x128xf32> to vector<16xf32>
    %22 = vector.shape_cast %21 : vector<16xf32> to vector<16x1xf32>
    %cst_12 = arith.constant 1.280000e+02 : f32
    %23 = vector.broadcast %cst_12 : f32 to vector<16x1xf32>
    %24 = arith.divf %22, %23 : vector<16x1xf32>
    %25 = vector.broadcast %17 : vector<16x1xf32> to vector<16x128xf32>
    %26 = arith.subf %5, %25 : vector<16x128xf32>
    %cst_13 = arith.constant 9.99999997E-7 : f32
    %27 = vector.broadcast %cst_13 : f32 to vector<16x1xf32>
    %28 = arith.addf %24, %27 : vector<16x1xf32>
    %29 = math.rsqrt %28 : vector<16x1xf32>
    %30 = vector.broadcast %29 : vector<16x1xf32> to vector<16x128xf32>
    %31 = arith.mulf %26, %30 : vector<16x128xf32>
    %32 = vector.broadcast %8 : vector<1x128xf32> to vector<16x128xf32>
    %33 = arith.mulf %31, %32 : vector<16x128xf32>
    %34 = vector.broadcast %9 : vector<1x128xf32> to vector<16x128xf32>
    %35 = arith.addf %33, %34 : vector<16x128xf32>
    %36 = arith.truncf %35 : vector<16x128xf32> to vector<16x128xbf16>
    %c0_14 = arith.constant 0 : index
    %c0_15 = arith.constant 0 : index
    %c0_16 = arith.constant 0 : index
    %37 = vector.load %arg4[%c0_14, %c0_15, %c0_16] : memref<2x128x384xbf16, #tpu.memory_space<vmem>>, vector<1x128x384xbf16>
    %38 = vector.shape_cast %37 : vector<1x128x384xbf16> to vector<128x384xbf16>
    %cst_17 = arith.constant dense<0.000000e+00> : vector<16x384xf32>
    %39 = tpu.matmul %36, %38, %cst_17 {dimension_numbers = #tpu.dot_dimension_numbers<[1], [0], [0], [1], [0, 0, 1, 1], [], []>} : vector<16x128xbf16>, vector<128x384xbf16>, vector<16x384xf32> -> vector<16x384xf32>
    %c0_18 = arith.constant 0 : index
    %c0_19 = arith.constant 0 : index
    %c0_20 = arith.constant 0 : index
    %40 = vector.load %arg5[%c0_18, %c0_19, %c0_20] : memref<2x1x384xf32, #tpu.memory_space<vmem>>, vector<1x1x384xf32>
    %41 = vector.shape_cast %40 : vector<1x1x384xf32> to vector<1x384xf32>
    %42 = vector.broadcast %41 : vector<1x384xf32> to vector<16x384xf32>
    %43 = arith.addf %39, %42 : vector<16x384xf32>
    %cst_21 = arith.constant 0.000000e+00 : f32
    %44 = vector.broadcast %cst_21 : f32 to vector<16x128xf32>
    %45 = vector.extract_strided_slice %43 {offsets = [0, 0], sizes = [16, 32], strides = [1, 1]} : vector<16x384xf32> to vector<16x32xf32>
    %46 = vector.extract_strided_slice %43 {offsets = [0, 128], sizes = [16, 32], strides = [1, 1]} : vector<16x384xf32> to vector<16x32xf32>
    %47 = vector.extract_strided_slice %43 {offsets = [0, 256], sizes = [16, 32], strides = [1, 1]} : vector<16x384xf32> to vector<16x32xf32>
    %48 = tpu.transpose %46, [1, 0] : vector<16x32xf32> -> vector<32x16xf32>
    %cst_22 = arith.constant dense<0.000000e+00> : vector<16x16xf32>
    %49 = tpu.matmul %45, %48, %cst_22 {dimension_numbers = #tpu.dot_dimension_numbers<[1], [0], [0], [1], [0, 0, 1, 1], [], []>} : vector<16x32xf32>, vector<32x16xf32>, vector<16x16xf32> -> vector<16x16xf32>
    %cst_23 = arith.constant 0.176776692 : f32
    %50 = vector.broadcast %cst_23 : f32 to vector<16x16xf32>
    %51 = arith.mulf %49, %50 : vector<16x16xf32>
    %cst_24 = arith.constant dense<0xFF800000> : vector<16xf32>
    %52 = vector.multi_reduction <maximumf>, %51, %cst_24 [1] : vector<16x16xf32> to vector<16xf32>
    %53 = vector.shape_cast %52 : vector<16xf32> to vector<16x1xf32>
    %54 = vector.broadcast %53 : vector<16x1xf32> to vector<16x16xf32>
    %55 = arith.subf %51, %54 : vector<16x16xf32>
    %56 = math.exp %55 : vector<16x16xf32>
    %cst_25 = arith.constant dense<0.000000e+00> : vector<16xf32>
    %57 = vector.multi_reduction <add>, %56, %cst_25 [1] : vector<16x16xf32> to vector<16xf32>
    %58 = vector.shape_cast %57 : vector<16xf32> to vector<16x1xf32>
    %59 = tpu.reciprocal %58 {approx = true} : vector<16x1xf32> -> vector<16x1xf32>
    %60 = vector.broadcast %59 : vector<16x1xf32> to vector<16x16xf32>
    %61 = arith.mulf %56, %60 : vector<16x16xf32>
    %cst_26 = arith.constant dense<0.000000e+00> : vector<16x32xf32>
    %62 = tpu.matmul %61, %47, %cst_26 {dimension_numbers = #tpu.dot_dimension_numbers<[1], [0], [0], [1], [0, 0, 1, 1], [], []>} : vector<16x16xf32>, vector<16x32xf32>, vector<16x32xf32> -> vector<16x32xf32>
    %63 = arith.truncf %62 : vector<16x32xf32> to vector<16x32xbf16>
    %c0_27 = arith.constant 0 : index
    %c0_28 = arith.constant 0 : index
    %c0_29 = arith.constant 0 : index
    %c0_30 = arith.constant 0 : index
    %64 = vector.load %arg6[%c0_27, %c0_28, %c0_29, %c0_30] : memref<2x4x32x128xbf16, #tpu.memory_space<vmem>>, vector<1x1x32x128xbf16>
    %65 = vector.shape_cast %64 : vector<1x1x32x128xbf16> to vector<32x128xbf16>
    %cst_31 = arith.constant dense<0.000000e+00> : vector<16x128xf32>
    %66 = tpu.matmul %63, %65, %cst_31 {dimension_numbers = #tpu.dot_dimension_numbers<[1], [0], [0], [1], [0, 0, 1, 1], [], []>} : vector<16x32xbf16>, vector<32x128xbf16>, vector<16x128xf32> -> vector<16x128xf32>
    %67 = arith.addf %44, %66 : vector<16x128xf32>
    %68 = vector.extract_strided_slice %43 {offsets = [0, 32], sizes = [16, 32], strides = [1, 1]} : vector<16x384xf32> to vector<16x32xf32>
    %69 = vector.extract_strided_slice %43 {offsets = [0, 160], sizes = [16, 32], strides = [1, 1]} : vector<16x384xf32> to vector<16x32xf32>
    %70 = vector.extract_strided_slice %43 {offsets = [0, 288], sizes = [16, 32], strides = [1, 1]} : vector<16x384xf32> to vector<16x32xf32>
    %71 = tpu.transpose %69, [1, 0] : vector<16x32xf32> -> vector<32x16xf32>
    %cst_32 = arith.constant dense<0.000000e+00> : vector<16x16xf32>
    %72 = tpu.matmul %68, %71, %cst_32 {dimension_numbers = #tpu.dot_dimension_numbers<[1], [0], [0], [1], [0, 0, 1, 1], [], []>} : vector<16x32xf32>, vector<32x16xf32>, vector<16x16xf32> -> vector<16x16xf32>
    %cst_33 = arith.constant 0.176776692 : f32
    %73 = vector.broadcast %cst_33 : f32 to vector<16x16xf32>
    %74 = arith.mulf %72, %73 : vector<16x16xf32>
    %cst_34 = arith.constant dense<0xFF800000> : vector<16xf32>
    %75 = vector.multi_reduction <maximumf>, %74, %cst_34 [1] : vector<16x16xf32> to vector<16xf32>
    %76 = vector.shape_cast %75 : vector<16xf32> to vector<16x1xf32>
    %77 = vector.broadcast %76 : vector<16x1xf32> to vector<16x16xf32>
    %78 = arith.subf %74, %77 : vector<16x16xf32>
    %79 = math.exp %78 : vector<16x16xf32>
    %cst_35 = arith.constant dense<0.000000e+00> : vector<16xf32>
    %80 = vector.multi_reduction <add>, %79, %cst_35 [1] : vector<16x16xf32> to vector<16xf32>
    %81 = vector.shape_cast %80 : vector<16xf32> to vector<16x1xf32>
    %82 = tpu.reciprocal %81 {approx = true} : vector<16x1xf32> -> vector<16x1xf32>
    %83 = vector.broadcast %82 : vector<16x1xf32> to vector<16x16xf32>
    %84 = arith.mulf %79, %83 : vector<16x16xf32>
    %cst_36 = arith.constant dense<0.000000e+00> : vector<16x32xf32>
    %85 = tpu.matmul %84, %70, %cst_36 {dimension_numbers = #tpu.dot_dimension_numbers<[1], [0], [0], [1], [0, 0, 1, 1], [], []>} : vector<16x16xf32>, vector<16x32xf32>, vector<16x32xf32> -> vector<16x32xf32>
    %86 = arith.truncf %85 : vector<16x32xf32> to vector<16x32xbf16>
    %c0_37 = arith.constant 0 : index
    %c1 = arith.constant 1 : index
    %c0_38 = arith.constant 0 : index
    %c0_39 = arith.constant 0 : index
    %87 = vector.load %arg6[%c0_37, %c1, %c0_38, %c0_39] : memref<2x4x32x128xbf16, #tpu.memory_space<vmem>>, vector<1x1x32x128xbf16>
    %88 = vector.shape_cast %87 : vector<1x1x32x128xbf16> to vector<32x128xbf16>
    %cst_40 = arith.constant dense<0.000000e+00> : vector<16x128xf32>
    %89 = tpu.matmul %86, %88, %cst_40 {dimension_numbers = #tpu.dot_dimension_numbers<[1], [0], [0], [1], [0, 0, 1, 1], [], []>} : vector<16x32xbf16>, vector<32x128xbf16>, vector<16x128xf32> -> vector<16x128xf32>
    %90 = arith.addf %67, %89 : vector<16x128xf32>
    %91 = vector.extract_strided_slice %43 {offsets = [0, 64], sizes = [16, 32], strides = [1, 1]} : vector<16x384xf32> to vector<16x32xf32>
    %92 = vector.extract_strided_slice %43 {offsets = [0, 192], sizes = [16, 32], strides = [1, 1]} : vector<16x384xf32> to vector<16x32xf32>
    %93 = vector.extract_strided_slice %43 {offsets = [0, 320], sizes = [16, 32], strides = [1, 1]} : vector<16x384xf32> to vector<16x32xf32>
    %94 = tpu.transpose %92, [1, 0] : vector<16x32xf32> -> vector<32x16xf32>
    %cst_41 = arith.constant dense<0.000000e+00> : vector<16x16xf32>
    %95 = tpu.matmul %91, %94, %cst_41 {dimension_numbers = #tpu.dot_dimension_numbers<[1], [0], [0], [1], [0, 0, 1, 1], [], []>} : vector<16x32xf32>, vector<32x16xf32>, vector<16x16xf32> -> vector<16x16xf32>
    %cst_42 = arith.constant 0.176776692 : f32
    %96 = vector.broadcast %cst_42 : f32 to vector<16x16xf32>
    %97 = arith.mulf %95, %96 : vector<16x16xf32>
    %cst_43 = arith.constant dense<0xFF800000> : vector<16xf32>
    %98 = vector.multi_reduction <maximumf>, %97, %cst_43 [1] : vector<16x16xf32> to vector<16xf32>
    %99 = vector.shape_cast %98 : vector<16xf32> to vector<16x1xf32>
    %100 = vector.broadcast %99 : vector<16x1xf32> to vector<16x16xf32>
    %101 = arith.subf %97, %100 : vector<16x16xf32>
    %102 = math.exp %101 : vector<16x16xf32>
    %cst_44 = arith.constant dense<0.000000e+00> : vector<16xf32>
    %103 = vector.multi_reduction <add>, %102, %cst_44 [1] : vector<16x16xf32> to vector<16xf32>
    %104 = vector.shape_cast %103 : vector<16xf32> to vector<16x1xf32>
    %105 = tpu.reciprocal %104 {approx = true} : vector<16x1xf32> -> vector<16x1xf32>
    %106 = vector.broadcast %105 : vector<16x1xf32> to vector<16x16xf32>
    %107 = arith.mulf %102, %106 : vector<16x16xf32>
    %cst_45 = arith.constant dense<0.000000e+00> : vector<16x32xf32>
    %108 = tpu.matmul %107, %93, %cst_45 {dimension_numbers = #tpu.dot_dimension_numbers<[1], [0], [0], [1], [0, 0, 1, 1], [], []>} : vector<16x16xf32>, vector<16x32xf32>, vector<16x32xf32> -> vector<16x32xf32>
    %109 = arith.truncf %108 : vector<16x32xf32> to vector<16x32xbf16>
    %c0_46 = arith.constant 0 : index
    %c2 = arith.constant 2 : index
    %c0_47 = arith.constant 0 : index
    %c0_48 = arith.constant 0 : index
    %110 = vector.load %arg6[%c0_46, %c2, %c0_47, %c0_48] : memref<2x4x32x128xbf16, #tpu.memory_space<vmem>>, vector<1x1x32x128xbf16>
    %111 = vector.shape_cast %110 : vector<1x1x32x128xbf16> to vector<32x128xbf16>
    %cst_49 = arith.constant dense<0.000000e+00> : vector<16x128xf32>
    %112 = tpu.matmul %109, %111, %cst_49 {dimension_numbers = #tpu.dot_dimension_numbers<[1], [0], [0], [1], [0, 0, 1, 1], [], []>} : vector<16x32xbf16>, vector<32x128xbf16>, vector<16x128xf32> -> vector<16x128xf32>
    %113 = arith.addf %90, %112 : vector<16x128xf32>
    %114 = vector.extract_strided_slice %43 {offsets = [0, 96], sizes = [16, 32], strides = [1, 1]} : vector<16x384xf32> to vector<16x32xf32>
    %115 = vector.extract_strided_slice %43 {offsets = [0, 224], sizes = [16, 32], strides = [1, 1]} : vector<16x384xf32> to vector<16x32xf32>
    %116 = vector.extract_strided_slice %43 {offsets = [0, 352], sizes = [16, 32], strides = [1, 1]} : vector<16x384xf32> to vector<16x32xf32>
    %117 = tpu.transpose %115, [1, 0] : vector<16x32xf32> -> vector<32x16xf32>
    %cst_50 = arith.constant dense<0.000000e+00> : vector<16x16xf32>
    %118 = tpu.matmul %114, %117, %cst_50 {dimension_numbers = #tpu.dot_dimension_numbers<[1], [0], [0], [1], [0, 0, 1, 1], [], []>} : vector<16x32xf32>, vector<32x16xf32>, vector<16x16xf32> -> vector<16x16xf32>
    %cst_51 = arith.constant 0.176776692 : f32
    %119 = vector.broadcast %cst_51 : f32 to vector<16x16xf32>
    %120 = arith.mulf %118, %119 : vector<16x16xf32>
    %cst_52 = arith.constant dense<0xFF800000> : vector<16xf32>
    %121 = vector.multi_reduction <maximumf>, %120, %cst_52 [1] : vector<16x16xf32> to vector<16xf32>
    %122 = vector.shape_cast %121 : vector<16xf32> to vector<16x1xf32>
    %123 = vector.broadcast %122 : vector<16x1xf32> to vector<16x16xf32>
    %124 = arith.subf %120, %123 : vector<16x16xf32>
    %125 = math.exp %124 : vector<16x16xf32>
    %cst_53 = arith.constant dense<0.000000e+00> : vector<16xf32>
    %126 = vector.multi_reduction <add>, %125, %cst_53 [1] : vector<16x16xf32> to vector<16xf32>
    %127 = vector.shape_cast %126 : vector<16xf32> to vector<16x1xf32>
    %128 = tpu.reciprocal %127 {approx = true} : vector<16x1xf32> -> vector<16x1xf32>
    %129 = vector.broadcast %128 : vector<16x1xf32> to vector<16x16xf32>
    %130 = arith.mulf %125, %129 : vector<16x16xf32>
    %cst_54 = arith.constant dense<0.000000e+00> : vector<16x32xf32>
    %131 = tpu.matmul %130, %116, %cst_54 {dimension_numbers = #tpu.dot_dimension_numbers<[1], [0], [0], [1], [0, 0, 1, 1], [], []>} : vector<16x16xf32>, vector<16x32xf32>, vector<16x32xf32> -> vector<16x32xf32>
    %132 = arith.truncf %131 : vector<16x32xf32> to vector<16x32xbf16>
    %c0_55 = arith.constant 0 : index
    %c3 = arith.constant 3 : index
    %c0_56 = arith.constant 0 : index
    %c0_57 = arith.constant 0 : index
    %133 = vector.load %arg6[%c0_55, %c3, %c0_56, %c0_57] : memref<2x4x32x128xbf16, #tpu.memory_space<vmem>>, vector<1x1x32x128xbf16>
    %134 = vector.shape_cast %133 : vector<1x1x32x128xbf16> to vector<32x128xbf16>
    %cst_58 = arith.constant dense<0.000000e+00> : vector<16x128xf32>
    %135 = tpu.matmul %132, %134, %cst_58 {dimension_numbers = #tpu.dot_dimension_numbers<[1], [0], [0], [1], [0, 0, 1, 1], [], []>} : vector<16x32xbf16>, vector<32x128xbf16>, vector<16x128xf32> -> vector<16x128xf32>
    %136 = arith.addf %113, %135 : vector<16x128xf32>
    %137 = arith.addf %5, %136 : vector<16x128xf32>
    %138 = vector.broadcast %12 : vector<1x128xf32> to vector<16x128xf32>
    %139 = arith.addf %137, %138 : vector<16x128xf32>
    %cst_59 = arith.constant dense<0.000000e+00> : vector<16xf32>
    %140 = vector.multi_reduction <add>, %139, %cst_59 [1] : vector<16x128xf32> to vector<16xf32>
    %141 = vector.shape_cast %140 : vector<16xf32> to vector<16x1xf32>
    %cst_60 = arith.constant 1.280000e+02 : f32
    %142 = vector.broadcast %cst_60 : f32 to vector<16x1xf32>
    %143 = arith.divf %141, %142 : vector<16x1xf32>
    %144 = vector.broadcast %143 : vector<16x1xf32> to vector<16x128xf32>
    %145 = arith.subf %139, %144 : vector<16x128xf32>
    %146 = arith.mulf %145, %145 : vector<16x128xf32>
    %cst_61 = arith.constant dense<0.000000e+00> : vector<16xf32>
    %147 = vector.multi_reduction <add>, %146, %cst_61 [1] : vector<16x128xf32> to vector<16xf32>
    %148 = vector.shape_cast %147 : vector<16xf32> to vector<16x1xf32>
    %cst_62 = arith.constant 1.280000e+02 : f32
    %149 = vector.broadcast %cst_62 : f32 to vector<16x1xf32>
    %150 = arith.divf %148, %149 : vector<16x1xf32>
    %151 = vector.broadcast %143 : vector<16x1xf32> to vector<16x128xf32>
    %152 = arith.subf %139, %151 : vector<16x128xf32>
    %cst_63 = arith.constant 9.99999997E-7 : f32
    %153 = vector.broadcast %cst_63 : f32 to vector<16x1xf32>
    %154 = arith.addf %150, %153 : vector<16x1xf32>
    %155 = math.rsqrt %154 : vector<16x1xf32>
    %156 = vector.broadcast %155 : vector<16x1xf32> to vector<16x128xf32>
    %157 = arith.mulf %152, %156 : vector<16x128xf32>
    %158 = vector.broadcast %10 : vector<1x128xf32> to vector<16x128xf32>
    %159 = arith.mulf %157, %158 : vector<16x128xf32>
    %160 = vector.broadcast %11 : vector<1x128xf32> to vector<16x128xf32>
    %161 = arith.addf %159, %160 : vector<16x128xf32>
    %162 = arith.truncf %161 : vector<16x128xf32> to vector<16x128xbf16>
    %c0_64 = arith.constant 0 : index
    %c0_65 = arith.constant 0 : index
    %c0_66 = arith.constant 0 : index
    %163 = vector.load %arg7[%c0_64, %c0_65, %c0_66] : memref<2x128x256xbf16, #tpu.memory_space<vmem>>, vector<1x128x256xbf16>
    %164 = vector.shape_cast %163 : vector<1x128x256xbf16> to vector<128x256xbf16>
    %cst_67 = arith.constant dense<0.000000e+00> : vector<16x256xf32>
    %165 = tpu.matmul %162, %164, %cst_67 {dimension_numbers = #tpu.dot_dimension_numbers<[1], [0], [0], [1], [0, 0, 1, 1], [], []>} : vector<16x128xbf16>, vector<128x256xbf16>, vector<16x256xf32> -> vector<16x256xf32>
    %c0_68 = arith.constant 0 : index
    %c0_69 = arith.constant 0 : index
    %c0_70 = arith.constant 0 : index
    %166 = vector.load %arg8[%c0_68, %c0_69, %c0_70] : memref<2x1x256xf32, #tpu.memory_space<vmem>>, vector<1x1x256xf32>
    %167 = vector.shape_cast %166 : vector<1x1x256xf32> to vector<1x256xf32>
    %168 = vector.broadcast %167 : vector<1x256xf32> to vector<16x256xf32>
    %169 = arith.addf %165, %168 : vector<16x256xf32>
    %cst_71 = arith.constant 5.000000e-01 : f32
    %170 = vector.broadcast %cst_71 : f32 to vector<16x256xf32>
    %171 = arith.mulf %170, %169 : vector<16x256xf32>
    %cst_72 = arith.constant 4.471500e-02 : f32
    %172 = vector.broadcast %cst_72 : f32 to vector<16x256xf32>
    %173 = arith.mulf %172, %169 : vector<16x256xf32>
    %174 = arith.mulf %173, %169 : vector<16x256xf32>
    %175 = arith.mulf %174, %169 : vector<16x256xf32>
    %176 = arith.addf %169, %175 : vector<16x256xf32>
    %cst_73 = arith.constant 0.797884583 : f32
    %177 = vector.broadcast %cst_73 : f32 to vector<16x256xf32>
    %178 = arith.mulf %177, %176 : vector<16x256xf32>
    %179 = math.tanh %178 : vector<16x256xf32>
    %cst_74 = arith.constant 1.000000e+00 : f32
    %180 = vector.broadcast %cst_74 : f32 to vector<16x256xf32>
    %181 = arith.addf %180, %179 : vector<16x256xf32>
    %182 = arith.mulf %171, %181 : vector<16x256xf32>
    %183 = arith.truncf %182 : vector<16x256xf32> to vector<16x256xbf16>
    %c0_75 = arith.constant 0 : index
    %c0_76 = arith.constant 0 : index
    %c0_77 = arith.constant 0 : index
    %184 = vector.load %arg9[%c0_75, %c0_76, %c0_77] : memref<2x256x128xbf16, #tpu.memory_space<vmem>>, vector<1x256x128xbf16>
    %185 = vector.shape_cast %184 : vector<1x256x128xbf16> to vector<256x128xbf16>
    %cst_78 = arith.constant dense<0.000000e+00> : vector<16x128xf32>
    %186 = tpu.matmul %183, %185, %cst_78 {dimension_numbers = #tpu.dot_dimension_numbers<[1], [0], [0], [1], [0, 0, 1, 1], [], []>} : vector<16x256xbf16>, vector<256x128xbf16>, vector<16x128xf32> -> vector<16x128xf32>
    %187 = vector.broadcast %13 : vector<1x128xf32> to vector<16x128xf32>
    %188 = arith.addf %186, %187 : vector<16x128xf32>
    %189 = arith.addf %139, %188 : vector<16x128xf32>
    %c1_79 = arith.constant 1 : index
    %c0_80 = arith.constant 0 : index
    %c0_81 = arith.constant 0 : index
    %190 = vector.load %arg10[%c1_79, %c0_80, %c0_81] : memref<2x8x128xf32, #tpu.memory_space<vmem>>, vector<1x8x128xf32>
    %191 = vector.shape_cast %190 : vector<1x8x128xf32> to vector<8x128xf32>
    %192 = vector.extract_strided_slice %191 {offsets = [0, 0], sizes = [1, 128], strides = [1, 1]} : vector<8x128xf32> to vector<1x128xf32>
    %193 = vector.extract_strided_slice %191 {offsets = [1, 0], sizes = [1, 128], strides = [1, 1]} : vector<8x128xf32> to vector<1x128xf32>
    %194 = vector.extract_strided_slice %191 {offsets = [2, 0], sizes = [1, 128], strides = [1, 1]} : vector<8x128xf32> to vector<1x128xf32>
    %195 = vector.extract_strided_slice %191 {offsets = [3, 0], sizes = [1, 128], strides = [1, 1]} : vector<8x128xf32> to vector<1x128xf32>
    %196 = vector.extract_strided_slice %191 {offsets = [4, 0], sizes = [1, 128], strides = [1, 1]} : vector<8x128xf32> to vector<1x128xf32>
    %197 = vector.extract_strided_slice %191 {offsets = [5, 0], sizes = [1, 128], strides = [1, 1]} : vector<8x128xf32> to vector<1x128xf32>
    %cst_82 = arith.constant dense<0.000000e+00> : vector<16xf32>
    %198 = vector.multi_reduction <add>, %189, %cst_82 [1] : vector<16x128xf32> to vector<16xf32>
    %199 = vector.shape_cast %198 : vector<16xf32> to vector<16x1xf32>
    %cst_83 = arith.constant 1.280000e+02 : f32
    %200 = vector.broadcast %cst_83 : f32 to vector<16x1xf32>
    %201 = arith.divf %199, %200 : vector<16x1xf32>
    %202 = vector.broadcast %201 : vector<16x1xf32> to vector<16x128xf32>
    %203 = arith.subf %189, %202 : vector<16x128xf32>
    %204 = arith.mulf %203, %203 : vector<16x128xf32>
    %cst_84 = arith.constant dense<0.000000e+00> : vector<16xf32>
    %205 = vector.multi_reduction <add>, %204, %cst_84 [1] : vector<16x128xf32> to vector<16xf32>
    %206 = vector.shape_cast %205 : vector<16xf32> to vector<16x1xf32>
    %cst_85 = arith.constant 1.280000e+02 : f32
    %207 = vector.broadcast %cst_85 : f32 to vector<16x1xf32>
    %208 = arith.divf %206, %207 : vector<16x1xf32>
    %209 = vector.broadcast %201 : vector<16x1xf32> to vector<16x128xf32>
    %210 = arith.subf %189, %209 : vector<16x128xf32>
    %cst_86 = arith.constant 9.99999997E-7 : f32
    %211 = vector.broadcast %cst_86 : f32 to vector<16x1xf32>
    %212 = arith.addf %208, %211 : vector<16x1xf32>
    %213 = math.rsqrt %212 : vector<16x1xf32>
    %214 = vector.broadcast %213 : vector<16x1xf32> to vector<16x128xf32>
    %215 = arith.mulf %210, %214 : vector<16x128xf32>
    %216 = vector.broadcast %192 : vector<1x128xf32> to vector<16x128xf32>
    %217 = arith.mulf %215, %216 : vector<16x128xf32>
    %218 = vector.broadcast %193 : vector<1x128xf32> to vector<16x128xf32>
    %219 = arith.addf %217, %218 : vector<16x128xf32>
    %220 = arith.truncf %219 : vector<16x128xf32> to vector<16x128xbf16>
    %c1_87 = arith.constant 1 : index
    %c0_88 = arith.constant 0 : index
    %c0_89 = arith.constant 0 : index
    %221 = vector.load %arg4[%c1_87, %c0_88, %c0_89] : memref<2x128x384xbf16, #tpu.memory_space<vmem>>, vector<1x128x384xbf16>
    %222 = vector.shape_cast %221 : vector<1x128x384xbf16> to vector<128x384xbf16>
    %cst_90 = arith.constant dense<0.000000e+00> : vector<16x384xf32>
    %223 = tpu.matmul %220, %222, %cst_90 {dimension_numbers = #tpu.dot_dimension_numbers<[1], [0], [0], [1], [0, 0, 1, 1], [], []>} : vector<16x128xbf16>, vector<128x384xbf16>, vector<16x384xf32> -> vector<16x384xf32>
    %c1_91 = arith.constant 1 : index
    %c0_92 = arith.constant 0 : index
    %c0_93 = arith.constant 0 : index
    %224 = vector.load %arg5[%c1_91, %c0_92, %c0_93] : memref<2x1x384xf32, #tpu.memory_space<vmem>>, vector<1x1x384xf32>
    %225 = vector.shape_cast %224 : vector<1x1x384xf32> to vector<1x384xf32>
    %226 = vector.broadcast %225 : vector<1x384xf32> to vector<16x384xf32>
    %227 = arith.addf %223, %226 : vector<16x384xf32>
    %cst_94 = arith.constant 0.000000e+00 : f32
    %228 = vector.broadcast %cst_94 : f32 to vector<16x128xf32>
    %229 = vector.extract_strided_slice %227 {offsets = [0, 0], sizes = [16, 32], strides = [1, 1]} : vector<16x384xf32> to vector<16x32xf32>
    %230 = vector.extract_strided_slice %227 {offsets = [0, 128], sizes = [16, 32], strides = [1, 1]} : vector<16x384xf32> to vector<16x32xf32>
    %231 = vector.extract_strided_slice %227 {offsets = [0, 256], sizes = [16, 32], strides = [1, 1]} : vector<16x384xf32> to vector<16x32xf32>
    %232 = tpu.transpose %230, [1, 0] : vector<16x32xf32> -> vector<32x16xf32>
    %cst_95 = arith.constant dense<0.000000e+00> : vector<16x16xf32>
    %233 = tpu.matmul %229, %232, %cst_95 {dimension_numbers = #tpu.dot_dimension_numbers<[1], [0], [0], [1], [0, 0, 1, 1], [], []>} : vector<16x32xf32>, vector<32x16xf32>, vector<16x16xf32> -> vector<16x16xf32>
    %cst_96 = arith.constant 0.176776692 : f32
    %234 = vector.broadcast %cst_96 : f32 to vector<16x16xf32>
    %235 = arith.mulf %233, %234 : vector<16x16xf32>
    %cst_97 = arith.constant dense<0xFF800000> : vector<16xf32>
    %236 = vector.multi_reduction <maximumf>, %235, %cst_97 [1] : vector<16x16xf32> to vector<16xf32>
    %237 = vector.shape_cast %236 : vector<16xf32> to vector<16x1xf32>
    %238 = vector.broadcast %237 : vector<16x1xf32> to vector<16x16xf32>
    %239 = arith.subf %235, %238 : vector<16x16xf32>
    %240 = math.exp %239 : vector<16x16xf32>
    %cst_98 = arith.constant dense<0.000000e+00> : vector<16xf32>
    %241 = vector.multi_reduction <add>, %240, %cst_98 [1] : vector<16x16xf32> to vector<16xf32>
    %242 = vector.shape_cast %241 : vector<16xf32> to vector<16x1xf32>
    %243 = tpu.reciprocal %242 {approx = true} : vector<16x1xf32> -> vector<16x1xf32>
    %244 = vector.broadcast %243 : vector<16x1xf32> to vector<16x16xf32>
    %245 = arith.mulf %240, %244 : vector<16x16xf32>
    %cst_99 = arith.constant dense<0.000000e+00> : vector<16x32xf32>
    %246 = tpu.matmul %245, %231, %cst_99 {dimension_numbers = #tpu.dot_dimension_numbers<[1], [0], [0], [1], [0, 0, 1, 1], [], []>} : vector<16x16xf32>, vector<16x32xf32>, vector<16x32xf32> -> vector<16x32xf32>
    %247 = arith.truncf %246 : vector<16x32xf32> to vector<16x32xbf16>
    %c1_100 = arith.constant 1 : index
    %c0_101 = arith.constant 0 : index
    %c0_102 = arith.constant 0 : index
    %c0_103 = arith.constant 0 : index
    %248 = vector.load %arg6[%c1_100, %c0_101, %c0_102, %c0_103] : memref<2x4x32x128xbf16, #tpu.memory_space<vmem>>, vector<1x1x32x128xbf16>
    %249 = vector.shape_cast %248 : vector<1x1x32x128xbf16> to vector<32x128xbf16>
    %cst_104 = arith.constant dense<0.000000e+00> : vector<16x128xf32>
    %250 = tpu.matmul %247, %249, %cst_104 {dimension_numbers = #tpu.dot_dimension_numbers<[1], [0], [0], [1], [0, 0, 1, 1], [], []>} : vector<16x32xbf16>, vector<32x128xbf16>, vector<16x128xf32> -> vector<16x128xf32>
    %251 = arith.addf %228, %250 : vector<16x128xf32>
    %252 = vector.extract_strided_slice %227 {offsets = [0, 32], sizes = [16, 32], strides = [1, 1]} : vector<16x384xf32> to vector<16x32xf32>
    %253 = vector.extract_strided_slice %227 {offsets = [0, 160], sizes = [16, 32], strides = [1, 1]} : vector<16x384xf32> to vector<16x32xf32>
    %254 = vector.extract_strided_slice %227 {offsets = [0, 288], sizes = [16, 32], strides = [1, 1]} : vector<16x384xf32> to vector<16x32xf32>
    %255 = tpu.transpose %253, [1, 0] : vector<16x32xf32> -> vector<32x16xf32>
    %cst_105 = arith.constant dense<0.000000e+00> : vector<16x16xf32>
    %256 = tpu.matmul %252, %255, %cst_105 {dimension_numbers = #tpu.dot_dimension_numbers<[1], [0], [0], [1], [0, 0, 1, 1], [], []>} : vector<16x32xf32>, vector<32x16xf32>, vector<16x16xf32> -> vector<16x16xf32>
    %cst_106 = arith.constant 0.176776692 : f32
    %257 = vector.broadcast %cst_106 : f32 to vector<16x16xf32>
    %258 = arith.mulf %256, %257 : vector<16x16xf32>
    %cst_107 = arith.constant dense<0xFF800000> : vector<16xf32>
    %259 = vector.multi_reduction <maximumf>, %258, %cst_107 [1] : vector<16x16xf32> to vector<16xf32>
    %260 = vector.shape_cast %259 : vector<16xf32> to vector<16x1xf32>
    %261 = vector.broadcast %260 : vector<16x1xf32> to vector<16x16xf32>
    %262 = arith.subf %258, %261 : vector<16x16xf32>
    %263 = math.exp %262 : vector<16x16xf32>
    %cst_108 = arith.constant dense<0.000000e+00> : vector<16xf32>
    %264 = vector.multi_reduction <add>, %263, %cst_108 [1] : vector<16x16xf32> to vector<16xf32>
    %265 = vector.shape_cast %264 : vector<16xf32> to vector<16x1xf32>
    %266 = tpu.reciprocal %265 {approx = true} : vector<16x1xf32> -> vector<16x1xf32>
    %267 = vector.broadcast %266 : vector<16x1xf32> to vector<16x16xf32>
    %268 = arith.mulf %263, %267 : vector<16x16xf32>
    %cst_109 = arith.constant dense<0.000000e+00> : vector<16x32xf32>
    %269 = tpu.matmul %268, %254, %cst_109 {dimension_numbers = #tpu.dot_dimension_numbers<[1], [0], [0], [1], [0, 0, 1, 1], [], []>} : vector<16x16xf32>, vector<16x32xf32>, vector<16x32xf32> -> vector<16x32xf32>
    %270 = arith.truncf %269 : vector<16x32xf32> to vector<16x32xbf16>
    %c1_110 = arith.constant 1 : index
    %c1_111 = arith.constant 1 : index
    %c0_112 = arith.constant 0 : index
    %c0_113 = arith.constant 0 : index
    %271 = vector.load %arg6[%c1_110, %c1_111, %c0_112, %c0_113] : memref<2x4x32x128xbf16, #tpu.memory_space<vmem>>, vector<1x1x32x128xbf16>
    %272 = vector.shape_cast %271 : vector<1x1x32x128xbf16> to vector<32x128xbf16>
    %cst_114 = arith.constant dense<0.000000e+00> : vector<16x128xf32>
    %273 = tpu.matmul %270, %272, %cst_114 {dimension_numbers = #tpu.dot_dimension_numbers<[1], [0], [0], [1], [0, 0, 1, 1], [], []>} : vector<16x32xbf16>, vector<32x128xbf16>, vector<16x128xf32> -> vector<16x128xf32>
    %274 = arith.addf %251, %273 : vector<16x128xf32>
    %275 = vector.extract_strided_slice %227 {offsets = [0, 64], sizes = [16, 32], strides = [1, 1]} : vector<16x384xf32> to vector<16x32xf32>
    %276 = vector.extract_strided_slice %227 {offsets = [0, 192], sizes = [16, 32], strides = [1, 1]} : vector<16x384xf32> to vector<16x32xf32>
    %277 = vector.extract_strided_slice %227 {offsets = [0, 320], sizes = [16, 32], strides = [1, 1]} : vector<16x384xf32> to vector<16x32xf32>
    %278 = tpu.transpose %276, [1, 0] : vector<16x32xf32> -> vector<32x16xf32>
    %cst_115 = arith.constant dense<0.000000e+00> : vector<16x16xf32>
    %279 = tpu.matmul %275, %278, %cst_115 {dimension_numbers = #tpu.dot_dimension_numbers<[1], [0], [0], [1], [0, 0, 1, 1], [], []>} : vector<16x32xf32>, vector<32x16xf32>, vector<16x16xf32> -> vector<16x16xf32>
    %cst_116 = arith.constant 0.176776692 : f32
    %280 = vector.broadcast %cst_116 : f32 to vector<16x16xf32>
    %281 = arith.mulf %279, %280 : vector<16x16xf32>
    %cst_117 = arith.constant dense<0xFF800000> : vector<16xf32>
    %282 = vector.multi_reduction <maximumf>, %281, %cst_117 [1] : vector<16x16xf32> to vector<16xf32>
    %283 = vector.shape_cast %282 : vector<16xf32> to vector<16x1xf32>
    %284 = vector.broadcast %283 : vector<16x1xf32> to vector<16x16xf32>
    %285 = arith.subf %281, %284 : vector<16x16xf32>
    %286 = math.exp %285 : vector<16x16xf32>
    %cst_118 = arith.constant dense<0.000000e+00> : vector<16xf32>
    %287 = vector.multi_reduction <add>, %286, %cst_118 [1] : vector<16x16xf32> to vector<16xf32>
    %288 = vector.shape_cast %287 : vector<16xf32> to vector<16x1xf32>
    %289 = tpu.reciprocal %288 {approx = true} : vector<16x1xf32> -> vector<16x1xf32>
    %290 = vector.broadcast %289 : vector<16x1xf32> to vector<16x16xf32>
    %291 = arith.mulf %286, %290 : vector<16x16xf32>
    %cst_119 = arith.constant dense<0.000000e+00> : vector<16x32xf32>
    %292 = tpu.matmul %291, %277, %cst_119 {dimension_numbers = #tpu.dot_dimension_numbers<[1], [0], [0], [1], [0, 0, 1, 1], [], []>} : vector<16x16xf32>, vector<16x32xf32>, vector<16x32xf32> -> vector<16x32xf32>
    %293 = arith.truncf %292 : vector<16x32xf32> to vector<16x32xbf16>
    %c1_120 = arith.constant 1 : index
    %c2_121 = arith.constant 2 : index
    %c0_122 = arith.constant 0 : index
    %c0_123 = arith.constant 0 : index
    %294 = vector.load %arg6[%c1_120, %c2_121, %c0_122, %c0_123] : memref<2x4x32x128xbf16, #tpu.memory_space<vmem>>, vector<1x1x32x128xbf16>
    %295 = vector.shape_cast %294 : vector<1x1x32x128xbf16> to vector<32x128xbf16>
    %cst_124 = arith.constant dense<0.000000e+00> : vector<16x128xf32>
    %296 = tpu.matmul %293, %295, %cst_124 {dimension_numbers = #tpu.dot_dimension_numbers<[1], [0], [0], [1], [0, 0, 1, 1], [], []>} : vector<16x32xbf16>, vector<32x128xbf16>, vector<16x128xf32> -> vector<16x128xf32>
    %297 = arith.addf %274, %296 : vector<16x128xf32>
    %298 = vector.extract_strided_slice %227 {offsets = [0, 96], sizes = [16, 32], strides = [1, 1]} : vector<16x384xf32> to vector<16x32xf32>
    %299 = vector.extract_strided_slice %227 {offsets = [0, 224], sizes = [16, 32], strides = [1, 1]} : vector<16x384xf32> to vector<16x32xf32>
    %300 = vector.extract_strided_slice %227 {offsets = [0, 352], sizes = [16, 32], strides = [1, 1]} : vector<16x384xf32> to vector<16x32xf32>
    %301 = tpu.transpose %299, [1, 0] : vector<16x32xf32> -> vector<32x16xf32>
    %cst_125 = arith.constant dense<0.000000e+00> : vector<16x16xf32>
    %302 = tpu.matmul %298, %301, %cst_125 {dimension_numbers = #tpu.dot_dimension_numbers<[1], [0], [0], [1], [0, 0, 1, 1], [], []>} : vector<16x32xf32>, vector<32x16xf32>, vector<16x16xf32> -> vector<16x16xf32>
    %cst_126 = arith.constant 0.176776692 : f32
    %303 = vector.broadcast %cst_126 : f32 to vector<16x16xf32>
    %304 = arith.mulf %302, %303 : vector<16x16xf32>
    %cst_127 = arith.constant dense<0xFF800000> : vector<16xf32>
    %305 = vector.multi_reduction <maximumf>, %304, %cst_127 [1] : vector<16x16xf32> to vector<16xf32>
    %306 = vector.shape_cast %305 : vector<16xf32> to vector<16x1xf32>
    %307 = vector.broadcast %306 : vector<16x1xf32> to vector<16x16xf32>
    %308 = arith.subf %304, %307 : vector<16x16xf32>
    %309 = math.exp %308 : vector<16x16xf32>
    %cst_128 = arith.constant dense<0.000000e+00> : vector<16xf32>
    %310 = vector.multi_reduction <add>, %309, %cst_128 [1] : vector<16x16xf32> to vector<16xf32>
    %311 = vector.shape_cast %310 : vector<16xf32> to vector<16x1xf32>
    %312 = tpu.reciprocal %311 {approx = true} : vector<16x1xf32> -> vector<16x1xf32>
    %313 = vector.broadcast %312 : vector<16x1xf32> to vector<16x16xf32>
    %314 = arith.mulf %309, %313 : vector<16x16xf32>
    %cst_129 = arith.constant dense<0.000000e+00> : vector<16x32xf32>
    %315 = tpu.matmul %314, %300, %cst_129 {dimension_numbers = #tpu.dot_dimension_numbers<[1], [0], [0], [1], [0, 0, 1, 1], [], []>} : vector<16x16xf32>, vector<16x32xf32>, vector<16x32xf32> -> vector<16x32xf32>
    %316 = arith.truncf %315 : vector<16x32xf32> to vector<16x32xbf16>
    %c1_130 = arith.constant 1 : index
    %c3_131 = arith.constant 3 : index
    %c0_132 = arith.constant 0 : index
    %c0_133 = arith.constant 0 : index
    %317 = vector.load %arg6[%c1_130, %c3_131, %c0_132, %c0_133] : memref<2x4x32x128xbf16, #tpu.memory_space<vmem>>, vector<1x1x32x128xbf16>
    %318 = vector.shape_cast %317 : vector<1x1x32x128xbf16> to vector<32x128xbf16>
    %cst_134 = arith.constant dense<0.000000e+00> : vector<16x128xf32>
    %319 = tpu.matmul %316, %318, %cst_134 {dimension_numbers = #tpu.dot_dimension_numbers<[1], [0], [0], [1], [0, 0, 1, 1], [], []>} : vector<16x32xbf16>, vector<32x128xbf16>, vector<16x128xf32> -> vector<16x128xf32>
    %320 = arith.addf %297, %319 : vector<16x128xf32>
    %321 = arith.addf %189, %320 : vector<16x128xf32>
    %322 = vector.broadcast %196 : vector<1x128xf32> to vector<16x128xf32>
    %323 = arith.addf %321, %322 : vector<16x128xf32>
    %cst_135 = arith.constant dense<0.000000e+00> : vector<16xf32>
    %324 = vector.multi_reduction <add>, %323, %cst_135 [1] : vector<16x128xf32> to vector<16xf32>
    %325 = vector.shape_cast %324 : vector<16xf32> to vector<16x1xf32>
    %cst_136 = arith.constant 1.280000e+02 : f32
    %326 = vector.broadcast %cst_136 : f32 to vector<16x1xf32>
    %327 = arith.divf %325, %326 : vector<16x1xf32>
    %328 = vector.broadcast %327 : vector<16x1xf32> to vector<16x128xf32>
    %329 = arith.subf %323, %328 : vector<16x128xf32>
    %330 = arith.mulf %329, %329 : vector<16x128xf32>
    %cst_137 = arith.constant dense<0.000000e+00> : vector<16xf32>
    %331 = vector.multi_reduction <add>, %330, %cst_137 [1] : vector<16x128xf32> to vector<16xf32>
    %332 = vector.shape_cast %331 : vector<16xf32> to vector<16x1xf32>
    %cst_138 = arith.constant 1.280000e+02 : f32
    %333 = vector.broadcast %cst_138 : f32 to vector<16x1xf32>
    %334 = arith.divf %332, %333 : vector<16x1xf32>
    %335 = vector.broadcast %327 : vector<16x1xf32> to vector<16x128xf32>
    %336 = arith.subf %323, %335 : vector<16x128xf32>
    %cst_139 = arith.constant 9.99999997E-7 : f32
    %337 = vector.broadcast %cst_139 : f32 to vector<16x1xf32>
    %338 = arith.addf %334, %337 : vector<16x1xf32>
    %339 = math.rsqrt %338 : vector<16x1xf32>
    %340 = vector.broadcast %339 : vector<16x1xf32> to vector<16x128xf32>
    %341 = arith.mulf %336, %340 : vector<16x128xf32>
    %342 = vector.broadcast %194 : vector<1x128xf32> to vector<16x128xf32>
    %343 = arith.mulf %341, %342 : vector<16x128xf32>
    %344 = vector.broadcast %195 : vector<1x128xf32> to vector<16x128xf32>
    %345 = arith.addf %343, %344 : vector<16x128xf32>
    %346 = arith.truncf %345 : vector<16x128xf32> to vector<16x128xbf16>
    %c1_140 = arith.constant 1 : index
    %c0_141 = arith.constant 0 : index
    %c0_142 = arith.constant 0 : index
    %347 = vector.load %arg7[%c1_140, %c0_141, %c0_142] : memref<2x128x256xbf16, #tpu.memory_space<vmem>>, vector<1x128x256xbf16>
    %348 = vector.shape_cast %347 : vector<1x128x256xbf16> to vector<128x256xbf16>
    %cst_143 = arith.constant dense<0.000000e+00> : vector<16x256xf32>
    %349 = tpu.matmul %346, %348, %cst_143 {dimension_numbers = #tpu.dot_dimension_numbers<[1], [0], [0], [1], [0, 0, 1, 1], [], []>} : vector<16x128xbf16>, vector<128x256xbf16>, vector<16x256xf32> -> vector<16x256xf32>
    %c1_144 = arith.constant 1 : index
    %c0_145 = arith.constant 0 : index
    %c0_146 = arith.constant 0 : index
    %350 = vector.load %arg8[%c1_144, %c0_145, %c0_146] : memref<2x1x256xf32, #tpu.memory_space<vmem>>, vector<1x1x256xf32>
    %351 = vector.shape_cast %350 : vector<1x1x256xf32> to vector<1x256xf32>
    %352 = vector.broadcast %351 : vector<1x256xf32> to vector<16x256xf32>
    %353 = arith.addf %349, %352 : vector<16x256xf32>
    %cst_147 = arith.constant 5.000000e-01 : f32
    %354 = vector.broadcast %cst_147 : f32 to vector<16x256xf32>
    %355 = arith.mulf %354, %353 : vector<16x256xf32>
    %cst_148 = arith.constant 4.471500e-02 : f32
    %356 = vector.broadcast %cst_148 : f32 to vector<16x256xf32>
    %357 = arith.mulf %356, %353 : vector<16x256xf32>
    %358 = arith.mulf %357, %353 : vector<16x256xf32>
    %359 = arith.mulf %358, %353 : vector<16x256xf32>
    %360 = arith.addf %353, %359 : vector<16x256xf32>
    %cst_149 = arith.constant 0.797884583 : f32
    %361 = vector.broadcast %cst_149 : f32 to vector<16x256xf32>
    %362 = arith.mulf %361, %360 : vector<16x256xf32>
    %363 = math.tanh %362 : vector<16x256xf32>
    %cst_150 = arith.constant 1.000000e+00 : f32
    %364 = vector.broadcast %cst_150 : f32 to vector<16x256xf32>
    %365 = arith.addf %364, %363 : vector<16x256xf32>
    %366 = arith.mulf %355, %365 : vector<16x256xf32>
    %367 = arith.truncf %366 : vector<16x256xf32> to vector<16x256xbf16>
    %c1_151 = arith.constant 1 : index
    %c0_152 = arith.constant 0 : index
    %c0_153 = arith.constant 0 : index
    %368 = vector.load %arg9[%c1_151, %c0_152, %c0_153] : memref<2x256x128xbf16, #tpu.memory_space<vmem>>, vector<1x256x128xbf16>
    %369 = vector.shape_cast %368 : vector<1x256x128xbf16> to vector<256x128xbf16>
    %cst_154 = arith.constant dense<0.000000e+00> : vector<16x128xf32>
    %370 = tpu.matmul %367, %369, %cst_154 {dimension_numbers = #tpu.dot_dimension_numbers<[1], [0], [0], [1], [0, 0, 1, 1], [], []>} : vector<16x256xbf16>, vector<256x128xbf16>, vector<16x128xf32> -> vector<16x128xf32>
    %371 = vector.broadcast %197 : vector<1x128xf32> to vector<16x128xf32>
    %372 = arith.addf %370, %371 : vector<16x128xf32>
    %373 = arith.addf %323, %372 : vector<16x128xf32>
    %c0_155 = arith.constant 0 : index
    %c0_156 = arith.constant 0 : index
    %374 = vector.load %arg11[%c0_155, %c0_156] : memref<2x128xf32, #tpu.memory_space<vmem>>, vector<2x128xf32>
    %375 = vector.extract_strided_slice %374 {offsets = [0, 0], sizes = [1, 128], strides = [1, 1]} : vector<2x128xf32> to vector<1x128xf32>
    %376 = vector.extract_strided_slice %374 {offsets = [1, 0], sizes = [1, 128], strides = [1, 1]} : vector<2x128xf32> to vector<1x128xf32>
    %cst_157 = arith.constant dense<0.000000e+00> : vector<16xf32>
    %377 = vector.multi_reduction <add>, %373, %cst_157 [1] : vector<16x128xf32> to vector<16xf32>
    %378 = vector.shape_cast %377 : vector<16xf32> to vector<16x1xf32>
    %cst_158 = arith.constant 1.280000e+02 : f32
    %379 = vector.broadcast %cst_158 : f32 to vector<16x1xf32>
    %380 = arith.divf %378, %379 : vector<16x1xf32>
    %381 = vector.broadcast %380 : vector<16x1xf32> to vector<16x128xf32>
    %382 = arith.subf %373, %381 : vector<16x128xf32>
    %383 = arith.mulf %382, %382 : vector<16x128xf32>
    %cst_159 = arith.constant dense<0.000000e+00> : vector<16xf32>
    %384 = vector.multi_reduction <add>, %383, %cst_159 [1] : vector<16x128xf32> to vector<16xf32>
    %385 = vector.shape_cast %384 : vector<16xf32> to vector<16x1xf32>
    %cst_160 = arith.constant 1.280000e+02 : f32
    %386 = vector.broadcast %cst_160 : f32 to vector<16x1xf32>
    %387 = arith.divf %385, %386 : vector<16x1xf32>
    %388 = vector.broadcast %380 : vector<16x1xf32> to vector<16x128xf32>
    %389 = arith.subf %373, %388 : vector<16x128xf32>
    %cst_161 = arith.constant 9.99999997E-7 : f32
    %390 = vector.broadcast %cst_161 : f32 to vector<16x1xf32>
    %391 = arith.addf %387, %390 : vector<16x1xf32>
    %392 = math.rsqrt %391 : vector<16x1xf32>
    %393 = vector.broadcast %392 : vector<16x1xf32> to vector<16x128xf32>
    %394 = arith.mulf %389, %393 : vector<16x128xf32>
    %395 = vector.broadcast %375 : vector<1x128xf32> to vector<16x128xf32>
    %396 = arith.mulf %394, %395 : vector<16x128xf32>
    %397 = vector.broadcast %376 : vector<1x128xf32> to vector<16x128xf32>
    %398 = arith.addf %396, %397 : vector<16x128xf32>
    %c0_162 = arith.constant 0 : index
    %c0_163 = arith.constant 0 : index
    %c0_164 = arith.constant 0 : index
    %399 = vector.load %arg12[%c0_162, %c0_163, %c0_164] : memref<1x16x128xf32, #tpu.memory_space<vmem>>, vector<1x16x128xf32>
    %400 = vector.shape_cast %399 : vector<1x16x128xf32> to vector<16x128xf32>
    %401 = vector.shape_cast %398 : vector<16x128xf32> to vector<1x16x128xf32>
    tpu.vector_store %arg12[%c0_162, %c0_163, %c0_164], %401 {strides = array<i32>} : memref<1x16x128xf32, #tpu.memory_space<vmem>>, vector<1x16x128xf32>,
    return
  }
  func.func @transform_0(%arg0: i32) -> (i32, i32, i32) {
    %c0_i32 = arith.constant 0 : i32
    %c0_i32_0 = arith.constant 0 : i32
    %c0_i32_1 = arith.constant 0 : i32
    return %arg0, %c0_i32, %c0_i32_0 : i32, i32, i32
  }
  func.func @transform_1(%arg0: i32) -> (i32, i32) {
    %c0_i32 = arith.constant 0 : i32
    %c0_i32_0 = arith.constant 0 : i32
    %c0_i32_1 = arith.constant 0 : i32
    return %c0_i32, %c0_i32_0 : i32, i32
  }
  func.func @transform_2(%arg0: i32) -> (i32, i32) {
    %c0_i32 = arith.constant 0 : i32
    %c0_i32_0 = arith.constant 0 : i32
    %c0_i32_1 = arith.constant 0 : i32
    return %c0_i32, %c0_i32_0 : i32, i32
  }
  func.func @transform_3(%arg0: i32) -> (i32, i32, i32) {
    %c0_i32 = arith.constant 0 : i32
    %c0_i32_0 = arith.constant 0 : i32
    %c0_i32_1 = arith.constant 0 : i32
    %c0_i32_2 = arith.constant 0 : i32
    return %c0_i32, %c0_i32_0, %c0_i32_1 : i32, i32, i32
  }
  func.func @transform_4(%arg0: i32) -> (i32, i32, i32) {
    %c0_i32 = arith.constant 0 : i32
    %c0_i32_0 = arith.constant 0 : i32
    %c0_i32_1 = arith.constant 0 : i32
    %c0_i32_2 = arith.constant 0 : i32
    return %c0_i32, %c0_i32_0, %c0_i32_1 : i32, i32, i32
  }
  func.func @transform_5(%arg0: i32) -> (i32, i32, i32, i32) {
    %c0_i32 = arith.constant 0 : i32
    %c0_i32_0 = arith.constant 0 : i32
    %c0_i32_1 = arith.constant 0 : i32
    %c0_i32_2 = arith.constant 0 : i32
    %c0_i32_3 = arith.constant 0 : i32
    return %c0_i32, %c0_i32_0, %c0_i32_1, %c0_i32_2 : i32, i32, i32, i32
  }
  func.func @transform_6(%arg0: i32) -> (i32, i32, i32) {
    %c0_i32 = arith.constant 0 : i32
    %c0_i32_0 = arith.constant 0 : i32
    %c0_i32_1 = arith.constant 0 : i32
    %c0_i32_2 = arith.constant 0 : i32
    return %c0_i32, %c0_i32_0, %c0_i32_1 : i32, i32, i32
  }
  func.func @transform_7(%arg0: i32) -> (i32, i32, i32) {
    %c0_i32 = arith.constant 0 : i32
    %c0_i32_0 = arith.constant 0 : i32
    %c0_i32_1 = arith.constant 0 : i32
    %c0_i32_2 = arith.constant 0 : i32
    return %c0_i32, %c0_i32_0, %c0_i32_1 : i32, i32, i32
  }
  func.func @transform_8(%arg0: i32) -> (i32, i32, i32) {
    %c0_i32 = arith.constant 0 : i32
    %c0_i32_0 = arith.constant 0 : i32
    %c0_i32_1 = arith.constant 0 : i32
    %c0_i32_2 = arith.constant 0 : i32
    return %c0_i32, %c0_i32_0, %c0_i32_1 : i32, i32, i32
  }
  func.func @transform_9(%arg0: i32) -> (i32, i32, i32) {
    %c0_i32 = arith.constant 0 : i32
    %c0_i32_0 = arith.constant 0 : i32
    %c0_i32_1 = arith.constant 0 : i32
    %c0_i32_2 = arith.constant 0 : i32
    return %c0_i32, %c0_i32_0, %c0_i32_1 : i32, i32, i32
  }
  func.func @transform_10(%arg0: i32) -> (i32, i32) {
    %c0_i32 = arith.constant 0 : i32
    %c0_i32_0 = arith.constant 0 : i32
    %c0_i32_1 = arith.constant 0 : i32
    return %c0_i32, %c0_i32_0 : i32, i32
  }
  func.func @transform_11(%arg0: i32) -> (i32, i32, i32) {
    %c0_i32 = arith.constant 0 : i32
    %c0_i32_0 = arith.constant 0 : i32
    %c0_i32_1 = arith.constant 0 : i32
    return %arg0, %c0_i32, %c0_i32_0 : i32, i32, i32
  }
}

</mosaic_0001>

<llo_original>
// kernel: siglip_vision_model.1
$region0: #{siglip_vision_model.1}
  #allocation0 [shape = 'u32[]', space=smem, size = 0x4, offset = 0x4, fixed_abs, tag = 'smem constant byte address 0x4 - core index']
  #allocation1 [shape = 'u32[144,128]{1,0:T(1,128)}', space=vmem, size = 0x12000, scoped, tag = 'internal scratch']
  %s0 = inlined_call_operand.vmem [shape: bf16[2,16,128], index: 0, kind: input, shape index: {}]
  %s1 = inlined_call_operand.vmem [shape: bf16[128,128], index: 1, kind: input, shape index: {}]
  %s2 = inlined_call_operand.vmem [shape: f32[16,128], index: 2, kind: input, shape index: {}]
  %s3 = inlined_call_operand.vmem [shape: bf16[2,128,384], index: 3, kind: input, shape index: {}]
  %s4 = inlined_call_operand.vmem [shape: f32[2,1,384], index: 4, kind: input, shape index: {}]
  %s5 = inlined_call_operand.hbm [shape: bf16[2,4,32,128], index: 5, kind: input, shape index: {}]
  %s6 = inlined_call_operand.vmem [shape: bf16[2,128,256], index: 6, kind: input, shape index: {}]
  %s7 = inlined_call_operand.vmem [shape: f32[2,1,256], index: 7, kind: input, shape index: {}]
  %s8 = inlined_call_operand.vmem [shape: bf16[2,256,128], index: 8, kind: input, shape index: {}]
  %s9 = inlined_call_operand.vmem [shape: f32[2,8,128], index: 9, kind: input, shape index: {}]
  %s10 = inlined_call_operand.vmem [shape: f32[2,128], index: 10, kind: input, shape index: {}]
  %s11 = inlined_call_operand.hbm [shape: f32[2,16,128], index: 11, kind: output, shape index: {}]
  %s12 = sld [smem:[#allocation0]]
  $region81: #{siglip_vision_model.1} parent=0
    _
  %s14 = ssub.s32 1, %s12
  %s15 = scalar_select 0, %s14, %s12
  $region1: #{siglip_vision_model.1} parent=0
    #allocation2 [shape = 'u8[65536]{0}', space=vmem, size = 0x10000, scoped, tag = 'input window, operand 5, single buffered']
    #allocation3 [shape = 's32[2]{0}', space=sflag, size = 0x8, scoped, tag = 'scoped memory for siglip_vision_model.1']
    #allocation4 [shape = 's32[2]{0}', space=sflag, size = 0x8, scoped, tag = 'scoped memory for siglip_vision_model.1']
    #allocation5 [shape = 'u8[16384]{0}', space=vmem, size = 0x4000, scoped, tag = 'output window, operand 0']
    %16 = vsyncpa [#allocation3], 0
    %17 = vsyncpa [#allocation4], 0
    %s18 = scalar_lea.sflag [#allocation4], 1
    %19 = vsyncpa %s18, 0
    loop: start=0, step=1, limit=4
    $region2: #{siglip_vision_model.1} parent=1 // loop_pre_header
      _
    $region3: #{siglip_vision_model.1} parent=1 // loop_header
      %s21 = sphi 0, %s25
      %p22 = scmp.ge.s32.totalorder %s21, 4
      %s31 = sphi 0, %s33
      %s34 = sphi 0, %s31
      %s35 = sphi 0, %s34
      %s51 = sphi 0, %s35
      %s55 = sphi 0, %s55
      %s57 = sphi 0, %s55
      %s58 = sphi 0, %s57
      %s72 = sphi 0, %s58
      %s76 = sphi 0, %s76
      %s78 = sphi 0, %s76
      %s79 = sphi 0, %s78
      %s93 = sphi 0, %s79
      %s97 = sphi 0, %s97
      %s99 = sphi 0, %s97
      %s100 = sphi 0, %s99
      %s114 = sphi 0, %s100
      %s118 = sphi 0, %s118
      %s120 = sphi 0, %s118
      %s121 = sphi 0, %s120
      %s135 = sphi 0, %s121
      %s139 = sphi 0, %s139
      %s141 = sphi 0, %s139
      %s142 = sphi 0, %s141
      %s156 = sphi 0, %s142
      %s160 = sphi 0, %s160
      %s162 = sphi 0, %s160
      %s163 = sphi 0, %s162
      %s177 = sphi 0, %s163
      %s181 = sphi 0, %s181
      %s183 = sphi 0, %s181
      %s184 = sphi 0, %s183
      %s198 = sphi 0, %s184
      %s202 = sphi 0, %s202
      %s204 = sphi 0, %s202
      %s205 = sphi 0, %s204
      %s219 = sphi 0, %s205
      %s223 = sphi 0, %s223
      %s225 = sphi 0, %s223
      %s226 = sphi 0, %s225
      %s240 = sphi 0, %s226
      %s244 = sphi 0, %s244
      %s246 = sphi 0, %s244
      %s247 = sphi 0, %s246
      %s261 = sphi 0, %s247
      %s267 = sphi 0, %s269
      %s270 = sphi 0, %s267
      %s271 = sphi 0, %s270
      %s287 = sphi 0, %s271
    $region4: #{siglip_vision_model.1} parent=1 // loop_header_branch
      %24 = sbr.rel (%p22) target = $region8
    $region5: #{siglip_vision_model.1} parent=1 // loop_body
      %s26 = ssub.s32 %s21, 1
      %s27 = ssub.s32 %s21, 2
      %s28 = sadd.s32 %s21, 1
      %s29 = ssub.s32 %s21, %s28
      %p30 = scmp.eq.s32.totalorder %s29, 0
      %s32 = sadd.s32 %s31, 1
      %s33 = scalar_select %p30, %s31, %s32
      %p36 = pneg %p30
      %p37 = scmp.eq.s32.totalorder %s21, 1
      %p38 = por %p36, %p37
      %p39 = scmp.ne.s32.totalorder %s31, %s34
      %p40 = scmp.eq.s32.totalorder %s21, 0
      %p41 = por %p39, %p40
      %p42 = scmp.ne.s32.totalorder %s31, %s34
      %p43 = scmp.eq.s32.totalorder %s26, 1
      %p44 = por %p42, %p43
      %p45 = scmp.ne.s32.totalorder %s34, %s35
      %p46 = scmp.eq.s32.totalorder %s26, 0
      %p47 = por %p45, %p46
      %p48 = scmp.ne.s32.totalorder %s34, %s35
      %p49 = scmp.eq.s32.totalorder %s27, 1
      %p50 = por %p48, %p49
      %p52 = scmp.ne.s32.totalorder %s35, %s51
      %p53 = scmp.eq.s32.totalorder %s27, 0
      %p54 = por %p52, %p53
      %s56 = sadd.s32 %s55, 1
      %p59 = scmp.eq.s32.totalorder %s21, 1
      %p60 = scmp.ne.s32.totalorder %s55, %s57
      %p61 = scmp.eq.s32.totalorder %s21, 0
      %p62 = por %p60, %p61
      %p63 = scmp.ne.s32.totalorder %s55, %s57
      %p64 = scmp.eq.s32.totalorder %s26, 1
      %p65 = por %p63, %p64
      %p66 = scmp.ne.s32.totalorder %s57, %s58
      %p67 = scmp.eq.s32.totalorder %s26, 0
      %p68 = por %p66, %p67
      %p69 = scmp.ne.s32.totalorder %s57, %s58
      %p70 = scmp.eq.s32.totalorder %s27, 1
      %p71 = por %p69, %p70
      %p73 = scmp.ne.s32.totalorder %s58, %s72
      %p74 = scmp.eq.s32.totalorder %s27, 0
      %p75 = por %p73, %p74
      %s77 = sadd.s32 %s76, 1
      %p80 = scmp.eq.s32.totalorder %s21, 1
      %p81 = scmp.ne.s32.totalorder %s76, %s78
      %p82 = scmp.eq.s32.totalorder %s21, 0
      %p83 = por %p81, %p82
      %p84 = scmp.ne.s32.totalorder %s76, %s78
      %p85 = scmp.eq.s32.totalorder %s26, 1
      %p86 = por %p84, %p85
      %p87 = scmp.ne.s32.totalorder %s78, %s79
      %p88 = scmp.eq.s32.totalorder %s26, 0
      %p89 = por %p87, %p88
      %p90 = scmp.ne.s32.totalorder %s78, %s79
      %p91 = scmp.eq.s32.totalorder %s27, 1
      %p92 = por %p90, %p91
      %p94 = scmp.ne.s32.totalorder %s79, %s93
      %p95 = scmp.eq.s32.totalorder %s27, 0
      %p96 = por %p94, %p95
      %s98 = sadd.s32 %s97, 1
      %p101 = scmp.eq.s32.totalorder %s21, 1
      %p102 = scmp.ne.s32.totalorder %s97, %s99
      %p103 = scmp.eq.s32.totalorder %s21, 0
      %p104 = por %p102, %p103
      %p105 = scmp.ne.s32.totalorder %s97, %s99
      %p106 = scmp.eq.s32.totalorder %s26, 1
      %p107 = por %p105, %p106
      %p108 = scmp.ne.s32.totalorder %s99, %s100
      %p109 = scmp.eq.s32.totalorder %s26, 0
      %p110 = por %p108, %p109
      %p111 = scmp.ne.s32.totalorder %s99, %s100
      %p112 = scmp.eq.s32.totalorder %s27, 1
      %p113 = por %p111, %p112
      %p115 = scmp.ne.s32.totalorder %s100, %s114
      %p116 = scmp.eq.s32.totalorder %s27, 0
      %p117 = por %p115, %p116
      %s119 = sadd.s32 %s118, 1
      %p122 = scmp.eq.s32.totalorder %s21, 1
      %p123 = scmp.ne.s32.totalorder %s118, %s120
      %p124 = scmp.eq.s32.totalorder %s21, 0
      %p125 = por %p123, %p124
      %p126 = scmp.ne.s32.totalorder %s118, %s120
      %p127 = scmp.eq.s32.totalorder %s26, 1
      %p128 = por %p126, %p127
      %p129 = scmp.ne.s32.totalorder %s120, %s121
      %p130 = scmp.eq.s32.totalorder %s26, 0
      %p131 = por %p129, %p130
      %p132 = scmp.ne.s32.totalorder %s120, %s121
      %p133 = scmp.eq.s32.totalorder %s27, 1
      %p134 = por %p132, %p133
      %p136 = scmp.ne.s32.totalorder %s121, %s135
      %p137 = scmp.eq.s32.totalorder %s27, 0
      %p138 = por %p136, %p137
      %s140 = sadd.s32 %s139, 1
      %p143 = scmp.eq.s32.totalorder %s21, 1
      %p144 = scmp.ne.s32.totalorder %s139, %s141
      %p145 = scmp.eq.s32.totalorder %s21, 0
      %p146 = por %p144, %p145
      %p147 = scmp.ne.s32.totalorder %s139, %s141
      %p148 = scmp.eq.s32.totalorder %s26, 1
      %p149 = por %p147, %p148
      %p150 = scmp.ne.s32.totalorder %s141, %s142
      %p151 = scmp.eq.s32.totalorder %s26, 0
      %p152 = por %p150, %p151
      %p153 = scmp.ne.s32.totalorder %s141, %s142
      %p154 = scmp.eq.s32.totalorder %s27, 1
      %p155 = por %p153, %p154
      %p157 = scmp.ne.s32.totalorder %s142, %s156
      %p158 = scmp.eq.s32.totalorder %s27, 0
      %p159 = por %p157, %p158
      %s161 = sadd.s32 %s160, 1
      %p164 = scmp.eq.s32.totalorder %s21, 1
      %p165 = scmp.ne.s32.totalorder %s160, %s162
      %p166 = scmp.eq.s32.totalorder %s21, 0
      %p167 = por %p165, %p166
      %p168 = scmp.ne.s32.totalorder %s160, %s162
      %p169 = scmp.eq.s32.totalorder %s26, 1
      %p170 = por %p168, %p169
      %p171 = scmp.ne.s32.totalorder %s162, %s163
      %p172 = scmp.eq.s32.totalorder %s26, 0
      %p173 = por %p171, %p172
      %p174 = scmp.ne.s32.totalorder %s162, %s163
      %p175 = scmp.eq.s32.totalorder %s27, 1
      %p176 = por %p174, %p175
      %p178 = scmp.ne.s32.totalorder %s163, %s177
      %p179 = scmp.eq.s32.totalorder %s27, 0
      %p180 = por %p178, %p179
      %s182 = sadd.s32 %s181, 1
      %p185 = scmp.eq.s32.totalorder %s21, 1
      %p186 = scmp.ne.s32.totalorder %s181, %s183
      %p187 = scmp.eq.s32.totalorder %s21, 0
      %p188 = por %p186, %p187
      %p189 = scmp.ne.s32.totalorder %s181, %s183
      %p190 = scmp.eq.s32.totalorder %s26, 1
      %p191 = por %p189, %p190
      %p192 = scmp.ne.s32.totalorder %s183, %s184
      %p193 = scmp.eq.s32.totalorder %s26, 0
      %p194 = por %p192, %p193
      %p195 = scmp.ne.s32.totalorder %s183, %s184
      %p196 = scmp.eq.s32.totalorder %s27, 1
      %p197 = por %p195, %p196
      %p199 = scmp.ne.s32.totalorder %s184, %s198
      %p200 = scmp.eq.s32.totalorder %s27, 0
      %p201 = por %p199, %p200
      %s203 = sadd.s32 %s202, 1
      %p206 = scmp.eq.s32.totalorder %s21, 1
      %p207 = scmp.ne.s32.totalorder %s202, %s204
      %p208 = scmp.eq.s32.totalorder %s21, 0
      %p209 = por %p207, %p208
      %p210 = scmp.ne.s32.totalorder %s202, %s204
      %p211 = scmp.eq.s32.totalorder %s26, 1
      %p212 = por %p210, %p211
      %p213 = scmp.ne.s32.totalorder %s204, %s205
      %p214 = scmp.eq.s32.totalorder %s26, 0
      %p215 = por %p213, %p214
      %p216 = scmp.ne.s32.totalorder %s204, %s205
      %p217 = scmp.eq.s32.totalorder %s27, 1
      %p218 = por %p216, %p217
      %p220 = scmp.ne.s32.totalorder %s205, %s219
      %p221 = scmp.eq.s32.totalorder %s27, 0
      %p222 = por %p220, %p221
      %s224 = sadd.s32 %s223, 1
      %p227 = scmp.eq.s32.totalorder %s21, 1
      %p228 = scmp.ne.s32.totalorder %s223, %s225
      %p229 = scmp.eq.s32.totalorder %s21, 0
      %p230 = por %p228, %p229
      %p231 = scmp.ne.s32.totalorder %s223, %s225
      %p232 = scmp.eq.s32.totalorder %s26, 1
      %p233 = por %p231, %p232
      %p234 = scmp.ne.s32.totalorder %s225, %s226
      %p235 = scmp.eq.s32.totalorder %s26, 0
      %p236 = por %p234, %p235
      %p237 = scmp.ne.s32.totalorder %s225, %s226
      %p238 = scmp.eq.s32.totalorder %s27, 1
      %p239 = por %p237, %p238
      %p241 = scmp.ne.s32.totalorder %s226, %s240
      %p242 = scmp.eq.s32.totalorder %s27, 0
      %p243 = por %p241, %p242
      %s245 = sadd.s32 %s244, 1
      %p248 = scmp.eq.s32.totalorder %s21, 1
      %p249 = scmp.ne.s32.totalorder %s244, %s246
      %p250 = scmp.eq.s32.totalorder %s21, 0
      %p251 = por %p249, %p250
      %p252 = scmp.ne.s32.totalorder %s244, %s246
      %p253 = scmp.eq.s32.totalorder %s26, 1
      %p254 = por %p252, %p253
      %p255 = scmp.ne.s32.totalorder %s246, %s247
      %p256 = scmp.eq.s32.totalorder %s26, 0
      %p257 = por %p255, %p256
      %p258 = scmp.ne.s32.totalorder %s246, %s247
      %p259 = scmp.eq.s32.totalorder %s27, 1
      %p260 = por %p258, %p259
      %p262 = scmp.ne.s32.totalorder %s247, %s261
      %p263 = scmp.eq.s32.totalorder %s27, 0
      %p264 = por %p262, %p263
      %s265 = ssub.s32 %s21, %s28
      %p266 = scmp.eq.s32.totalorder %s265, 0
      %s268 = sadd.s32 %s267, 1
      %s269 = scalar_select %p266, %s267, %s268
      %p272 = pneg %p266
      %p273 = scmp.eq.s32.totalorder %s21, 1
      %p274 = por %p272, %p273
      %p275 = scmp.ne.s32.totalorder %s267, %s270
      %p276 = scmp.eq.s32.totalorder %s21, 0
      %p277 = por %p275, %p276
      %p278 = scmp.ne.s32.totalorder %s267, %s270
      %p279 = scmp.eq.s32.totalorder %s26, 1
      %p280 = por %p278, %p279
      %p281 = scmp.ne.s32.totalorder %s270, %s271
      %p282 = scmp.eq.s32.totalorder %s26, 0
      %p283 = por %p281, %p282
      %p284 = scmp.ne.s32.totalorder %s270, %s271
      %p285 = scmp.eq.s32.totalorder %s27, 1
      %p286 = por %p284, %p285
      %p288 = scmp.ne.s32.totalorder %s271, %s287
      %p289 = scmp.eq.s32.totalorder %s27, 0
      %p290 = por %p288, %p289
      %p291 = scmp.le.s32.totalorder 1, %s21
      %p292 = scmp.lt.s32.totalorder %s21, 3
      %p293 = pnand %p291, %p292
      %p294 = pneg %p293
      // Predicated region
      $region9: #{siglip_vision_model.1} parent=5 // pred_check
        _
      $region10: #{siglip_vision_model.1} parent=5 // pred_check_branch
        %296 = sbr.rel (%p293) target = $region12
      $region11: #{siglip_vision_model.1} parent=5 // pred_region
        %s297 = ssub.s32 %s21, 1
        // Predicated region
        $region13: #{siglip_vision_model.1} parent=11 // pred_check
          %p298 = pneg %p68
        $region14: #{siglip_vision_model.1} parent=11 // pred_check_branch
          %300 = sbr.rel (%p298) target = $region16
        $region15: #{siglip_vision_model.1} parent=11 // pred_region
          _
        $region16: #{siglip_vision_model.1} parent=11 // pred_fallthru
          _
        // Predicated region
        $region17: #{siglip_vision_model.1} parent=11 // pred_check
          %p301 = pneg %p89
        $region18: #{siglip_vision_model.1} parent=11 // pred_check_branch
          %303 = sbr.rel (%p301) target = $region20
        $region19: #{siglip_vision_model.1} parent=11 // pred_region
          _
        $region20: #{siglip_vision_model.1} parent=11 // pred_fallthru
          _
        // Predicated region
        $region21: #{siglip_vision_model.1} parent=11 // pred_check
          %p304 = pneg %p110
        $region22: #{siglip_vision_model.1} parent=11 // pred_check_branch
          %306 = sbr.rel (%p304) target = $region24
        $region23: #{siglip_vision_model.1} parent=11 // pred_region
          _
        $region24: #{siglip_vision_model.1} parent=11 // pred_fallthru
          _
        // Predicated region
        $region25: #{siglip_vision_model.1} parent=11 // pred_check
          %p307 = pneg %p131
        $region26: #{siglip_vision_model.1} parent=11 // pred_check_branch
          %309 = sbr.rel (%p307) target = $region28
        $region27: #{siglip_vision_model.1} parent=11 // pred_region
          _
        $region28: #{siglip_vision_model.1} parent=11 // pred_fallthru
          _
        // Predicated region
        $region29: #{siglip_vision_model.1} parent=11 // pred_check
          %p310 = pneg %p152
        $region30: #{siglip_vision_model.1} parent=11 // pred_check_branch
          %312 = sbr.rel (%p310) target = $region32
        $region31: #{siglip_vision_model.1} parent=11 // pred_region
          %s314 = ssub.s32 2048, 2048
          %315 = vsyncadd [#allocation3], %s314
          %s316 = sshll.u32 [#allocation2], 4
          %s317 = int_to_ptr.vmem [resolvable:$true] %s316
          %322 = dma.hbm_to_vmem [thread:$0]  %s5, 2048, %s317, [#allocation3], 64, 64, 4
        $region32: #{siglip_vision_model.1} parent=11 // pred_fallthru
          _
        // Predicated region
        $region33: #{siglip_vision_model.1} parent=11 // pred_check
          %p323 = pneg %p173
        $region34: #{siglip_vision_model.1} parent=11 // pred_check_branch
          %325 = sbr.rel (%p323) target = $region36
        $region35: #{siglip_vision_model.1} parent=11 // pred_region
          _
        $region36: #{siglip_vision_model.1} parent=11 // pred_fallthru
          _
        // Predicated region
        $region37: #{siglip_vision_model.1} parent=11 // pred_check
          %p326 = pneg %p194
        $region38: #{siglip_vision_model.1} parent=11 // pred_check_branch
          %328 = sbr.rel (%p326) target = $region40
        $region39: #{siglip_vision_model.1} parent=11 // pred_region
          _
        $region40: #{siglip_vision_model.1} parent=11 // pred_fallthru
          _
        // Predicated region
        $region41: #{siglip_vision_model.1} parent=11 // pred_check
          %p329 = pneg %p215
        $region42: #{siglip_vision_model.1} parent=11 // pred_check_branch
          %331 = sbr.rel (%p329) target = $region44
        $region43: #{siglip_vision_model.1} parent=11 // pred_region
          _
        $region44: #{siglip_vision_model.1} parent=11 // pred_fallthru
          _
        // Predicated region
        $region45: #{siglip_vision_model.1} parent=11 // pred_check
          %p332 = pneg %p236
        $region46: #{siglip_vision_model.1} parent=11 // pred_check_branch
          %334 = sbr.rel (%p332) target = $region48
        $region47: #{siglip_vision_model.1} parent=11 // pred_region
          _
        $region48: #{siglip_vision_model.1} parent=11 // pred_fallthru
          _
        // Predicated region
        $region49: #{siglip_vision_model.1} parent=11 // pred_check
          %p335 = pneg %p257
        $region50: #{siglip_vision_model.1} parent=11 // pred_check_branch
          %337 = sbr.rel (%p335) target = $region52
        $region51: #{siglip_vision_model.1} parent=11 // pred_region
          _
        $region52: #{siglip_vision_model.1} parent=11 // pred_fallthru
          _
      $region12: #{siglip_vision_model.1} parent=5 // pred_fallthru
        _
      %p338 = scmp.lt.s32.totalorder %s21, 2
      // Predicated region
      $region53: #{siglip_vision_model.1} parent=5 // pred_check
        %p339 = pneg %p338
      $region54: #{siglip_vision_model.1} parent=5 // pred_check_branch
        %341 = sbr.rel (%p339) target = $region56
      $region55: #{siglip_vision_model.1} parent=5 // pred_region
        // Predicated region
        $region57: #{siglip_vision_model.1} parent=55 // pred_check
          %p342 = pneg %p41
        $region58: #{siglip_vision_model.1} parent=55 // pred_check_branch
          %344 = sbr.rel (%p342) target = $region60
        $region59: #{siglip_vision_model.1} parent=55 // pred_region
          %p345 = scmp.lt.s32.totalorder %s21, 1
          %s346 = scalar_select %p345, %s21, 1
          %s347 = smul.addr %s346, 2
          %s348 = smul.addr %s347, 4
          %s349 = scalar_lea.vmem %s0, %s348
        $region60: #{siglip_vision_model.1} parent=55 // pred_fallthru
          _
      $region56: #{siglip_vision_model.1} parent=5 // pred_fallthru
        _
      %p350 = scmp.le.s32.totalorder 1, %s21
      %p351 = scmp.lt.s32.totalorder %s21, 3
      %p352 = pnand %p350, %p351
      %p353 = pneg %p352
      // Predicated region
      $region61: #{siglip_vision_model.1} parent=5 // pred_check
        _
      $region62: #{siglip_vision_model.1} parent=5 // pred_check_branch
        %355 = sbr.rel (%p352) target = $region64
      $region63: #{siglip_vision_model.1} parent=5 // pred_region
        %s356 = ssub.s32 %s21, 1
        // Predicated region
        $region65: #{siglip_vision_model.1} parent=63 // pred_check
          %p357 = pneg %p152
        $region66: #{siglip_vision_model.1} parent=63 // pred_check_branch
          %359 = sbr.rel (%p357) target = $region68
        $region67: #{siglip_vision_model.1} parent=63 // pred_region
          %360 = dma.done [#allocation3], 2048
        $region68: #{siglip_vision_model.1} parent=63 // pred_fallthru
          _
        %p361 = scmp.lt.s32.totalorder %s26, 1
        %s362 = scalar_select %p361, %s26, 1
        %s363 = smul.addr %s362, 2
        %s364 = smul.addr %s363, 4
        %s365 = scalar_lea.vmem %s0, %s364
        %p366 = pneg %p47
        %p367 = pneg %p44
        %p368 = pneg %p68
        %p369 = pneg %p65
        %p370 = pneg %p89
        %p371 = pneg %p86
        %p372 = pneg %p110
        %p373 = pneg %p107
        %p374 = pneg %p131
        %p375 = pneg %p128
        %p376 = pneg %p152
        %p377 = pneg %p149
        %p378 = pneg %p173
        %p379 = pneg %p170
        %p380 = pneg %p194
        %p381 = pneg %p191
        %p382 = pneg %p215
        %p383 = pneg %p212
        %p384 = pneg %p236
        %p385 = pneg %p233
        %p386 = pneg %p257
        %p387 = pneg %p254
        %p388 = pneg %p283
        %p389 = pneg %p280
        %s390 = sand.u32 %s270, 1
        %s391 = scalar_lea.sflag [#allocation4], %s390
        %s392 = sand.u32 %s270, 1
        %s393 = smul.addr %s392, 16
        %s394 = scalar_lea.vmem [#allocation5], %s393
        %p395 = scmp.lt.s32.totalorder %s26, 1
        %s396 = scalar_select %p395, %s26, 1
        %s397 = smul.addr %s396, 2
        %s398 = smul.addr %s397, 4
        %s399 = scalar_lea.vmem %s0, %s398
        %v401 = vld [vmem:[%s399] sm:$0xf]
        %v402 = vld [vmem:[%s399 + $0x4] sm:$0xf]
        %v403 = vld [vmem:[%s1] sm:$0xf]
        %v404 = vld [vmem:[%s1 + $0x4] sm:$0xf]
        %v405 = vld [vmem:[%s1 + $0x8] sm:$0xf]
        %v406 = vld [vmem:[%s1 + $0xc] sm:$0xf]
        %v407 = vld [vmem:[%s1 + $0x10] sm:$0xf]
        %v408 = vld [vmem:[%s1 + $0x14] sm:$0xf]
        %v409 = vld [vmem:[%s1 + $0x18] sm:$0xf]
        %v410 = vld [vmem:[%s1 + $0x1c] sm:$0xf]
        %v411 = vld [vmem:[%s1 + $0x20] sm:$0xf]
        %v412 = vld [vmem:[%s1 + $0x24] sm:$0xf]
        %v413 = vld [vmem:[%s1 + $0x28] sm:$0xf]
        %v414 = vld [vmem:[%s1 + $0x2c] sm:$0xf]
        %v415 = vld [vmem:[%s1 + $0x30] sm:$0xf]
        %v416 = vld [vmem:[%s1 + $0x34] sm:$0xf]
        %v417 = vld [vmem:[%s1 + $0x38] sm:$0xf]
        %v418 = vld [vmem:[%s1 + $0x3c] sm:$0xf]
        %v419 = vld [vmem:[%s2] sm:$0xff]
        %v420 = vld [vmem:[%s2 + $0x8] sm:$0xff]
        %v423 = vunpack.c.l.b16 %v401
        %v424 = vunpack.c.l.b16 %v402
        %v425 = vpack.c.b16 %v424, %v423
        %v443 = vunpack.c.l.b16 %v403
        %v444 = vunpack.c.l.b16 %v404
        %v445 = vunpack.c.l.b16 %v405
        %v446 = vunpack.c.l.b16 %v406
        %v447 = vunpack.c.l.b16 %v407
        %v448 = vunpack.c.l.b16 %v408
        %v449 = vunpack.c.l.b16 %v409
        %v450 = vunpack.c.l.b16 %v410
        %v451 = vunpack.c.l.b16 %v411
        %v452 = vunpack.c.l.b16 %v412
        %v453 = vunpack.c.l.b16 %v413
        %v454 = vunpack.c.l.b16 %v414
        %v455 = vunpack.c.l.b16 %v415
        %v456 = vunpack.c.l.b16 %v416
        %v457 = vunpack.c.l.b16 %v417
        %v458 = vunpack.c.l.b16 %v418
        %v459 = vpack.c.b16 %v444, %v443
        %v460 = vpack.c.b16 %v446, %v445
        %v461 = vpack.c.b16 %v448, %v447
        %v462 = vpack.c.b16 %v450, %v449
        %v463 = vpack.c.b16 %v452, %v451
        %v464 = vpack.c.b16 %v454, %v453
        %v465 = vpack.c.b16 %v456, %v455
        %v466 = vpack.c.b16 %v458, %v457
        %475 = vmatprep.subr.bf16.mxu0 0
        %476 = vmatpush1.bf16.msra.mxu0 %v466
        %477 = vmatprep.subr.bf16.mxu0 0
        %478 = vmatpush1.bf16.msra.mxu0 %v465
        %479 = vmatprep.subr.bf16.mxu0 0
        %480 = vmatpush1.bf16.msra.mxu0 %v464
        %481 = vmatprep.subr.bf16.mxu0 0
        %482 = vmatpush1.bf16.msra.mxu0 %v463
        %483 = vmatprep.subr.bf16.mxu0 0
        %484 = vmatpush1.bf16.msra.mxu0 %v462
        %485 = vmatprep.subr.bf16.mxu0 0
        %486 = vmatpush1.bf16.msra.mxu0 %v461
        %487 = vmatprep.subr.bf16.mxu0 0
        %488 = vmatpush1.bf16.msra.mxu0 %v460
        %489 = vmatprep.subr.bf16.mxu0 0
        %490 = vmatpush1.bf16.msra.mxu0 %v459
        %491 = vmatprep.subr.bf16.mxu0 0
        %492 = vmatpush2.bf16.msra.mxu0 0
        %493 = vmatprep.subr.bf16.mxu0 0
        %494 = vmatpush2.bf16.msra.mxu0 0
        %495 = vmatprep.subr.bf16.mxu0 0
        %496 = vmatpush2.bf16.msra.mxu0 0
        %497 = vmatprep.subr.bf16.mxu0 0
        %498 = vmatpush2.bf16.msra.mxu0 0
        %499 = vmatprep.subr.bf16.mxu0 0
        %500 = vmatpush2.bf16.msra.mxu0 0
        %501 = vmatprep.subr.bf16.mxu0 0
        %502 = vmatpush2.bf16.msra.mxu0 0
        %503 = vmatprep.subr.bf16.mxu0 0
        %504 = vmatpush2.bf16.msra.mxu0 0
        %505 = vmatprep.subr.bf16.mxu0 0
        %506 = vmatpush2.bf16.msra.mxu0 0
        %507 = vmatprep.mubr.bf16.mxu0 0
        %508 = vmatmul.mubr.bf16.gmra.mxu0 %v425
        %v509 = vpop.f32.mrf.mxu0
        %v510 = vadd.f32 %v419, %v509
        %v511 = vpop.f32.mrf.mxu0
        %v512 = vpop.f32.mrf.mxu0
        %v513 = vadd.f32 %v420, %v512
        %v514 = vpop.f32.mrf.mxu0
        %515 = vdwg.mxu0
        %v516 = vld [vmem:[%s9] sm:$0xff]
        %517 = vadd.xlane.f32.xlu0 %v510
        %v518 = vpop.xlane.xlu0 %517
        %519 = vadd.xlane.f32.xlu0 %v513
        %v520 = vpop.xlane.xlu0 %519
        %v521 = vrcp.pop 128.0
        %v522 = vmul.f32 %v518, %v521
        %v523 = vmul.f32 %v520, %v521
        %v524 = vsub.f32 %v510, %v522
        %v525 = vsub.f32 %v513, %v523
        %v526 = vmul.f32 %v524, %v524
        %v527 = vmul.f32 %v525, %v525
        %528 = vadd.xlane.f32.xlu0 %v526
        %v529 = vpop.xlane.xlu0 %528
        %530 = vadd.xlane.f32.xlu0 %v527
        %v531 = vpop.xlane.xlu0 %530
        %v532 = vmul.f32 %v529, %v521
        %v533 = vmul.f32 %v531, %v521
        %v534 = vadd.f32 %v532, 1e-06
        %v535 = vadd.f32 %v533, 1e-06
        %v536 = vrsqrt.pop %v534
        %v537 = vrsqrt.pop %v535
        %v538 = vmul.f32 %v524, %v536
        %v539 = vmul.f32 %v525, %v537
        %v540 = vlaneseq
        %v541 = vshrl.u32 %v540, 7
        %v542 = vsub.s32 0, %v541
        %v543 = vrot.slane %v516, %v542
        %v544 = vmul.f32 %v538, %v543
        %v545 = vmul.f32 %v539, %v543
        %v546 = vlaneseq
        %v547 = vshrl.u32 %v546, 7
        %v548 = vsub.s32 1, %v547
        %v549 = vrot.slane %v516, %v548
        %v550 = vadd.f32 %v544, %v549
        %v551 = vadd.f32 %v545, %v549
        %v552 = vpack.c.bf16 %v551, %v550
        %v553 = vld [vmem:[%s3] sm:$0xff]
        %v554 = vld [vmem:[%s3 + $0x8] sm:$0xf]
        %v555 = vld [vmem:[%s3 + $0xc] sm:$0xff]
        %v556 = vld [vmem:[%s3 + $0x14] sm:$0xf]
        %v557 = vld [vmem:[%s3 + $0x18] sm:$0xff]
        %v558 = vld [vmem:[%s3 + $0x20] sm:$0xf]
        %v559 = vld [vmem:[%s3 + $0x24] sm:$0xff]
        %v560 = vld [vmem:[%s3 + $0x2c] sm:$0xf]
        %v561 = vld [vmem:[%s3 + $0x30] sm:$0xff]
        %v562 = vld [vmem:[%s3 + $0x38] sm:$0xf]
        %v563 = vld [vmem:[%s3 + $0x3c] sm:$0xff]
        %v564 = vld [vmem:[%s3 + $0x44] sm:$0xf]
        %v565 = vld [vmem:[%s3 + $0x48] sm:$0xff]
        %v566 = vld [vmem:[%s3 + $0x50] sm:$0xf]
        %v567 = vld [vmem:[%s3 + $0x54] sm:$0xff]
        %v568 = vld [vmem:[%s3 + $0x5c] sm:$0xf]
        %v569 = vld [vmem:[%s3 + $0x60] sm:$0xff]
        %v570 = vld [vmem:[%s3 + $0x68] sm:$0xf]
        %v571 = vld [vmem:[%s3 + $0x6c] sm:$0xff]
        %v572 = vld [vmem:[%s3 + $0x74] sm:$0xf]
        %v573 = vld [vmem:[%s3 + $0x78] sm:$0xff]
        %v574 = vld [vmem:[%s3 + $0x80] sm:$0xf]
        %v575 = vld [vmem:[%s3 + $0x84] sm:$0xff]
        %v576 = vld [vmem:[%s3 + $0x8c] sm:$0xf]
        %v577 = vld [vmem:[%s3 + $0x90] sm:$0xff]
        %v578 = vld [vmem:[%s3 + $0x98] sm:$0xf]
        %v579 = vld [vmem:[%s3 + $0x9c] sm:$0xff]
        %v580 = vld [vmem:[%s3 + $0xa4] sm:$0xf]
        %v581 = vld [vmem:[%s3 + $0xa8] sm:$0xff]
        %v582 = vld [vmem:[%s3 + $0xb0] sm:$0xf]
        %v583 = vld [vmem:[%s3 + $0xb4] sm:$0xff]
        %v584 = vld [vmem:[%s3 + $0xbc] sm:$0xf]
        %v585 = vld [vmem:[%s4] sm:$0x7]
        %v587 = vlaneseq
        %v588 = vshrl.u32 %v587, 7
        %v589 = vsub.s32 0, %v588
        %v590 = vrot.slane %v585, %v589
        %v591 = vlaneseq
        %v592 = vshrl.u32 %v591, 7
        %v593 = vsub.s32 1, %v592
        %v594 = vrot.slane %v585, %v593
        %v595 = vlaneseq
        %v596 = vshrl.u32 %v595, 7
        %v597 = vsub.s32 2, %v596
        %v598 = vrot.slane %v585, %v597
        %v634 = vunpack.c.l.b16 %v553
        %v635 = vunpack.c.h.b16 %v553
        %v636 = vunpack.c.l.b16 %v554
        %v637 = vunpack.c.l.b16 %v555
        %v638 = vunpack.c.h.b16 %v555
        %v639 = vunpack.c.l.b16 %v556
        %v640 = vunpack.c.l.b16 %v557
        %v641 = vunpack.c.h.b16 %v557
        %v642 = vunpack.c.l.b16 %v558
        %v643 = vunpack.c.l.b16 %v559
        %v644 = vunpack.c.h.b16 %v559
        %v645 = vunpack.c.l.b16 %v560
        %v646 = vunpack.c.l.b16 %v561
        %v647 = vunpack.c.h.b16 %v561
        %v648 = vunpack.c.l.b16 %v562
        %v649 = vunpack.c.l.b16 %v563
        %v650 = vunpack.c.h.b16 %v563
        %v651 = vunpack.c.l.b16 %v564
        %v652 = vunpack.c.l.b16 %v565
        %v653 = vunpack.c.h.b16 %v565
        %v654 = vunpack.c.l.b16 %v566
        %v655 = vunpack.c.l.b16 %v567
        %v656 = vunpack.c.h.b16 %v567
        %v657 = vunpack.c.l.b16 %v568
        %v658 = vunpack.c.l.b16 %v569
        %v659 = vunpack.c.h.b16 %v569
        %v660 = vunpack.c.l.b16 %v570
        %v661 = vunpack.c.l.b16 %v571
        %v662 = vunpack.c.h.b16 %v571
        %v663 = vunpack.c.l.b16 %v572
        %v664 = vunpack.c.l.b16 %v573
        %v665 = vunpack.c.h.b16 %v573
        %v666 = vunpack.c.l.b16 %v574
        %v667 = vunpack.c.l.b16 %v575
        %v668 = vunpack.c.h.b16 %v575
        %v669 = vunpack.c.l.b16 %v576
        %v670 = vunpack.c.l.b16 %v577
        %v671 = vunpack.c.h.b16 %v577
        %v672 = vunpack.c.l.b16 %v578
        %v673 = vunpack.c.l.b16 %v579
        %v674 = vunpack.c.h.b16 %v579
        %v675 = vunpack.c.l.b16 %v580
        %v676 = vunpack.c.l.b16 %v581
        %v677 = vunpack.c.h.b16 %v581
        %v678 = vunpack.c.l.b16 %v582
        %v679 = vunpack.c.l.b16 %v583
        %v680 = vunpack.c.h.b16 %v583
        %v681 = vunpack.c.l.b16 %v584
        %v682 = vpack.c.b16 %v637, %v634
        %v683 = vpack.c.b16 %v638, %v635
        %v684 = vpack.c.b16 %v639, %v636
        %v685 = vpack.c.b16 %v643, %v640
        %v686 = vpack.c.b16 %v644, %v641
        %v687 = vpack.c.b16 %v645, %v642
        %v688 = vpack.c.b16 %v649, %v646
        %v689 = vpack.c.b16 %v650, %v647
        %v690 = vpack.c.b16 %v651, %v648
        %v691 = vpack.c.b16 %v655, %v652
        %v692 = vpack.c.b16 %v656, %v653
        %v693 = vpack.c.b16 %v657, %v654
        %v694 = vpack.c.b16 %v661, %v658
        %v695 = vpack.c.b16 %v662, %v659
        %v696 = vpack.c.b16 %v663, %v660
        %v697 = vpack.c.b16 %v667, %v664
        %v698 = vpack.c.b16 %v668, %v665
        %v699 = vpack.c.b16 %v669, %v666
        %v700 = vpack.c.b16 %v673, %v670
        %v701 = vpack.c.b16 %v674, %v671
        %v702 = vpack.c.b16 %v675, %v672
        %v703 = vpack.c.b16 %v679, %v676
        %v704 = vpack.c.b16 %v680, %v677
        %v705 = vpack.c.b16 %v681, %v678
        %730 = vmatprep.subr.bf16.mxu0 %v704
        %731 = vmatpush1.bf16.msra.mxu0 %v703
        %732 = vmatprep.subr.bf16.mxu0 %v701
        %733 = vmatpush1.bf16.msra.mxu0 %v700
        %734 = vmatprep.subr.bf16.mxu0 %v698
        %735 = vmatpush1.bf16.msra.mxu0 %v697
        %736 = vmatprep.subr.bf16.mxu0 %v695
        %737 = vmatpush1.bf16.msra.mxu0 %v694
        %738 = vmatprep.subr.bf16.mxu0 %v692
        %739 = vmatpush1.bf16.msra.mxu0 %v691
        %740 = vmatprep.subr.bf16.mxu0 %v689
        %741 = vmatpush1.bf16.msra.mxu0 %v688
        %742 = vmatprep.subr.bf16.mxu0 %v686
        %743 = vmatpush1.bf16.msra.mxu0 %v685
        %744 = vmatprep.subr.bf16.mxu0 %v683
        %745 = vmatpush1.bf16.msra.mxu0 %v682
        %746 = vmatprep.subr.bf16.mxu0 0
        %747 = vmatpush2.bf16.msra.mxu0 0
        %748 = vmatprep.subr.bf16.mxu0 0
        %749 = vmatpush2.bf16.msra.mxu0 0
        %750 = vmatprep.subr.bf16.mxu0 0
        %751 = vmatpush2.bf16.msra.mxu0 0
        %752 = vmatprep.subr.bf16.mxu0 0
        %753 = vmatpush2.bf16.msra.mxu0 0
        %754 = vmatprep.subr.bf16.mxu0 0
        %755 = vmatpush2.bf16.msra.mxu0 0
        %756 = vmatprep.subr.bf16.mxu0 0
        %757 = vmatpush2.bf16.msra.mxu0 0
        %758 = vmatprep.subr.bf16.mxu0 0
        %759 = vmatpush2.bf16.msra.mxu0 0
        %760 = vmatprep.subr.bf16.mxu0 0
        %761 = vmatpush2.bf16.msra.mxu0 0
        %762 = vmatprep.mubr.bf16.mxu0 0
        %763 = vmatmul.mubr.bf16.gmra.mxu0 %v552
        %v764 = vpop.f32.mrf.mxu0
        %v765 = vadd.f32 %v590, %v764
        %v766 = vpop.f32.mrf.mxu0
        %v767 = vadd.f32 %v594, %v766
        %v768 = vpop.f32.mrf.mxu0
        %v769 = vadd.f32 %v590, %v768
        %v770 = vpop.f32.mrf.mxu0
        %v771 = vadd.f32 %v594, %v770
        %772 = vdwg.mxu0
        %773 = vmatprep.subr.bf16.mxu0 0
        %774 = vmatpush1.bf16.msra.mxu0 %v705
        %775 = vmatprep.subr.bf16.mxu0 0
        %776 = vmatpush1.bf16.msra.mxu0 %v702
        %777 = vmatprep.subr.bf16.mxu0 0
        %778 = vmatpush1.bf16.msra.mxu0 %v699
        %779 = vmatprep.subr.bf16.mxu0 0
        %780 = vmatpush1.bf16.msra.mxu0 %v696
        %781 = vmatprep.subr.bf16.mxu0 0
        %782 = vmatpush1.bf16.msra.mxu0 %v693
        %783 = vmatprep.subr.bf16.mxu0 0
        %784 = vmatpush1.bf16.msra.mxu0 %v690
        %785 = vmatprep.subr.bf16.mxu0 0
        %786 = vmatpush1.bf16.msra.mxu0 %v687
        %787 = vmatprep.subr.bf16.mxu0 0
        %788 = vmatpush1.bf16.msra.mxu0 %v684
        %789 = vmatprep.subr.bf16.mxu0 0
        %790 = vmatpush2.bf16.msra.mxu0 0
        %791 = vmatprep.subr.bf16.mxu0 0
        %792 = vmatpush2.bf16.msra.mxu0 0
        %793 = vmatprep.subr.bf16.mxu0 0
        %794 = vmatpush2.bf16.msra.mxu0 0
        %795 = vmatprep.subr.bf16.mxu0 0
        %796 = vmatpush2.bf16.msra.mxu0 0
        %797 = vmatprep.subr.bf16.mxu0 0
        %798 = vmatpush2.bf16.msra.mxu0 0
        %799 = vmatprep.subr.bf16.mxu0 0
        %800 = vmatpush2.bf16.msra.mxu0 0
        %801 = vmatprep.subr.bf16.mxu0 0
        %802 = vmatpush2.bf16.msra.mxu0 0
        %803 = vmatprep.subr.bf16.mxu0 0
        %804 = vmatpush2.bf16.msra.mxu0 0
        %805 = vmatprep.mubr.bf16.mxu0 0
        %806 = vmatmul.mubr.bf16.gmra.mxu0 %v552
        %v807 = vpop.f32.mrf.mxu0
        %v808 = vadd.f32 %v598, %v807
        %v809 = vpop.f32.mrf.mxu0
        %v810 = vpop.f32.mrf.mxu0
        %v811 = vadd.f32 %v598, %v810
        %v812 = vpop.f32.mrf.mxu0
        %813 = vdwg.mxu0
        %vm814 = vcmask 261120
        %v816 = vsel %vm814, %v765, 0
        %v819 = vsel %vm814, %v769, 0
        %v822 = vsel %vm814, %v767, 0
        %v825 = vsel %vm814, %v771, 0
        %827 = vmatprep.subr.mxu0 0.0
        %828 = vmatpush1.xpose.msra.mxu0 0.0
        %829 = vmatprep.subr.mxu0 0.0
        %830 = vmatpush1.xpose.msra.mxu0 0.0
        %831 = vmatprep.subr.mxu0 0.0
        %832 = vmatpush1.xpose.msra.mxu0 0.0
        %833 = vmatprep.subr.mxu0 0.0
        %834 = vmatpush1.xpose.msra.mxu0 0.0
        %835 = vmatprep.subr.mxu0 0.0
        %836 = vmatpush1.xpose.msra.mxu0 0.0
        %837 = vmatprep.subr.mxu0 0.0
        %838 = vmatpush1.xpose.msra.mxu0 0.0
        %839 = vmatprep.subr.mxu0 0.0
        %840 = vmatpush1.xpose.msra.mxu0 0.0
        %841 = vmatprep.subr.mxu0 0.0
        %842 = vmatpush1.xpose.msra.mxu0 0.0
        %843 = vmatprep.subr.mxu0 0.0
        %844 = vmatpush1.xpose.msra.mxu0 0.0
        %845 = vmatprep.subr.mxu0 0.0
        %846 = vmatpush1.xpose.msra.mxu0 0.0
        %847 = vmatprep.subr.mxu0 0.0
        %848 = vmatpush1.xpose.msra.mxu0 0.0
        %849 = vmatprep.subr.mxu0 0.0
        %850 = vmatpush1.xpose.msra.mxu0 0.0
        %851 = vmatprep.subr.mxu0 0.0
        %852 = vmatpush1.xpose.msra.mxu0 0.0
        %853 = vmatprep.subr.mxu0 0.0
        %854 = vmatpush1.xpose.msra.mxu0 0.0
        %855 = vmatprep.subr.mxu0 0.0
        %856 = vmatpush1.xpose.msra.mxu0 %v825
        %857 = vmatprep.subr.mxu0 0.0
        %858 = vmatpush1.xpose.msra.mxu0 %v822
        %859 = vmatprep.subr.mxu0 0.0
        %860 = vmatpush2.xpose.msra.mxu0 0.0
        %861 = vmatprep.subr.mxu0 0.0
        %862 = vmatpush2.xpose.msra.mxu0 0.0
        %863 = vmatprep.subr.mxu0 0.0
        %864 = vmatpush2.xpose.msra.mxu0 0.0
        %865 = vmatprep.subr.mxu0 0.0
        %866 = vmatpush2.xpose.msra.mxu0 0.0
        %867 = vmatprep.subr.mxu0 0.0
        %868 = vmatpush2.xpose.msra.mxu0 0.0
        %869 = vmatprep.subr.mxu0 0.0
        %870 = vmatpush2.xpose.msra.mxu0 0.0
        %871 = vmatprep.subr.mxu0 0.0
        %872 = vmatpush2.xpose.msra.mxu0 0.0
        %873 = vmatprep.subr.mxu0 0.0
        %874 = vmatpush2.xpose.msra.mxu0 0.0
        %875 = vmatprep.subr.mxu0 0.0
        %876 = vmatpush2.xpose.msra.mxu0 0.0
        %877 = vmatprep.subr.mxu0 0.0
        %878 = vmatpush2.xpose.msra.mxu0 0.0
        %879 = vmatprep.subr.mxu0 0.0
        %880 = vmatpush2.xpose.msra.mxu0 0.0
        %881 = vmatprep.subr.mxu0 0.0
        %882 = vmatpush2.xpose.msra.mxu0 0.0
        %883 = vmatprep.subr.mxu0 0.0
        %884 = vmatpush2.xpose.msra.mxu0 0.0
        %885 = vmatprep.subr.mxu0 0.0
        %886 = vmatpush2.xpose.msra.mxu0 0.0
        %887 = vmatprep.subr.mxu0 0.0
        %888 = vmatpush2.xpose.msra.mxu0 0.0
        %889 = vmatprep.subr.mxu0 0.0
        %890 = vmatpush2.xpose.msra.mxu0 0.0
        %891 = vmatprep.mubr.f32.mxu0 0.0
        %892 = vmatmul.mubr.f32.gmra.mxu0 %v816
        %v893 = vpop.f32.mrf.mxu0
        %v894 = vadd.f32 0.0, %v893
        %v895 = vpop.f32.mrf.mxu0
        %896 = vmatprep.mubr.f32.mxu0 0.0
        %897 = vmatmul.mubr.f32.gmra.mxu0 %v819
        %v898 = vpop.f32.mrf.mxu0
        %v899 = vadd.f32 0.0, %v898
        %v900 = vpop.f32.mrf.mxu0
        %901 = vdwg.mxu0
        %v902 = vmul.f32 %v894, 0.17677669
        %v903 = vmul.f32 %v899, 0.17677669
        %vm904 = vcmask 130048
        %v905 = vsel %vm904, %v902, -inf
        %906 = vmax.xlane.f32.xlu0 %v905
        %v907 = vpop.xlane.xlu0 %906
        %v908 = vsel %vm904, %v903, -inf
        %909 = vmax.xlane.f32.xlu0 %v908
        %v910 = vpop.xlane.xlu0 %909
        %v911 = vsub.f32 %v902, %v907
        %v912 = vsub.f32 %v903, %v910
        %v913 = vmul.f32 %v911, 1.442695
        %v914 = vpow.pop %v913
        %v915 = vmul.f32 %v912, 1.442695
        %v916 = vpow.pop %v915
        %v917 = vsel %vm904, %v914, 0.0
        %918 = vadd.xlane.f32.xlu0 %v917
        %v919 = vpop.xlane.xlu0 %918
        %v920 = vsel %vm904, %v916, 0.0
        %921 = vadd.xlane.f32.xlu0 %v920
        %v922 = vpop.xlane.xlu0 %921
        %v923 = vrcp.pop %v919
        %v924 = vrcp.pop %v922
        %v925 = vmul.f32 %v914, %v923
        %v926 = vmul.f32 %v916, %v924
        %v928 = vsel %vm904, %v925, 0
        %v931 = vsel %vm904, %v926, 0
        %933 = vmatprep.subr.mxu0 0.0
        %934 = vmatpush1.msra.mxu0 0.0
        %935 = vmatprep.subr.mxu0 0.0
        %936 = vmatpush1.msra.mxu0 0.0
        %937 = vmatprep.subr.mxu0 0.0
        %938 = vmatpush1.msra.mxu0 0.0
        %939 = vmatprep.subr.mxu0 0.0
        %940 = vmatpush1.msra.mxu0 0.0
        %941 = vmatprep.subr.mxu0 0.0
        %942 = vmatpush1.msra.mxu0 0.0
        %943 = vmatprep.subr.mxu0 0.0
        %944 = vmatpush1.msra.mxu0 0.0
        %945 = vmatprep.subr.mxu0 0.0
        %946 = vmatpush1.msra.mxu0 0.0
        %947 = vmatprep.subr.mxu0 0.0
        %948 = vmatpush1.msra.mxu0 0.0
        %949 = vmatprep.subr.mxu0 0.0
        %950 = vmatpush1.msra.mxu0 0.0
        %951 = vmatprep.subr.mxu0 0.0
        %952 = vmatpush1.msra.mxu0 0.0
        %953 = vmatprep.subr.mxu0 0.0
        %954 = vmatpush1.msra.mxu0 0.0
        %955 = vmatprep.subr.mxu0 0.0
        %956 = vmatpush1.msra.mxu0 0.0
        %957 = vmatprep.subr.mxu0 0.0
        %958 = vmatpush1.msra.mxu0 0.0
        %959 = vmatprep.subr.mxu0 0.0
        %960 = vmatpush1.msra.mxu0 0.0
        %961 = vmatprep.subr.mxu0 0.0
        %962 = vmatpush1.msra.mxu0 %v811
        %963 = vmatprep.subr.mxu0 0.0
        %964 = vmatpush1.msra.mxu0 %v808
        %965 = vmatprep.subr.mxu0 0.0
        %966 = vmatpush2.msra.mxu0 0.0
        %967 = vmatprep.subr.mxu0 0.0
        %968 = vmatpush2.msra.mxu0 0.0
        %969 = vmatprep.subr.mxu0 0.0
        %970 = vmatpush2.msra.mxu0 0.0
        %971 = vmatprep.subr.mxu0 0.0
        %972 = vmatpush2.msra.mxu0 0.0
        %973 = vmatprep.subr.mxu0 0.0
        %974 = vmatpush2.msra.mxu0 0.0
        %975 = vmatprep.subr.mxu0 0.0
        %976 = vmatpush2.msra.mxu0 0.0
        %977 = vmatprep.subr.mxu0 0.0
        %978 = vmatpush2.msra.mxu0 0.0
        %979 = vmatprep.subr.mxu0 0.0
        %980 = vmatpush2.msra.mxu0 0.0
        %981 = vmatprep.subr.mxu0 0.0
        %982 = vmatpush2.msra.mxu0 0.0
        %983 = vmatprep.subr.mxu0 0.0
        %984 = vmatpush2.msra.mxu0 0.0
        %985 = vmatprep.subr.mxu0 0.0
        %986 = vmatpush2.msra.mxu0 0.0
        %987 = vmatprep.subr.mxu0 0.0
        %988 = vmatpush2.msra.mxu0 0.0
        %989 = vmatprep.subr.mxu0 0.0
        %990 = vmatpush2.msra.mxu0 0.0
        %991 = vmatprep.subr.mxu0 0.0
        %992 = vmatpush2.msra.mxu0 0.0
        %993 = vmatprep.subr.mxu0 0.0
        %994 = vmatpush2.msra.mxu0 0.0
        %995 = vmatprep.subr.mxu0 0.0
        %996 = vmatpush2.msra.mxu0 0.0
        %997 = vmatprep.mubr.f32.mxu0 0.0
        %998 = vmatmul.mubr.f32.gmra.mxu0 %v928
        %v999 = vpop.f32.mrf.mxu0
        %v1000 = vadd.f32 0.0, %v999
        %v1001 = vpop.f32.mrf.mxu0
        %1002 = vmatprep.mubr.f32.mxu0 0.0
        %1003 = vmatmul.mubr.f32.gmra.mxu0 %v931
        %v1004 = vpop.f32.mrf.mxu0
        %v1005 = vadd.f32 0.0, %v1004
        %v1006 = vpop.f32.mrf.mxu0
        %1007 = vdwg.mxu0
        %v1008 = vpack.c.bf16 %v1005, %v1000
        %v1009 = vld [vmem:[#allocation2] sm:$0xf]
        %v1010 = vld [vmem:[#allocation2 + $0x4] sm:$0xf]
        %v1011 = vld [vmem:[#allocation2 + $0x8] sm:$0xf]
        %v1012 = vld [vmem:[#allocation2 + $0xc] sm:$0xf]
        %1013 = vrot.lane.b32.xlu0 %v765, 96
        %v1014 = vpop.permute.xlu0 %1013
        %1015 = vrot.lane.b32.xlu0 %v769, 96
        %v1016 = vpop.permute.xlu0 %1015
        %1017 = vrot.lane.b32.xlu0 %v767, 96
        %v1018 = vpop.permute.xlu0 %1017
        %1019 = vrot.lane.b32.xlu0 %v771, 96
        %v1020 = vpop.permute.xlu0 %1019
        %v1021 = vsel %vm814, %v1014, 0
        %v1023 = vsel %vm814, %v1016, 0
        %v1025 = vsel %vm814, %v1018, 0
        %v1027 = vsel %vm814, %v1020, 0
        %1029 = vmatprep.subr.mxu0 0.0
        %1030 = vmatpush1.xpose.msra.mxu0 0.0
        %1031 = vmatprep.subr.mxu0 0.0
        %1032 = vmatpush1.xpose.msra.mxu0 0.0
        %1033 = vmatprep.subr.mxu0 0.0
        %1034 = vmatpush1.xpose.msra.mxu0 0.0
        %1035 = vmatprep.subr.mxu0 0.0
        %1036 = vmatpush1.xpose.msra.mxu0 0.0
        %1037 = vmatprep.subr.mxu0 0.0
        %1038 = vmatpush1.xpose.msra.mxu0 0.0
        %1039 = vmatprep.subr.mxu0 0.0
        %1040 = vmatpush1.xpose.msra.mxu0 0.0
        %1041 = vmatprep.subr.mxu0 0.0
        %1042 = vmatpush1.xpose.msra.mxu0 0.0
        %1043 = vmatprep.subr.mxu0 0.0
        %1044 = vmatpush1.xpose.msra.mxu0 0.0
        %1045 = vmatprep.subr.mxu0 0.0
        %1046 = vmatpush1.xpose.msra.mxu0 0.0
        %1047 = vmatprep.subr.mxu0 0.0
        %1048 = vmatpush1.xpose.msra.mxu0 0.0
        %1049 = vmatprep.subr.mxu0 0.0
        %1050 = vmatpush1.xpose.msra.mxu0 0.0
        %1051 = vmatprep.subr.mxu0 0.0
        %1052 = vmatpush1.xpose.msra.mxu0 0.0
        %1053 = vmatprep.subr.mxu0 0.0
        %1054 = vmatpush1.xpose.msra.mxu0 0.0
        %1055 = vmatprep.subr.mxu0 0.0
        %1056 = vmatpush1.xpose.msra.mxu0 0.0
        %1057 = vmatprep.subr.mxu0 0.0
        %1058 = vmatpush1.xpose.msra.mxu0 %v1027
        %1059 = vmatprep.subr.mxu0 0.0
        %1060 = vmatpush1.xpose.msra.mxu0 %v1025
        %1061 = vmatprep.subr.mxu0 0.0
        %1062 = vmatpush2.xpose.msra.mxu0 0.0
        %1063 = vmatprep.subr.mxu0 0.0
        %1064 = vmatpush2.xpose.msra.mxu0 0.0
        %1065 = vmatprep.subr.mxu0 0.0
        %1066 = vmatpush2.xpose.msra.mxu0 0.0
        %1067 = vmatprep.subr.mxu0 0.0
        %1068 = vmatpush2.xpose.msra.mxu0 0.0
        %1069 = vmatprep.subr.mxu0 0.0
        %1070 = vmatpush2.xpose.msra.mxu0 0.0
        %1071 = vmatprep.subr.mxu0 0.0
        %1072 = vmatpush2.xpose.msra.mxu0 0.0
        %1073 = vmatprep.subr.mxu0 0.0
        %1074 = vmatpush2.xpose.msra.mxu0 0.0
        %1075 = vmatprep.subr.mxu0 0.0
        %1076 = vmatpush2.xpose.msra.mxu0 0.0
        %1077 = vmatprep.subr.mxu0 0.0
        %1078 = vmatpush2.xpose.msra.mxu0 0.0
        %1079 = vmatprep.subr.mxu0 0.0
        %1080 = vmatpush2.xpose.msra.mxu0 0.0
        %1081 = vmatprep.subr.mxu0 0.0
        %1082 = vmatpush2.xpose.msra.mxu0 0.0
        %1083 = vmatprep.subr.mxu0 0.0
        %1084 = vmatpush2.xpose.msra.mxu0 0.0
        %1085 = vmatprep.subr.mxu0 0.0
        %1086 = vmatpush2.xpose.msra.mxu0 0.0
        %1087 = vmatprep.subr.mxu0 0.0
        %1088 = vmatpush2.xpose.msra.mxu0 0.0
        %1089 = vmatprep.subr.mxu0 0.0
        %1090 = vmatpush2.xpose.msra.mxu0 0.0
        %1091 = vmatprep.subr.mxu0 0.0
        %1092 = vmatpush2.xpose.msra.mxu0 0.0
        %1093 = vmatprep.mubr.f32.mxu0 0.0
        %1094 = vmatmul.mubr.f32.gmra.mxu0 %v1021
        %v1095 = vpop.f32.mrf.mxu0
        %v1096 = vadd.f32 0.0, %v1095
        %v1097 = vpop.f32.mrf.mxu0
        %1098 = vmatprep.mubr.f32.mxu0 0.0
        %1099 = vmatmul.mubr.f32.gmra.mxu0 %v1023
        %v1100 = vpop.f32.mrf.mxu0
        %v1101 = vadd.f32 0.0, %v1100
        %v1102 = vpop.f32.mrf.mxu0
        %1103 = vdwg.mxu0
        %v1104 = vmul.f32 %v1096, 0.17677669
        %v1105 = vmul.f32 %v1101, 0.17677669
        %v1106 = vsel %vm904, %v1104, -inf
        %1107 = vmax.xlane.f32.xlu0 %v1106
        %v1108 = vpop.xlane.xlu0 %1107
        %v1109 = vsel %vm904, %v1105, -inf
        %1110 = vmax.xlane.f32.xlu0 %v1109
        %v1111 = vpop.xlane.xlu0 %1110
        %v1112 = vsub.f32 %v1104, %v1108
        %v1113 = vsub.f32 %v1105, %v1111
        %v1114 = vmul.f32 %v1112, 1.442695
        %v1115 = vpow.pop %v1114
        %v1116 = vmul.f32 %v1113, 1.442695
        %v1117 = vpow.pop %v1116
        %v1118 = vsel %vm904, %v1115, 0.0
        %1119 = vadd.xlane.f32.xlu0 %v1118
        %v1120 = vpop.xlane.xlu0 %1119
        %v1121 = vsel %vm904, %v1117, 0.0
        %1122 = vadd.xlane.f32.xlu0 %v1121
        %v1123 = vpop.xlane.xlu0 %1122
        %v1124 = vrcp.pop %v1120
        %v1125 = vrcp.pop %v1123
        %v1126 = vmul.f32 %v1115, %v1124
        %v1127 = vmul.f32 %v1117, %v1125
        %1130 = vrot.lane.b32.xlu0 %v808, 96
        %v1131 = vpop.permute.xlu0 %1130
        %1132 = vrot.lane.b32.xlu0 %v811, 96
        %v1133 = vpop.permute.xlu0 %1132
        %v1137 = vsel %vm904, %v1126, 0
        %v1140 = vsel %vm904, %v1127, 0
        %1142 = vmatprep.subr.mxu0 0.0
        %1143 = vmatpush1.msra.mxu0 0.0
        %1144 = vmatprep.subr.mxu0 0.0
        %1145 = vmatpush1.msra.mxu0 0.0
        %1146 = vmatprep.subr.mxu0 0.0
        %1147 = vmatpush1.msra.mxu0 0.0
        %1148 = vmatprep.subr.mxu0 0.0
        %1149 = vmatpush1.msra.mxu0 0.0
        %1150 = vmatprep.subr.mxu0 0.0
        %1151 = vmatpush1.msra.mxu0 0.0
        %1152 = vmatprep.subr.mxu0 0.0
        %1153 = vmatpush1.msra.mxu0 0.0
        %1154 = vmatprep.subr.mxu0 0.0
        %1155 = vmatpush1.msra.mxu0 0.0
        %1156 = vmatprep.subr.mxu0 0.0
        %1157 = vmatpush1.msra.mxu0 0.0
        %1158 = vmatprep.subr.mxu0 0.0
        %1159 = vmatpush1.msra.mxu0 0.0
        %1160 = vmatprep.subr.mxu0 0.0
        %1161 = vmatpush1.msra.mxu0 0.0
        %1162 = vmatprep.subr.mxu0 0.0
        %1163 = vmatpush1.msra.mxu0 0.0
        %1164 = vmatprep.subr.mxu0 0.0
        %1165 = vmatpush1.msra.mxu0 0.0
        %1166 = vmatprep.subr.mxu0 0.0
        %1167 = vmatpush1.msra.mxu0 0.0
        %1168 = vmatprep.subr.mxu0 0.0
        %1169 = vmatpush1.msra.mxu0 0.0
        %1170 = vmatprep.subr.mxu0 0.0
        %1171 = vmatpush1.msra.mxu0 %v1133
        %1172 = vmatprep.subr.mxu0 0.0
        %1173 = vmatpush1.msra.mxu0 %v1131
        %1174 = vmatprep.subr.mxu0 0.0
        %1175 = vmatpush2.msra.mxu0 0.0
        %1176 = vmatprep.subr.mxu0 0.0
        %1177 = vmatpush2.msra.mxu0 0.0
        %1178 = vmatprep.subr.mxu0 0.0
        %1179 = vmatpush2.msra.mxu0 0.0
        %1180 = vmatprep.subr.mxu0 0.0
        %1181 = vmatpush2.msra.mxu0 0.0
        %1182 = vmatprep.subr.mxu0 0.0
        %1183 = vmatpush2.msra.mxu0 0.0
        %1184 = vmatprep.subr.mxu0 0.0
        %1185 = vmatpush2.msra.mxu0 0.0
        %1186 = vmatprep.subr.mxu0 0.0
        %1187 = vmatpush2.msra.mxu0 0.0
        %1188 = vmatprep.subr.mxu0 0.0
        %1189 = vmatpush2.msra.mxu0 0.0
        %1190 = vmatprep.subr.mxu0 0.0
        %1191 = vmatpush2.msra.mxu0 0.0
        %1192 = vmatprep.subr.mxu0 0.0
        %1193 = vmatpush2.msra.mxu0 0.0
        %1194 = vmatprep.subr.mxu0 0.0
        %1195 = vmatpush2.msra.mxu0 0.0
        %1196 = vmatprep.subr.mxu0 0.0
        %1197 = vmatpush2.msra.mxu0 0.0
        %1198 = vmatprep.subr.mxu0 0.0
        %1199 = vmatpush2.msra.mxu0 0.0
        %1200 = vmatprep.subr.mxu0 0.0
        %1201 = vmatpush2.msra.mxu0 0.0
        %1202 = vmatprep.subr.mxu0 0.0
        %1203 = vmatpush2.msra.mxu0 0.0
        %1204 = vmatprep.subr.mxu0 0.0
        %1205 = vmatpush2.msra.mxu0 0.0
        %1206 = vmatprep.mubr.f32.mxu0 0.0
        %1207 = vmatmul.mubr.f32.gmra.mxu0 %v1137
        %v1208 = vpop.f32.mrf.mxu0
        %v1209 = vadd.f32 0.0, %v1208
        %v1210 = vpop.f32.mrf.mxu0
        %1211 = vmatprep.mubr.f32.mxu0 0.0
        %1212 = vmatmul.mubr.f32.gmra.mxu0 %v1140
        %v1213 = vpop.f32.mrf.mxu0
        %v1214 = vadd.f32 0.0, %v1213
        %v1215 = vpop.f32.mrf.mxu0
        %1216 = vdwg.mxu0
        %v1217 = vpack.c.bf16 %v1214, %v1209
        %s1218 = scalar_lea.vmem [#allocation2], 16
        %v1219 = vld [vmem:[%s1218] sm:$0xf]
        %v1220 = vld [vmem:[%s1218 + $0x4] sm:$0xf]
        %v1221 = vld [vmem:[%s1218 + $0x8] sm:$0xf]
        %v1222 = vld [vmem:[%s1218 + $0xc] sm:$0xf]
        %v1227 = vunpack.c.l.b16 %v1219
        %v1228 = vunpack.c.l.b16 %v1220
        %v1229 = vunpack.c.l.b16 %v1221
        %v1230 = vunpack.c.l.b16 %v1222
        %v1231 = vpack.c.b16 %v1228, %v1227
        %v1232 = vpack.c.b16 %v1230, %v1229
        %v1236 = vsel %vm814, %v1217, 0
        %1238 = vmatprep.subr.bf16.mxu0 0
        %1239 = vmatpush1.bf16.msra.mxu0 0
        %1240 = vmatprep.subr.bf16.mxu0 0
        %1241 = vmatpush1.bf16.msra.mxu0 0
        %1242 = vmatprep.subr.bf16.mxu0 0
        %1243 = vmatpush1.bf16.msra.mxu0 0
        %1244 = vmatprep.subr.bf16.mxu0 0
        %1245 = vmatpush1.bf16.msra.mxu0 0
        %1246 = vmatprep.subr.bf16.mxu0 0
        %1247 = vmatpush1.bf16.msra.mxu0 0
        %1248 = vmatprep.subr.bf16.mxu0 0
        %1249 = vmatpush1.bf16.msra.mxu0 0
        %1250 = vmatprep.subr.bf16.mxu0 0
        %1251 = vmatpush1.bf16.msra.mxu0 %v1232
        %1252 = vmatprep.subr.bf16.mxu0 0
        %1253 = vmatpush1.bf16.msra.mxu0 %v1231
        %1254 = vmatprep.subr.bf16.mxu0 0
        %1255 = vmatpush2.bf16.msra.mxu0 0
        %1256 = vmatprep.subr.bf16.mxu0 0
        %1257 = vmatpush2.bf16.msra.mxu0 0
        %1258 = vmatprep.subr.bf16.mxu0 0
        %1259 = vmatpush2.bf16.msra.mxu0 0
        %1260 = vmatprep.subr.bf16.mxu0 0
        %1261 = vmatpush2.bf16.msra.mxu0 0
        %1262 = vmatprep.subr.bf16.mxu0 0
        %1263 = vmatpush2.bf16.msra.mxu0 0
        %1264 = vmatprep.subr.bf16.mxu0 0
        %1265 = vmatpush2.bf16.msra.mxu0 0
        %1266 = vmatprep.subr.bf16.mxu0 0
        %1267 = vmatpush2.bf16.msra.mxu0 0
        %1268 = vmatprep.subr.bf16.mxu0 0
        %1269 = vmatpush2.bf16.msra.mxu0 0
        %1270 = vmatprep.mubr.bf16.mxu0 0
        %1271 = vmatmul.mubr.bf16.gmra.mxu0 %v1236
        %v1272 = vpop.f32.mrf.mxu0
        %v1273 = vadd.f32 0.0, %v1272
        %v1274 = vpop.f32.mrf.mxu0
        %v1275 = vpop.f32.mrf.mxu0
        %v1276 = vadd.f32 0.0, %v1275
        %v1277 = vpop.f32.mrf.mxu0
        %1278 = vdwg.mxu0
        %v1283 = vunpack.c.l.b16 %v1009
        %v1284 = vunpack.c.l.b16 %v1010
        %v1285 = vunpack.c.l.b16 %v1011
        %v1286 = vunpack.c.l.b16 %v1012
        %v1287 = vpack.c.b16 %v1284, %v1283
        %v1288 = vpack.c.b16 %v1286, %v1285
        %v1292 = vsel %vm814, %v1008, 0
        %1294 = vmatprep.subr.bf16.mxu0 0
        %1295 = vmatpush1.bf16.msra.mxu0 0
        %1296 = vmatprep.subr.bf16.mxu0 0
        %1297 = vmatpush1.bf16.msra.mxu0 0
        %1298 = vmatprep.subr.bf16.mxu0 0
        %1299 = vmatpush1.bf16.msra.mxu0 0
        %1300 = vmatprep.subr.bf16.mxu0 0
        %1301 = vmatpush1.bf16.msra.mxu0 0
        %1302 = vmatprep.subr.bf16.mxu0 0
        %1303 = vmatpush1.bf16.msra.mxu0 0
        %1304 = vmatprep.subr.bf16.mxu0 0
        %1305 = vmatpush1.bf16.msra.mxu0 0
        %1306 = vmatprep.subr.bf16.mxu0 0
        %1307 = vmatpush1.bf16.msra.mxu0 %v1288
        %1308 = vmatprep.subr.bf16.mxu0 0
        %1309 = vmatpush1.bf16.msra.mxu0 %v1287
        %1310 = vmatprep.subr.bf16.mxu0 0
        %1311 = vmatpush2.bf16.msra.mxu0 0
        %1312 = vmatprep.subr.bf16.mxu0 0
        %1313 = vmatpush2.bf16.msra.mxu0 0
        %1314 = vmatprep.subr.bf16.mxu0 0
        %1315 = vmatpush2.bf16.msra.mxu0 0
        %1316 = vmatprep.subr.bf16.mxu0 0
        %1317 = vmatpush2.bf16.msra.mxu0 0
        %1318 = vmatprep.subr.bf16.mxu0 0
        %1319 = vmatpush2.bf16.msra.mxu0 0
        %1320 = vmatprep.subr.bf16.mxu0 0
        %1321 = vmatpush2.bf16.msra.mxu0 0
        %1322 = vmatprep.subr.bf16.mxu0 0
        %1323 = vmatpush2.bf16.msra.mxu0 0
        %1324 = vmatprep.subr.bf16.mxu0 0
        %1325 = vmatpush2.bf16.msra.mxu0 0
        %1326 = vmatprep.mubr.bf16.mxu0 0
        %1327 = vmatmul.mubr.bf16.gmra.mxu0 %v1292
        %v1328 = vpop.f32.mrf.mxu0
        %v1329 = vadd.f32 %v1273, %v1328
        %v1330 = vpop.f32.mrf.mxu0
        %v1331 = vpop.f32.mrf.mxu0
        %v1332 = vadd.f32 %v1276, %v1331
        %v1333 = vpop.f32.mrf.mxu0
        %1334 = vdwg.mxu0
        %1335 = vrot.lane.b32.xlu0 %v765, 64
        %v1336 = vpop.permute.xlu0 %1335
        %1337 = vrot.lane.b32.xlu0 %v769, 64
        %v1338 = vpop.permute.xlu0 %1337
        %1339 = vrot.lane.b32.xlu0 %v767, 64
        %v1340 = vpop.permute.xlu0 %1339
        %1341 = vrot.lane.b32.xlu0 %v771, 64
        %v1342 = vpop.permute.xlu0 %1341
        %v1343 = vsel %vm814, %v1336, 0
        %v1345 = vsel %vm814, %v1338, 0
        %v1347 = vsel %vm814, %v1340, 0
        %v1349 = vsel %vm814, %v1342, 0
        %1351 = vmatprep.subr.mxu0 0.0
        %1352 = vmatpush1.xpose.msra.mxu0 0.0
        %1353 = vmatprep.subr.mxu0 0.0
        %1354 = vmatpush1.xpose.msra.mxu0 0.0
        %1355 = vmatprep.subr.mxu0 0.0
        %1356 = vmatpush1.xpose.msra.mxu0 0.0
        %1357 = vmatprep.subr.mxu0 0.0
        %1358 = vmatpush1.xpose.msra.mxu0 0.0
        %1359 = vmatprep.subr.mxu0 0.0
        %1360 = vmatpush1.xpose.msra.mxu0 0.0
        %1361 = vmatprep.subr.mxu0 0.0
        %1362 = vmatpush1.xpose.msra.mxu0 0.0
        %1363 = vmatprep.subr.mxu0 0.0
        %1364 = vmatpush1.xpose.msra.mxu0 0.0
        %1365 = vmatprep.subr.mxu0 0.0
        %1366 = vmatpush1.xpose.msra.mxu0 0.0
        %1367 = vmatprep.subr.mxu0 0.0
        %1368 = vmatpush1.xpose.msra.mxu0 0.0
        %1369 = vmatprep.subr.mxu0 0.0
        %1370 = vmatpush1.xpose.msra.mxu0 0.0
        %1371 = vmatprep.subr.mxu0 0.0
        %1372 = vmatpush1.xpose.msra.mxu0 0.0
        %1373 = vmatprep.subr.mxu0 0.0
        %1374 = vmatpush1.xpose.msra.mxu0 0.0
        %1375 = vmatprep.subr.mxu0 0.0
        %1376 = vmatpush1.xpose.msra.mxu0 0.0
        %1377 = vmatprep.subr.mxu0 0.0
        %1378 = vmatpush1.xpose.msra.mxu0 0.0
        %1379 = vmatprep.subr.mxu0 0.0
        %1380 = vmatpush1.xpose.msra.mxu0 %v1349
        %1381 = vmatprep.subr.mxu0 0.0
        %1382 = vmatpush1.xpose.msra.mxu0 %v1347
        %1383 = vmatprep.subr.mxu0 0.0
        %1384 = vmatpush2.xpose.msra.mxu0 0.0
        %1385 = vmatprep.subr.mxu0 0.0
        %1386 = vmatpush2.xpose.msra.mxu0 0.0
        %1387 = vmatprep.subr.mxu0 0.0
        %1388 = vmatpush2.xpose.msra.mxu0 0.0
        %1389 = vmatprep.subr.mxu0 0.0
        %1390 = vmatpush2.xpose.msra.mxu0 0.0
        %1391 = vmatprep.subr.mxu0 0.0
        %1392 = vmatpush2.xpose.msra.mxu0 0.0
        %1393 = vmatprep.subr.mxu0 0.0
        %1394 = vmatpush2.xpose.msra.mxu0 0.0
        %1395 = vmatprep.subr.mxu0 0.0
        %1396 = vmatpush2.xpose.msra.mxu0 0.0
        %1397 = vmatprep.subr.mxu0 0.0
        %1398 = vmatpush2.xpose.msra.mxu0 0.0
        %1399 = vmatprep.subr.mxu0 0.0
        %1400 = vmatpush2.xpose.msra.mxu0 0.0
        %1401 = vmatprep.subr.mxu0 0.0
        %1402 = vmatpush2.xpose.msra.mxu0 0.0
        %1403 = vmatprep.subr.mxu0 0.0
        %1404 = vmatpush2.xpose.msra.mxu0 0.0
        %1405 = vmatprep.subr.mxu0 0.0
        %1406 = vmatpush2.xpose.msra.mxu0 0.0
        %1407 = vmatprep.subr.mxu0 0.0
        %1408 = vmatpush2.xpose.msra.mxu0 0.0
        %1409 = vmatprep.subr.mxu0 0.0
        %1410 = vmatpush2.xpose.msra.mxu0 0.0
        %1411 = vmatprep.subr.mxu0 0.0
        %1412 = vmatpush2.xpose.msra.mxu0 0.0
        %1413 = vmatprep.subr.mxu0 0.0
        %1414 = vmatpush2.xpose.msra.mxu0 0.0
        %1415 = vmatprep.mubr.f32.mxu0 0.0
        %1416 = vmatmul.mubr.f32.gmra.mxu0 %v1343
        %v1417 = vpop.f32.mrf.mxu0
        %v1418 = vadd.f32 0.0, %v1417
        %v1419 = vpop.f32.mrf.mxu0
        %1420 = vmatprep.mubr.f32.mxu0 0.0
        %1421 = vmatmul.mubr.f32.gmra.mxu0 %v1345
        %v1422 = vpop.f32.mrf.mxu0
        %v1423 = vadd.f32 0.0, %v1422
        %v1424 = vpop.f32.mrf.mxu0
        %1425 = vdwg.mxu0
        %v1426 = vmul.f32 %v1418, 0.17677669
        %v1427 = vmul.f32 %v1423, 0.17677669
        %v1428 = vsel %vm904, %v1426, -inf
        %1429 = vmax.xlane.f32.xlu0 %v1428
        %v1430 = vpop.xlane.xlu0 %1429
        %v1431 = vsel %vm904, %v1427, -inf
        %1432 = vmax.xlane.f32.xlu0 %v1431
        %v1433 = vpop.xlane.xlu0 %1432
        %v1434 = vsub.f32 %v1426, %v1430
        %v1435 = vsub.f32 %v1427, %v1433
        %v1436 = vmul.f32 %v1434, 1.442695
        %v1437 = vpow.pop %v1436
        %v1438 = vmul.f32 %v1435, 1.442695
        %v1439 = vpow.pop %v1438
        %v1440 = vsel %vm904, %v1437, 0.0
        %1441 = vadd.xlane.f32.xlu0 %v1440
        %v1442 = vpop.xlane.xlu0 %1441
        %v1443 = vsel %vm904, %v1439, 0.0
        %1444 = vadd.xlane.f32.xlu0 %v1443
        %v1445 = vpop.xlane.xlu0 %1444
        %v1446 = vrcp.pop %v1442
        %v1447 = vrcp.pop %v1445
        %v1448 = vmul.f32 %v1437, %v1446
        %v1449 = vmul.f32 %v1439, %v1447
        %1450 = vrot.lane.b32.xlu0 %v808, 64
        %v1451 = vpop.permute.xlu0 %1450
        %1452 = vrot.lane.b32.xlu0 %v811, 64
        %v1453 = vpop.permute.xlu0 %1452
        %v1457 = vsel %vm904, %v1448, 0
        %v1460 = vsel %vm904, %v1449, 0
        %1462 = vmatprep.subr.mxu0 0.0
        %1463 = vmatpush1.msra.mxu0 0.0
        %1464 = vmatprep.subr.mxu0 0.0
        %1465 = vmatpush1.msra.mxu0 0.0
        %1466 = vmatprep.subr.mxu0 0.0
        %1467 = vmatpush1.msra.mxu0 0.0
        %1468 = vmatprep.subr.mxu0 0.0
        %1469 = vmatpush1.msra.mxu0 0.0
        %1470 = vmatprep.subr.mxu0 0.0
        %1471 = vmatpush1.msra.mxu0 0.0
        %1472 = vmatprep.subr.mxu0 0.0
        %1473 = vmatpush1.msra.mxu0 0.0
        %1474 = vmatprep.subr.mxu0 0.0
        %1475 = vmatpush1.msra.mxu0 0.0
        %1476 = vmatprep.subr.mxu0 0.0
        %1477 = vmatpush1.msra.mxu0 0.0
        %1478 = vmatprep.subr.mxu0 0.0
        %1479 = vmatpush1.msra.mxu0 0.0
        %1480 = vmatprep.subr.mxu0 0.0
        %1481 = vmatpush1.msra.mxu0 0.0
        %1482 = vmatprep.subr.mxu0 0.0
        %1483 = vmatpush1.msra.mxu0 0.0
        %1484 = vmatprep.subr.mxu0 0.0
        %1485 = vmatpush1.msra.mxu0 0.0
        %1486 = vmatprep.subr.mxu0 0.0
        %1487 = vmatpush1.msra.mxu0 0.0
        %1488 = vmatprep.subr.mxu0 0.0
        %1489 = vmatpush1.msra.mxu0 0.0
        %1490 = vmatprep.subr.mxu0 0.0
        %1491 = vmatpush1.msra.mxu0 %v1453
        %1492 = vmatprep.subr.mxu0 0.0
        %1493 = vmatpush1.msra.mxu0 %v1451
        %1494 = vmatprep.subr.mxu0 0.0
        %1495 = vmatpush2.msra.mxu0 0.0
        %1496 = vmatprep.subr.mxu0 0.0
        %1497 = vmatpush2.msra.mxu0 0.0
        %1498 = vmatprep.subr.mxu0 0.0
        %1499 = vmatpush2.msra.mxu0 0.0
        %1500 = vmatprep.subr.mxu0 0.0
        %1501 = vmatpush2.msra.mxu0 0.0
        %1502 = vmatprep.subr.mxu0 0.0
        %1503 = vmatpush2.msra.mxu0 0.0
        %1504 = vmatprep.subr.mxu0 0.0
        %1505 = vmatpush2.msra.mxu0 0.0
        %1506 = vmatprep.subr.mxu0 0.0
        %1507 = vmatpush2.msra.mxu0 0.0
        %1508 = vmatprep.subr.mxu0 0.0
        %1509 = vmatpush2.msra.mxu0 0.0
        %1510 = vmatprep.subr.mxu0 0.0
        %1511 = vmatpush2.msra.mxu0 0.0
        %1512 = vmatprep.subr.mxu0 0.0
        %1513 = vmatpush2.msra.mxu0 0.0
        %1514 = vmatprep.subr.mxu0 0.0
        %1515 = vmatpush2.msra.mxu0 0.0
        %1516 = vmatprep.subr.mxu0 0.0
        %1517 = vmatpush2.msra.mxu0 0.0
        %1518 = vmatprep.subr.mxu0 0.0
        %1519 = vmatpush2.msra.mxu0 0.0
        %1520 = vmatprep.subr.mxu0 0.0
        %1521 = vmatpush2.msra.mxu0 0.0
        %1522 = vmatprep.subr.mxu0 0.0
        %1523 = vmatpush2.msra.mxu0 0.0
        %1524 = vmatprep.subr.mxu0 0.0
        %1525 = vmatpush2.msra.mxu0 0.0
        %1526 = vmatprep.mubr.f32.mxu0 0.0
        %1527 = vmatmul.mubr.f32.gmra.mxu0 %v1457
        %v1528 = vpop.f32.mrf.mxu0
        %v1529 = vadd.f32 0.0, %v1528
        %v1530 = vpop.f32.mrf.mxu0
        %1531 = vmatprep.mubr.f32.mxu0 0.0
        %1532 = vmatmul.mubr.f32.gmra.mxu0 %v1460
        %v1533 = vpop.f32.mrf.mxu0
        %v1534 = vadd.f32 0.0, %v1533
        %v1535 = vpop.f32.mrf.mxu0
        %1536 = vdwg.mxu0
        %v1537 = vpack.c.bf16 %v1534, %v1529
        %s1538 = scalar_lea.vmem [#allocation2], 32
        %v1539 = vld [vmem:[%s1538] sm:$0xf]
        %v1540 = vld [vmem:[%s1538 + $0x4] sm:$0xf]
        %v1541 = vld [vmem:[%s1538 + $0x8] sm:$0xf]
        %v1542 = vld [vmem:[%s1538 + $0xc] sm:$0xf]
        %v1547 = vunpack.c.l.b16 %v1539
        %v1548 = vunpack.c.l.b16 %v1540
        %v1549 = vunpack.c.l.b16 %v1541
        %v1550 = vunpack.c.l.b16 %v1542
        %v1551 = vpack.c.b16 %v1548, %v1547
        %v1552 = vpack.c.b16 %v1550, %v1549
        %v1556 = vsel %vm814, %v1537, 0
        %1558 = vmatprep.subr.bf16.mxu0 0
        %1559 = vmatpush1.bf16.msra.mxu0 0
        %1560 = vmatprep.subr.bf16.mxu0 0
        %1561 = vmatpush1.bf16.msra.mxu0 0
        %1562 = vmatprep.subr.bf16.mxu0 0
        %1563 = vmatpush1.bf16.msra.mxu0 0
        %1564 = vmatprep.subr.bf16.mxu0 0
        %1565 = vmatpush1.bf16.msra.mxu0 0
        %1566 = vmatprep.subr.bf16.mxu0 0
        %1567 = vmatpush1.bf16.msra.mxu0 0
        %1568 = vmatprep.subr.bf16.mxu0 0
        %1569 = vmatpush1.bf16.msra.mxu0 0
        %1570 = vmatprep.subr.bf16.mxu0 0
        %1571 = vmatpush1.bf16.msra.mxu0 %v1552
        %1572 = vmatprep.subr.bf16.mxu0 0
        %1573 = vmatpush1.bf16.msra.mxu0 %v1551
        %1574 = vmatprep.subr.bf16.mxu0 0
        %1575 = vmatpush2.bf16.msra.mxu0 0
        %1576 = vmatprep.subr.bf16.mxu0 0
        %1577 = vmatpush2.bf16.msra.mxu0 0
        %1578 = vmatprep.subr.bf16.mxu0 0
        %1579 = vmatpush2.bf16.msra.mxu0 0
        %1580 = vmatprep.subr.bf16.mxu0 0
        %1581 = vmatpush2.bf16.msra.mxu0 0
        %1582 = vmatprep.subr.bf16.mxu0 0
        %1583 = vmatpush2.bf16.msra.mxu0 0
        %1584 = vmatprep.subr.bf16.mxu0 0
        %1585 = vmatpush2.bf16.msra.mxu0 0
        %1586 = vmatprep.subr.bf16.mxu0 0
        %1587 = vmatpush2.bf16.msra.mxu0 0
        %1588 = vmatprep.subr.bf16.mxu0 0
        %1589 = vmatpush2.bf16.msra.mxu0 0
        %1590 = vmatprep.mubr.bf16.mxu0 0
        %1591 = vmatmul.mubr.bf16.gmra.mxu0 %v1556
        %v1592 = vpop.f32.mrf.mxu0
        %v1593 = vadd.f32 0.0, %v1592
        %v1594 = vpop.f32.mrf.mxu0
        %v1595 = vpop.f32.mrf.mxu0
        %v1596 = vadd.f32 0.0, %v1595
        %v1597 = vpop.f32.mrf.mxu0
        %1598 = vdwg.mxu0
        %v1599 = vadd.f32 %v1329, %v1593
        %v1600 = vadd.f32 %v1332, %v1596
        %1601 = vrot.lane.b32.xlu0 %v765, 32
        %v1602 = vpop.permute.xlu0 %1601
        %1603 = vrot.lane.b32.xlu0 %v769, 32
        %v1604 = vpop.permute.xlu0 %1603
        %1605 = vrot.lane.b32.xlu0 %v767, 32
        %v1606 = vpop.permute.xlu0 %1605
        %1607 = vrot.lane.b32.xlu0 %v771, 32
        %v1608 = vpop.permute.xlu0 %1607
        %v1609 = vsel %vm814, %v1602, 0
        %v1611 = vsel %vm814, %v1604, 0
        %v1613 = vsel %vm814, %v1606, 0
        %v1615 = vsel %vm814, %v1608, 0
        %1617 = vmatprep.subr.mxu0 0.0
        %1618 = vmatpush1.xpose.msra.mxu0 0.0
        %1619 = vmatprep.subr.mxu0 0.0
        %1620 = vmatpush1.xpose.msra.mxu0 0.0
        %1621 = vmatprep.subr.mxu0 0.0
        %1622 = vmatpush1.xpose.msra.mxu0 0.0
        %1623 = vmatprep.subr.mxu0 0.0
        %1624 = vmatpush1.xpose.msra.mxu0 0.0
        %1625 = vmatprep.subr.mxu0 0.0
        %1626 = vmatpush1.xpose.msra.mxu0 0.0
        %1627 = vmatprep.subr.mxu0 0.0
        %1628 = vmatpush1.xpose.msra.mxu0 0.0
        %1629 = vmatprep.subr.mxu0 0.0
        %1630 = vmatpush1.xpose.msra.mxu0 0.0
        %1631 = vmatprep.subr.mxu0 0.0
        %1632 = vmatpush1.xpose.msra.mxu0 0.0
        %1633 = vmatprep.subr.mxu0 0.0
        %1634 = vmatpush1.xpose.msra.mxu0 0.0
        %1635 = vmatprep.subr.mxu0 0.0
        %1636 = vmatpush1.xpose.msra.mxu0 0.0
        %1637 = vmatprep.subr.mxu0 0.0
        %1638 = vmatpush1.xpose.msra.mxu0 0.0
        %1639 = vmatprep.subr.mxu0 0.0
        %1640 = vmatpush1.xpose.msra.mxu0 0.0
        %1641 = vmatprep.subr.mxu0 0.0
        %1642 = vmatpush1.xpose.msra.mxu0 0.0
        %1643 = vmatprep.subr.mxu0 0.0
        %1644 = vmatpush1.xpose.msra.mxu0 0.0
        %1645 = vmatprep.subr.mxu0 0.0
        %1646 = vmatpush1.xpose.msra.mxu0 %v1615
        %1647 = vmatprep.subr.mxu0 0.0
        %1648 = vmatpush1.xpose.msra.mxu0 %v1613
        %1649 = vmatprep.subr.mxu0 0.0
        %1650 = vmatpush2.xpose.msra.mxu0 0.0
        %1651 = vmatprep.subr.mxu0 0.0
        %1652 = vmatpush2.xpose.msra.mxu0 0.0
        %1653 = vmatprep.subr.mxu0 0.0
        %1654 = vmatpush2.xpose.msra.mxu0 0.0
        %1655 = vmatprep.subr.mxu0 0.0
        %1656 = vmatpush2.xpose.msra.mxu0 0.0
        %1657 = vmatprep.subr.mxu0 0.0
        %1658 = vmatpush2.xpose.msra.mxu0 0.0
        %1659 = vmatprep.subr.mxu0 0.0
        %1660 = vmatpush2.xpose.msra.mxu0 0.0
        %1661 = vmatprep.subr.mxu0 0.0
        %1662 = vmatpush2.xpose.msra.mxu0 0.0
        %1663 = vmatprep.subr.mxu0 0.0
        %1664 = vmatpush2.xpose.msra.mxu0 0.0
        %1665 = vmatprep.subr.mxu0 0.0
        %1666 = vmatpush2.xpose.msra.mxu0 0.0
        %1667 = vmatprep.subr.mxu0 0.0
        %1668 = vmatpush2.xpose.msra.mxu0 0.0
        %1669 = vmatprep.subr.mxu0 0.0
        %1670 = vmatpush2.xpose.msra.mxu0 0.0
        %1671 = vmatprep.subr.mxu0 0.0
        %1672 = vmatpush2.xpose.msra.mxu0 0.0
        %1673 = vmatprep.subr.mxu0 0.0
        %1674 = vmatpush2.xpose.msra.mxu0 0.0
        %1675 = vmatprep.subr.mxu0 0.0
        %1676 = vmatpush2.xpose.msra.mxu0 0.0
        %1677 = vmatprep.subr.mxu0 0.0
        %1678 = vmatpush2.xpose.msra.mxu0 0.0
        %1679 = vmatprep.subr.mxu0 0.0
        %1680 = vmatpush2.xpose.msra.mxu0 0.0
        %1681 = vmatprep.mubr.f32.mxu0 0.0
        %1682 = vmatmul.mubr.f32.gmra.mxu0 %v1609
        %v1683 = vpop.f32.mrf.mxu0
        %v1684 = vadd.f32 0.0, %v1683
        %v1685 = vpop.f32.mrf.mxu0
        %1686 = vmatprep.mubr.f32.mxu0 0.0
        %1687 = vmatmul.mubr.f32.gmra.mxu0 %v1611
        %v1688 = vpop.f32.mrf.mxu0
        %v1689 = vadd.f32 0.0, %v1688
        %v1690 = vpop.f32.mrf.mxu0
        %1691 = vdwg.mxu0
        %v1692 = vmul.f32 %v1684, 0.17677669
        %v1693 = vmul.f32 %v1689, 0.17677669
        %v1694 = vsel %vm904, %v1692, -inf
        %1695 = vmax.xlane.f32.xlu0 %v1694
        %v1696 = vpop.xlane.xlu0 %1695
        %v1697 = vsel %vm904, %v1693, -inf
        %1698 = vmax.xlane.f32.xlu0 %v1697
        %v1699 = vpop.xlane.xlu0 %1698
        %v1700 = vsub.f32 %v1692, %v1696
        %v1701 = vsub.f32 %v1693, %v1699
        %v1702 = vmul.f32 %v1700, 1.442695
        %v1703 = vpow.pop %v1702
        %v1704 = vmul.f32 %v1701, 1.442695
        %v1705 = vpow.pop %v1704
        %v1706 = vsel %vm904, %v1703, 0.0
        %1707 = vadd.xlane.f32.xlu0 %v1706
        %v1708 = vpop.xlane.xlu0 %1707
        %v1709 = vsel %vm904, %v1705, 0.0
        %1710 = vadd.xlane.f32.xlu0 %v1709
        %v1711 = vpop.xlane.xlu0 %1710
        %v1712 = vrcp.pop %v1708
        %v1713 = vrcp.pop %v1711
        %v1714 = vmul.f32 %v1703, %v1712
        %v1715 = vmul.f32 %v1705, %v1713
        %1716 = vrot.lane.b32.xlu0 %v808, 32
        %v1717 = vpop.permute.xlu0 %1716
        %1718 = vrot.lane.b32.xlu0 %v811, 32
        %v1719 = vpop.permute.xlu0 %1718
        %v1723 = vsel %vm904, %v1714, 0
        %v1726 = vsel %vm904, %v1715, 0
        %1728 = vmatprep.subr.mxu0 0.0
        %1729 = vmatpush1.msra.mxu0 0.0
        %1730 = vmatprep.subr.mxu0 0.0
        %1731 = vmatpush1.msra.mxu0 0.0
        %1732 = vmatprep.subr.mxu0 0.0
        %1733 = vmatpush1.msra.mxu0 0.0
        %1734 = vmatprep.subr.mxu0 0.0
        %1735 = vmatpush1.msra.mxu0 0.0
        %1736 = vmatprep.subr.mxu0 0.0
        %1737 = vmatpush1.msra.mxu0 0.0
        %1738 = vmatprep.subr.mxu0 0.0
        %1739 = vmatpush1.msra.mxu0 0.0
        %1740 = vmatprep.subr.mxu0 0.0
        %1741 = vmatpush1.msra.mxu0 0.0
        %1742 = vmatprep.subr.mxu0 0.0
        %1743 = vmatpush1.msra.mxu0 0.0
        %1744 = vmatprep.subr.mxu0 0.0
        %1745 = vmatpush1.msra.mxu0 0.0
        %1746 = vmatprep.subr.mxu0 0.0
        %1747 = vmatpush1.msra.mxu0 0.0
        %1748 = vmatprep.subr.mxu0 0.0
        %1749 = vmatpush1.msra.mxu0 0.0
        %1750 = vmatprep.subr.mxu0 0.0
        %1751 = vmatpush1.msra.mxu0 0.0
        %1752 = vmatprep.subr.mxu0 0.0
        %1753 = vmatpush1.msra.mxu0 0.0
        %1754 = vmatprep.subr.mxu0 0.0
        %1755 = vmatpush1.msra.mxu0 0.0
        %1756 = vmatprep.subr.mxu0 0.0
        %1757 = vmatpush1.msra.mxu0 %v1719
        %1758 = vmatprep.subr.mxu0 0.0
        %1759 = vmatpush1.msra.mxu0 %v1717
        %1760 = vmatprep.subr.mxu0 0.0
        %1761 = vmatpush2.msra.mxu0 0.0
        %1762 = vmatprep.subr.mxu0 0.0
        %1763 = vmatpush2.msra.mxu0 0.0
        %1764 = vmatprep.subr.mxu0 0.0
        %1765 = vmatpush2.msra.mxu0 0.0
        %1766 = vmatprep.subr.mxu0 0.0
        %1767 = vmatpush2.msra.mxu0 0.0
        %1768 = vmatprep.subr.mxu0 0.0
        %1769 = vmatpush2.msra.mxu0 0.0
        %1770 = vmatprep.subr.mxu0 0.0
        %1771 = vmatpush2.msra.mxu0 0.0
        %1772 = vmatprep.subr.mxu0 0.0
        %1773 = vmatpush2.msra.mxu0 0.0
        %1774 = vmatprep.subr.mxu0 0.0
        %1775 = vmatpush2.msra.mxu0 0.0
        %1776 = vmatprep.subr.mxu0 0.0
        %1777 = vmatpush2.msra.mxu0 0.0
        %1778 = vmatprep.subr.mxu0 0.0
        %1779 = vmatpush2.msra.mxu0 0.0
        %1780 = vmatprep.subr.mxu0 0.0
        %1781 = vmatpush2.msra.mxu0 0.0
        %1782 = vmatprep.subr.mxu0 0.0
        %1783 = vmatpush2.msra.mxu0 0.0
        %1784 = vmatprep.subr.mxu0 0.0
        %1785 = vmatpush2.msra.mxu0 0.0
        %1786 = vmatprep.subr.mxu0 0.0
        %1787 = vmatpush2.msra.mxu0 0.0
        %1788 = vmatprep.subr.mxu0 0.0
        %1789 = vmatpush2.msra.mxu0 0.0
        %1790 = vmatprep.subr.mxu0 0.0
        %1791 = vmatpush2.msra.mxu0 0.0
        %1792 = vmatprep.mubr.f32.mxu0 0.0
        %1793 = vmatmul.mubr.f32.gmra.mxu0 %v1723
        %v1794 = vpop.f32.mrf.mxu0
        %v1795 = vadd.f32 0.0, %v1794
        %v1796 = vpop.f32.mrf.mxu0
        %1797 = vmatprep.mubr.f32.mxu0 0.0
        %1798 = vmatmul.mubr.f32.gmra.mxu0 %v1726
        %v1799 = vpop.f32.mrf.mxu0
        %v1800 = vadd.f32 0.0, %v1799
        %v1801 = vpop.f32.mrf.mxu0
        %1802 = vdwg.mxu0
        %v1803 = vpack.c.bf16 %v1800, %v1795
        %s1804 = scalar_lea.vmem [#allocation2], 48
        %v1805 = vld [vmem:[%s1804] sm:$0xf]
        %v1806 = vld [vmem:[%s1804 + $0x4] sm:$0xf]
        %v1807 = vld [vmem:[%s1804 + $0x8] sm:$0xf]
        %v1808 = vld [vmem:[%s1804 + $0xc] sm:$0xf]
        %v1813 = vunpack.c.l.b16 %v1805
        %v1814 = vunpack.c.l.b16 %v1806
        %v1815 = vunpack.c.l.b16 %v1807
        %v1816 = vunpack.c.l.b16 %v1808
        %v1817 = vpack.c.b16 %v1814, %v1813
        %v1818 = vpack.c.b16 %v1816, %v1815
        %v1822 = vsel %vm814, %v1803, 0
        %1824 = vmatprep.subr.bf16.mxu0 0
        %1825 = vmatpush1.bf16.msra.mxu0 0
        %1826 = vmatprep.subr.bf16.mxu0 0
        %1827 = vmatpush1.bf16.msra.mxu0 0
        %1828 = vmatprep.subr.bf16.mxu0 0
        %1829 = vmatpush1.bf16.msra.mxu0 0
        %1830 = vmatprep.subr.bf16.mxu0 0
        %1831 = vmatpush1.bf16.msra.mxu0 0
        %1832 = vmatprep.subr.bf16.mxu0 0
        %1833 = vmatpush1.bf16.msra.mxu0 0
        %1834 = vmatprep.subr.bf16.mxu0 0
        %1835 = vmatpush1.bf16.msra.mxu0 0
        %1836 = vmatprep.subr.bf16.mxu0 0
        %1837 = vmatpush1.bf16.msra.mxu0 %v1818
        %1838 = vmatprep.subr.bf16.mxu0 0
        %1839 = vmatpush1.bf16.msra.mxu0 %v1817
        %1840 = vmatprep.subr.bf16.mxu0 0
        %1841 = vmatpush2.bf16.msra.mxu0 0
        %1842 = vmatprep.subr.bf16.mxu0 0
        %1843 = vmatpush2.bf16.msra.mxu0 0
        %1844 = vmatprep.subr.bf16.mxu0 0
        %1845 = vmatpush2.bf16.msra.mxu0 0
        %1846 = vmatprep.subr.bf16.mxu0 0
        %1847 = vmatpush2.bf16.msra.mxu0 0
        %1848 = vmatprep.subr.bf16.mxu0 0
        %1849 = vmatpush2.bf16.msra.mxu0 0
        %1850 = vmatprep.subr.bf16.mxu0 0
        %1851 = vmatpush2.bf16.msra.mxu0 0
        %1852 = vmatprep.subr.bf16.mxu0 0
        %1853 = vmatpush2.bf16.msra.mxu0 0
        %1854 = vmatprep.subr.bf16.mxu0 0
        %1855 = vmatpush2.bf16.msra.mxu0 0
        %1856 = vmatprep.mubr.bf16.mxu0 0
        %1857 = vmatmul.mubr.bf16.gmra.mxu0 %v1822
        %v1858 = vpop.f32.mrf.mxu0
        %v1859 = vadd.f32 0.0, %v1858
        %v1860 = vpop.f32.mrf.mxu0
        %v1861 = vpop.f32.mrf.mxu0
        %v1862 = vadd.f32 0.0, %v1861
        %v1863 = vpop.f32.mrf.mxu0
        %1864 = vdwg.mxu0
        %v1865 = vadd.f32 %v1599, %v1859
        %v1866 = vadd.f32 %v1600, %v1862
        %v1867 = vadd.f32 %v510, %v1865
        %v1868 = vadd.f32 %v513, %v1866
        %v1869 = vlaneseq
        %v1870 = vshrl.u32 %v1869, 7
        %v1871 = vsub.s32 4, %v1870
        %v1872 = vrot.slane %v516, %v1871
        %v1873 = vadd.f32 %v1867, %v1872
        %v1874 = vadd.f32 %v1868, %v1872
        %1875 = vadd.xlane.f32.xlu0 %v1873
        %v1876 = vpop.xlane.xlu0 %1875
        %1877 = vadd.xlane.f32.xlu0 %v1874
        %v1878 = vpop.xlane.xlu0 %1877
        %v1879 = vmul.f32 %v1876, %v521
        %v1880 = vmul.f32 %v1878, %v521
        %v1881 = vsub.f32 %v1873, %v1879
        %v1882 = vsub.f32 %v1874, %v1880
        %v1883 = vmul.f32 %v1881, %v1881
        %v1884 = vmul.f32 %v1882, %v1882
        %1885 = vadd.xlane.f32.xlu0 %v1883
        %v1886 = vpop.xlane.xlu0 %1885
        %1887 = vadd.xlane.f32.xlu0 %v1884
        %v1888 = vpop.xlane.xlu0 %1887
        %v1889 = vmul.f32 %v1886, %v521
        %v1890 = vmul.f32 %v1888, %v521
        %v1891 = vadd.f32 %v1889, 1e-06
        %v1892 = vadd.f32 %v1890, 1e-06
        %v1893 = vrsqrt.pop %v1891
        %v1894 = vrsqrt.pop %v1892
        %v1895 = vmul.f32 %v1881, %v1893
        %v1896 = vmul.f32 %v1882, %v1894
        %v1897 = vlaneseq
        %v1898 = vshrl.u32 %v1897, 7
        %v1899 = vsub.s32 2, %v1898
        %v1900 = vrot.slane %v516, %v1899
        %v1901 = vmul.f32 %v1895, %v1900
        %v1902 = vmul.f32 %v1896, %v1900
        %v1903 = vlaneseq
        %v1904 = vshrl.u32 %v1903, 7
        %v1905 = vsub.s32 3, %v1904
        %v1906 = vrot.slane %v516, %v1905
        %v1907 = vadd.f32 %v1901, %v1906
        %v1908 = vadd.f32 %v1902, %v1906
        %v1909 = vpack.c.bf16 %v1908, %v1907
        %v1910 = vld [vmem:[%s6] sm:$0xff]
        %v1911 = vld [vmem:[%s6 + $0x8] sm:$0xff]
        %v1912 = vld [vmem:[%s6 + $0x10] sm:$0xff]
        %v1913 = vld [vmem:[%s6 + $0x18] sm:$0xff]
        %v1914 = vld [vmem:[%s6 + $0x20] sm:$0xff]
        %v1915 = vld [vmem:[%s6 + $0x28] sm:$0xff]
        %v1916 = vld [vmem:[%s6 + $0x30] sm:$0xff]
        %v1917 = vld [vmem:[%s6 + $0x38] sm:$0xff]
        %v1918 = vld [vmem:[%s6 + $0x40] sm:$0xff]
        %v1919 = vld [vmem:[%s6 + $0x48] sm:$0xff]
        %v1920 = vld [vmem:[%s6 + $0x50] sm:$0xff]
        %v1921 = vld [vmem:[%s6 + $0x58] sm:$0xff]
        %v1922 = vld [vmem:[%s6 + $0x60] sm:$0xff]
        %v1923 = vld [vmem:[%s6 + $0x68] sm:$0xff]
        %v1924 = vld [vmem:[%s6 + $0x70] sm:$0xff]
        %v1925 = vld [vmem:[%s6 + $0x78] sm:$0xff]
        %v1926 = vld [vmem:[%s7] sm:$0x3]
        %v1928 = vlaneseq
        %v1929 = vshrl.u32 %v1928, 7
        %v1930 = vsub.s32 0, %v1929
        %v1931 = vrot.slane %v1926, %v1930
        %v1932 = vlaneseq
        %v1933 = vshrl.u32 %v1932, 7
        %v1934 = vsub.s32 1, %v1933
        %v1935 = vrot.slane %v1926, %v1934
        %v1954 = vunpack.c.l.b16 %v1910
        %v1955 = vunpack.c.h.b16 %v1910
        %v1956 = vunpack.c.l.b16 %v1911
        %v1957 = vunpack.c.h.b16 %v1911
        %v1958 = vunpack.c.l.b16 %v1912
        %v1959 = vunpack.c.h.b16 %v1912
        %v1960 = vunpack.c.l.b16 %v1913
        %v1961 = vunpack.c.h.b16 %v1913
        %v1962 = vunpack.c.l.b16 %v1914
        %v1963 = vunpack.c.h.b16 %v1914
        %v1964 = vunpack.c.l.b16 %v1915
        %v1965 = vunpack.c.h.b16 %v1915
        %v1966 = vunpack.c.l.b16 %v1916
        %v1967 = vunpack.c.h.b16 %v1916
        %v1968 = vunpack.c.l.b16 %v1917
        %v1969 = vunpack.c.h.b16 %v1917
        %v1970 = vunpack.c.l.b16 %v1918
        %v1971 = vunpack.c.h.b16 %v1918
        %v1972 = vunpack.c.l.b16 %v1919
        %v1973 = vunpack.c.h.b16 %v1919
        %v1974 = vunpack.c.l.b16 %v1920
        %v1975 = vunpack.c.h.b16 %v1920
        %v1976 = vunpack.c.l.b16 %v1921
        %v1977 = vunpack.c.h.b16 %v1921
        %v1978 = vunpack.c.l.b16 %v1922
        %v1979 = vunpack.c.h.b16 %v1922
        %v1980 = vunpack.c.l.b16 %v1923
        %v1981 = vunpack.c.h.b16 %v1923
        %v1982 = vunpack.c.l.b16 %v1924
        %v1983 = vunpack.c.h.b16 %v1924
        %v1984 = vunpack.c.l.b16 %v1925
        %v1985 = vunpack.c.h.b16 %v1925
        %v1986 = vpack.c.b16 %v1956, %v1954
        %v1987 = vpack.c.b16 %v1957, %v1955
        %v1988 = vpack.c.b16 %v1960, %v1958
        %v1989 = vpack.c.b16 %v1961, %v1959
        %v1990 = vpack.c.b16 %v1964, %v1962
        %v1991 = vpack.c.b16 %v1965, %v1963
        %v1992 = vpack.c.b16 %v1968, %v1966
        %v1993 = vpack.c.b16 %v1969, %v1967
        %v1994 = vpack.c.b16 %v1972, %v1970
        %v1995 = vpack.c.b16 %v1973, %v1971
        %v1996 = vpack.c.b16 %v1976, %v1974
        %v1997 = vpack.c.b16 %v1977, %v1975
        %v1998 = vpack.c.b16 %v1980, %v1978
        %v1999 = vpack.c.b16 %v1981, %v1979
        %v2000 = vpack.c.b16 %v1984, %v1982
        %v2001 = vpack.c.b16 %v1985, %v1983
        %2018 = vmatprep.subr.bf16.mxu0 %v2001
        %2019 = vmatpush1.bf16.msra.mxu0 %v2000
        %2020 = vmatprep.subr.bf16.mxu0 %v1999
        %2021 = vmatpush1.bf16.msra.mxu0 %v1998
        %2022 = vmatprep.subr.bf16.mxu0 %v1997
        %2023 = vmatpush1.bf16.msra.mxu0 %v1996
        %2024 = vmatprep.subr.bf16.mxu0 %v1995
        %2025 = vmatpush1.bf16.msra.mxu0 %v1994
        %2026 = vmatprep.subr.bf16.mxu0 %v1993
        %2027 = vmatpush1.bf16.msra.mxu0 %v1992
        %2028 = vmatprep.subr.bf16.mxu0 %v1991
        %2029 = vmatpush1.bf16.msra.mxu0 %v1990
        %2030 = vmatprep.subr.bf16.mxu0 %v1989
        %2031 = vmatpush1.bf16.msra.mxu0 %v1988
        %2032 = vmatprep.subr.bf16.mxu0 %v1987
        %2033 = vmatpush1.bf16.msra.mxu0 %v1986
        %2034 = vmatprep.subr.bf16.mxu0 0
        %2035 = vmatpush2.bf16.msra.mxu0 0
        %2036 = vmatprep.subr.bf16.mxu0 0
        %2037 = vmatpush2.bf16.msra.mxu0 0
        %2038 = vmatprep.subr.bf16.mxu0 0
        %2039 = vmatpush2.bf16.msra.mxu0 0
        %2040 = vmatprep.subr.bf16.mxu0 0
        %2041 = vmatpush2.bf16.msra.mxu0 0
        %2042 = vmatprep.subr.bf16.mxu0 0
        %2043 = vmatpush2.bf16.msra.mxu0 0
        %2044 = vmatprep.subr.bf16.mxu0 0
        %2045 = vmatpush2.bf16.msra.mxu0 0
        %2046 = vmatprep.subr.bf16.mxu0 0
        %2047 = vmatpush2.bf16.msra.mxu0 0
        %2048 = vmatprep.subr.bf16.mxu0 0
        %2049 = vmatpush2.bf16.msra.mxu0 0
        %2050 = vmatprep.mubr.bf16.mxu0 0
        %2051 = vmatmul.mubr.bf16.gmra.mxu0 %v1909
        %v2052 = vpop.f32.mrf.mxu0
        %v2053 = vadd.f32 %v1931, %v2052
        %v2054 = vpop.f32.mrf.mxu0
        %v2055 = vadd.f32 %v1935, %v2054
        %v2056 = vpop.f32.mrf.mxu0
        %v2057 = vadd.f32 %v1931, %v2056
        %v2058 = vpop.f32.mrf.mxu0
        %v2059 = vadd.f32 %v1935, %v2058
        %2060 = vdwg.mxu0
        %v2061 = vmul.f32 %v2053, 0.5
        %v2062 = vmul.f32 %v2055, 0.5
        %v2063 = vmul.f32 %v2057, 0.5
        %v2064 = vmul.f32 %v2059, 0.5
        %v2065 = vmul.f32 %v2053, 0.044715
        %v2066 = vmul.f32 %v2055, 0.044715
        %v2067 = vmul.f32 %v2057, 0.044715
        %v2068 = vmul.f32 %v2059, 0.044715
        %v2069 = vmul.f32 %v2065, %v2053
        %v2070 = vmul.f32 %v2066, %v2055
        %v2071 = vmul.f32 %v2067, %v2057
        %v2072 = vmul.f32 %v2068, %v2059
        %v2073 = vmul.f32 %v2069, %v2053
        %v2074 = vmul.f32 %v2070, %v2055
        %v2075 = vmul.f32 %v2071, %v2057
        %v2076 = vmul.f32 %v2072, %v2059
        %v2077 = vadd.f32 %v2053, %v2073
        %v2078 = vadd.f32 %v2055, %v2074
        %v2079 = vadd.f32 %v2057, %v2075
        %v2080 = vadd.f32 %v2059, %v2076
        %v2081 = vmul.f32 %v2077, 0.7978846
        %v2082 = vmul.f32 %v2078, 0.7978846
        %v2083 = vmul.f32 %v2079, 0.7978846
        %v2084 = vmul.f32 %v2080, 0.7978846
        %v2085 = vtanh.pop %v2081
        %v2086 = vtanh.pop %v2082
        %v2087 = vtanh.pop %v2083
        %v2088 = vtanh.pop %v2084
        %v2089 = vadd.f32 %v2085, 1.0
        %v2090 = vadd.f32 %v2086, 1.0
        %v2091 = vadd.f32 %v2087, 1.0
        %v2092 = vadd.f32 %v2088, 1.0
        %v2093 = vmul.f32 %v2061, %v2089
        %v2094 = vmul.f32 %v2062, %v2090
        %v2095 = vmul.f32 %v2063, %v2091
        %v2096 = vmul.f32 %v2064, %v2092
        %v2097 = vpack.c.bf16 %v2095, %v2093
        %v2098 = vpack.c.bf16 %v2096, %v2094
        %v2099 = vld [vmem:[%s8] sm:$0xf]
        %v2100 = vld [vmem:[%s8 + $0x4] sm:$0xf]
        %v2101 = vld [vmem:[%s8 + $0x8] sm:$0xf]
        %v2102 = vld [vmem:[%s8 + $0xc] sm:$0xf]
        %v2103 = vld [vmem:[%s8 + $0x10] sm:$0xf]
        %v2104 = vld [vmem:[%s8 + $0x14] sm:$0xf]
        %v2105 = vld [vmem:[%s8 + $0x18] sm:$0xf]
        %v2106 = vld [vmem:[%s8 + $0x1c] sm:$0xf]
        %v2107 = vld [vmem:[%s8 + $0x20] sm:$0xf]
        %v2108 = vld [vmem:[%s8 + $0x24] sm:$0xf]
        %v2109 = vld [vmem:[%s8 + $0x28] sm:$0xf]
        %v2110 = vld [vmem:[%s8 + $0x2c] sm:$0xf]
        %v2111 = vld [vmem:[%s8 + $0x30] sm:$0xf]
        %v2112 = vld [vmem:[%s8 + $0x34] sm:$0xf]
        %v2113 = vld [vmem:[%s8 + $0x38] sm:$0xf]
        %v2114 = vld [vmem:[%s8 + $0x3c] sm:$0xf]
        %v2115 = vld [vmem:[%s8 + $0x40] sm:$0xf]
        %v2116 = vld [vmem:[%s8 + $0x44] sm:$0xf]
        %v2117 = vld [vmem:[%s8 + $0x48] sm:$0xf]
        %v2118 = vld [vmem:[%s8 + $0x4c] sm:$0xf]
        %v2119 = vld [vmem:[%s8 + $0x50] sm:$0xf]
        %v2120 = vld [vmem:[%s8 + $0x54] sm:$0xf]
        %v2121 = vld [vmem:[%s8 + $0x58] sm:$0xf]
        %v2122 = vld [vmem:[%s8 + $0x5c] sm:$0xf]
        %v2123 = vld [vmem:[%s8 + $0x60] sm:$0xf]
        %v2124 = vld [vmem:[%s8 + $0x64] sm:$0xf]
        %v2125 = vld [vmem:[%s8 + $0x68] sm:$0xf]
        %v2126 = vld [vmem:[%s8 + $0x6c] sm:$0xf]
        %v2127 = vld [vmem:[%s8 + $0x70] sm:$0xf]
        %v2128 = vld [vmem:[%s8 + $0x74] sm:$0xf]
        %v2129 = vld [vmem:[%s8 + $0x78] sm:$0xf]
        %v2130 = vld [vmem:[%s8 + $0x7c] sm:$0xf]
        %v2131 = vlaneseq
        %v2132 = vshrl.u32 %v2131, 7
        %v2133 = vsub.s32 5, %v2132
        %v2134 = vrot.slane %v516, %v2133
        %v2167 = vunpack.c.l.b16 %v2099
        %v2168 = vunpack.c.l.b16 %v2100
        %v2169 = vunpack.c.l.b16 %v2101
        %v2170 = vunpack.c.l.b16 %v2102
        %v2171 = vunpack.c.l.b16 %v2103
        %v2172 = vunpack.c.l.b16 %v2104
        %v2173 = vunpack.c.l.b16 %v2105
        %v2174 = vunpack.c.l.b16 %v2106
        %v2175 = vunpack.c.l.b16 %v2107
        %v2176 = vunpack.c.l.b16 %v2108
        %v2177 = vunpack.c.l.b16 %v2109
        %v2178 = vunpack.c.l.b16 %v2110
        %v2179 = vunpack.c.l.b16 %v2111
        %v2180 = vunpack.c.l.b16 %v2112
        %v2181 = vunpack.c.l.b16 %v2113
        %v2182 = vunpack.c.l.b16 %v2114
        %v2183 = vunpack.c.l.b16 %v2115
        %v2184 = vunpack.c.l.b16 %v2116
        %v2185 = vunpack.c.l.b16 %v2117
        %v2186 = vunpack.c.l.b16 %v2118
        %v2187 = vunpack.c.l.b16 %v2119
        %v2188 = vunpack.c.l.b16 %v2120
        %v2189 = vunpack.c.l.b16 %v2121
        %v2190 = vunpack.c.l.b16 %v2122
        %v2191 = vunpack.c.l.b16 %v2123
        %v2192 = vunpack.c.l.b16 %v2124
        %v2193 = vunpack.c.l.b16 %v2125
        %v2194 = vunpack.c.l.b16 %v2126
        %v2195 = vunpack.c.l.b16 %v2127
        %v2196 = vunpack.c.l.b16 %v2128
        %v2197 = vunpack.c.l.b16 %v2129
        %v2198 = vunpack.c.l.b16 %v2130
        %v2199 = vpack.c.b16 %v2168, %v2167
        %v2200 = vpack.c.b16 %v2170, %v2169
        %v2201 = vpack.c.b16 %v2172, %v2171
        %v2202 = vpack.c.b16 %v2174, %v2173
        %v2203 = vpack.c.b16 %v2176, %v2175
        %v2204 = vpack.c.b16 %v2178, %v2177
        %v2205 = vpack.c.b16 %v2180, %v2179
        %v2206 = vpack.c.b16 %v2182, %v2181
        %v2207 = vpack.c.b16 %v2184, %v2183
        %v2208 = vpack.c.b16 %v2186, %v2185
        %v2209 = vpack.c.b16 %v2188, %v2187
        %v2210 = vpack.c.b16 %v2190, %v2189
        %v2211 = vpack.c.b16 %v2192, %v2191
        %v2212 = vpack.c.b16 %v2194, %v2193
        %v2213 = vpack.c.b16 %v2196, %v2195
        %v2214 = vpack.c.b16 %v2198, %v2197
        %2231 = vmatprep.subr.bf16.mxu0 0
        %2232 = vmatpush1.bf16.msra.mxu0 %v2206
        %2233 = vmatprep.subr.bf16.mxu0 0
        %2234 = vmatpush1.bf16.msra.mxu0 %v2205
        %2235 = vmatprep.subr.bf16.mxu0 0
        %2236 = vmatpush1.bf16.msra.mxu0 %v2204
        %2237 = vmatprep.subr.bf16.mxu0 0
        %2238 = vmatpush1.bf16.msra.mxu0 %v2203
        %2239 = vmatprep.subr.bf16.mxu0 0
        %2240 = vmatpush1.bf16.msra.mxu0 %v2202
        %2241 = vmatprep.subr.bf16.mxu0 0
        %2242 = vmatpush1.bf16.msra.mxu0 %v2201
        %2243 = vmatprep.subr.bf16.mxu0 0
        %2244 = vmatpush1.bf16.msra.mxu0 %v2200
        %2245 = vmatprep.subr.bf16.mxu0 0
        %2246 = vmatpush1.bf16.msra.mxu0 %v2199
        %2247 = vmatprep.subr.bf16.mxu0 0
        %2248 = vmatpush2.bf16.msra.mxu0 %v2214
        %2249 = vmatprep.subr.bf16.mxu0 0
        %2250 = vmatpush2.bf16.msra.mxu0 %v2213
        %2251 = vmatprep.subr.bf16.mxu0 0
        %2252 = vmatpush2.bf16.msra.mxu0 %v2212
        %2253 = vmatprep.subr.bf16.mxu0 0
        %2254 = vmatpush2.bf16.msra.mxu0 %v2211
        %2255 = vmatprep.subr.bf16.mxu0 0
        %2256 = vmatpush2.bf16.msra.mxu0 %v2210
        %2257 = vmatprep.subr.bf16.mxu0 0
        %2258 = vmatpush2.bf16.msra.mxu0 %v2209
        %2259 = vmatprep.subr.bf16.mxu0 0
        %2260 = vmatpush2.bf16.msra.mxu0 %v2208
        %2261 = vmatprep.subr.bf16.mxu0 0
        %2262 = vmatpush2.bf16.msra.mxu0 %v2207
        %2263 = vmatprep.mubr.bf16.mxu0 %v2098
        %2264 = vmatmul.mubr.bf16.gmra.mxu0 %v2097
        %v2265 = vpop.f32.mrf.mxu0
        %v2266 = vadd.f32 %v2134, %v2265
        %v2267 = vpop.f32.mrf.mxu0
        %v2268 = vpop.f32.mrf.mxu0
        %v2269 = vadd.f32 %v2134, %v2268
        %v2270 = vpop.f32.mrf.mxu0
        %2271 = vdwg.mxu0
        %v2272 = vadd.f32 %v1873, %v2266
        %v2273 = vadd.f32 %v1874, %v2269
        %s2274 = scalar_lea.vmem %s9, 8
        %v2275 = vld [vmem:[%s2274] sm:$0xff]
        %2276 = vadd.xlane.f32.xlu0 %v2272
        %v2277 = vpop.xlane.xlu0 %2276
        %2278 = vadd.xlane.f32.xlu0 %v2273
        %v2279 = vpop.xlane.xlu0 %2278
        %v2280 = vmul.f32 %v2277, %v521
        %v2281 = vmul.f32 %v2279, %v521
        %v2282 = vsub.f32 %v2272, %v2280
        %v2283 = vsub.f32 %v2273, %v2281
        %v2284 = vmul.f32 %v2282, %v2282
        %v2285 = vmul.f32 %v2283, %v2283
        %2286 = vadd.xlane.f32.xlu0 %v2284
        %v2287 = vpop.xlane.xlu0 %2286
        %2288 = vadd.xlane.f32.xlu0 %v2285
        %v2289 = vpop.xlane.xlu0 %2288
        %v2290 = vmul.f32 %v2287, %v521
        %v2291 = vmul.f32 %v2289, %v521
        %v2292 = vadd.f32 %v2290, 1e-06
        %v2293 = vadd.f32 %v2291, 1e-06
        %v2294 = vrsqrt.pop %v2292
        %v2295 = vrsqrt.pop %v2293
        %v2296 = vmul.f32 %v2282, %v2294
        %v2297 = vmul.f32 %v2283, %v2295
        %v2298 = vlaneseq
        %v2299 = vshrl.u32 %v2298, 7
        %v2300 = vsub.s32 0, %v2299
        %v2301 = vrot.slane %v2275, %v2300
        %v2302 = vmul.f32 %v2296, %v2301
        %v2303 = vmul.f32 %v2297, %v2301
        %v2304 = vlaneseq
        %v2305 = vshrl.u32 %v2304, 7
        %v2306 = vsub.s32 1, %v2305
        %v2307 = vrot.slane %v2275, %v2306
        %v2308 = vadd.f32 %v2302, %v2307
        %v2309 = vadd.f32 %v2303, %v2307
        %v2310 = vpack.c.bf16 %v2309, %v2308
        %s2311 = scalar_lea.vmem %s3, 192
        %v2312 = vld [vmem:[%s2311] sm:$0xff]
        %v2313 = vld [vmem:[%s2311 + $0x8] sm:$0xf]
        %v2314 = vld [vmem:[%s2311 + $0xc] sm:$0xff]
        %v2315 = vld [vmem:[%s2311 + $0x14] sm:$0xf]
        %v2316 = vld [vmem:[%s2311 + $0x18] sm:$0xff]
        %v2317 = vld [vmem:[%s2311 + $0x20] sm:$0xf]
        %v2318 = vld [vmem:[%s2311 + $0x24] sm:$0xff]
        %v2319 = vld [vmem:[%s2311 + $0x2c] sm:$0xf]
        %v2320 = vld [vmem:[%s2311 + $0x30] sm:$0xff]
        %v2321 = vld [vmem:[%s2311 + $0x38] sm:$0xf]
        %v2322 = vld [vmem:[%s2311 + $0x3c] sm:$0xff]
        %v2323 = vld [vmem:[%s2311 + $0x44] sm:$0xf]
        %v2324 = vld [vmem:[%s2311 + $0x48] sm:$0xff]
        %v2325 = vld [vmem:[%s2311 + $0x50] sm:$0xf]
        %v2326 = vld [vmem:[%s2311 + $0x54] sm:$0xff]
        %v2327 = vld [vmem:[%s2311 + $0x5c] sm:$0xf]
        %v2328 = vld [vmem:[%s2311 + $0x60] sm:$0xff]
        %v2329 = vld [vmem:[%s2311 + $0x68] sm:$0xf]
        %v2330 = vld [vmem:[%s2311 + $0x6c] sm:$0xff]
        %v2331 = vld [vmem:[%s2311 + $0x74] sm:$0xf]
        %v2332 = vld [vmem:[%s2311 + $0x78] sm:$0xff]
        %v2333 = vld [vmem:[%s2311 + $0x80] sm:$0xf]
        %v2334 = vld [vmem:[%s2311 + $0x84] sm:$0xff]
        %v2335 = vld [vmem:[%s2311 + $0x8c] sm:$0xf]
        %v2336 = vld [vmem:[%s2311 + $0x90] sm:$0xff]
        %v2337 = vld [vmem:[%s2311 + $0x98] sm:$0xf]
        %v2338 = vld [vmem:[%s2311 + $0x9c] sm:$0xff]
        %v2339 = vld [vmem:[%s2311 + $0xa4] sm:$0xf]
        %v2340 = vld [vmem:[%s2311 + $0xa8] sm:$0xff]
        %v2341 = vld [vmem:[%s2311 + $0xb0] sm:$0xf]
        %v2342 = vld [vmem:[%s2311 + $0xb4] sm:$0xff]
        %v2343 = vld [vmem:[%s2311 + $0xbc] sm:$0xf]
        %s2344 = scalar_lea.vmem %s4, 3
        %v2345 = vld [vmem:[%s2344] sm:$0x7]
        %v2347 = vlaneseq
        %v2348 = vshrl.u32 %v2347, 7
        %v2349 = vsub.s32 0, %v2348
        %v2350 = vrot.slane %v2345, %v2349
        %v2351 = vlaneseq
        %v2352 = vshrl.u32 %v2351, 7
        %v2353 = vsub.s32 1, %v2352
        %v2354 = vrot.slane %v2345, %v2353
        %v2355 = vlaneseq
        %v2356 = vshrl.u32 %v2355, 7
        %v2357 = vsub.s32 2, %v2356
        %v2358 = vrot.slane %v2345, %v2357
        %v2394 = vunpack.c.l.b16 %v2312
        %v2395 = vunpack.c.h.b16 %v2312
        %v2396 = vunpack.c.l.b16 %v2313
        %v2397 = vunpack.c.l.b16 %v2314
        %v2398 = vunpack.c.h.b16 %v2314
        %v2399 = vunpack.c.l.b16 %v2315
        %v2400 = vunpack.c.l.b16 %v2316
        %v2401 = vunpack.c.h.b16 %v2316
        %v2402 = vunpack.c.l.b16 %v2317
        %v2403 = vunpack.c.l.b16 %v2318
        %v2404 = vunpack.c.h.b16 %v2318
        %v2405 = vunpack.c.l.b16 %v2319
        %v2406 = vunpack.c.l.b16 %v2320
        %v2407 = vunpack.c.h.b16 %v2320
        %v2408 = vunpack.c.l.b16 %v2321
        %v2409 = vunpack.c.l.b16 %v2322
        %v2410 = vunpack.c.h.b16 %v2322
        %v2411 = vunpack.c.l.b16 %v2323
        %v2412 = vunpack.c.l.b16 %v2324
        %v2413 = vunpack.c.h.b16 %v2324
        %v2414 = vunpack.c.l.b16 %v2325
        %v2415 = vunpack.c.l.b16 %v2326
        %v2416 = vunpack.c.h.b16 %v2326
        %v2417 = vunpack.c.l.b16 %v2327
        %v2418 = vunpack.c.l.b16 %v2328
        %v2419 = vunpack.c.h.b16 %v2328
        %v2420 = vunpack.c.l.b16 %v2329
        %v2421 = vunpack.c.l.b16 %v2330
        %v2422 = vunpack.c.h.b16 %v2330
        %v2423 = vunpack.c.l.b16 %v2331
        %v2424 = vunpack.c.l.b16 %v2332
        %v2425 = vunpack.c.h.b16 %v2332
        %v2426 = vunpack.c.l.b16 %v2333
        %v2427 = vunpack.c.l.b16 %v2334
        %v2428 = vunpack.c.h.b16 %v2334
        %v2429 = vunpack.c.l.b16 %v2335
        %v2430 = vunpack.c.l.b16 %v2336
        %v2431 = vunpack.c.h.b16 %v2336
        %v2432 = vunpack.c.l.b16 %v2337
        %v2433 = vunpack.c.l.b16 %v2338
        %v2434 = vunpack.c.h.b16 %v2338
        %v2435 = vunpack.c.l.b16 %v2339
        %v2436 = vunpack.c.l.b16 %v2340
        %v2437 = vunpack.c.h.b16 %v2340
        %v2438 = vunpack.c.l.b16 %v2341
        %v2439 = vunpack.c.l.b16 %v2342
        %v2440 = vunpack.c.h.b16 %v2342
        %v2441 = vunpack.c.l.b16 %v2343
        %v2442 = vpack.c.b16 %v2397, %v2394
        %v2443 = vpack.c.b16 %v2398, %v2395
        %v2444 = vpack.c.b16 %v2399, %v2396
        %v2445 = vpack.c.b16 %v2403, %v2400
        %v2446 = vpack.c.b16 %v2404, %v2401
        %v2447 = vpack.c.b16 %v2405, %v2402
        %v2448 = vpack.c.b16 %v2409, %v2406
        %v2449 = vpack.c.b16 %v2410, %v2407
        %v2450 = vpack.c.b16 %v2411, %v2408
        %v2451 = vpack.c.b16 %v2415, %v2412
        %v2452 = vpack.c.b16 %v2416, %v2413
        %v2453 = vpack.c.b16 %v2417, %v2414
        %v2454 = vpack.c.b16 %v2421, %v2418
        %v2455 = vpack.c.b16 %v2422, %v2419
        %v2456 = vpack.c.b16 %v2423, %v2420
        %v2457 = vpack.c.b16 %v2427, %v2424
        %v2458 = vpack.c.b16 %v2428, %v2425
        %v2459 = vpack.c.b16 %v2429, %v2426
        %v2460 = vpack.c.b16 %v2433, %v2430
        %v2461 = vpack.c.b16 %v2434, %v2431
        %v2462 = vpack.c.b16 %v2435, %v2432
        %v2463 = vpack.c.b16 %v2439, %v2436
        %v2464 = vpack.c.b16 %v2440, %v2437
        %v2465 = vpack.c.b16 %v2441, %v2438
        %2490 = vmatprep.subr.bf16.mxu0 %v2464
        %2491 = vmatpush1.bf16.msra.mxu0 %v2463
        %2492 = vmatprep.subr.bf16.mxu0 %v2461
        %2493 = vmatpush1.bf16.msra.mxu0 %v2460
        %2494 = vmatprep.subr.bf16.mxu0 %v2458
        %2495 = vmatpush1.bf16.msra.mxu0 %v2457
        %2496 = vmatprep.subr.bf16.mxu0 %v2455
        %2497 = vmatpush1.bf16.msra.mxu0 %v2454
        %2498 = vmatprep.subr.bf16.mxu0 %v2452
        %2499 = vmatpush1.bf16.msra.mxu0 %v2451
        %2500 = vmatprep.subr.bf16.mxu0 %v2449
        %2501 = vmatpush1.bf16.msra.mxu0 %v2448
        %2502 = vmatprep.subr.bf16.mxu0 %v2446
        %2503 = vmatpush1.bf16.msra.mxu0 %v2445
        %2504 = vmatprep.subr.bf16.mxu0 %v2443
        %2505 = vmatpush1.bf16.msra.mxu0 %v2442
        %2506 = vmatprep.subr.bf16.mxu0 0
        %2507 = vmatpush2.bf16.msra.mxu0 0
        %2508 = vmatprep.subr.bf16.mxu0 0
        %2509 = vmatpush2.bf16.msra.mxu0 0
        %2510 = vmatprep.subr.bf16.mxu0 0
        %2511 = vmatpush2.bf16.msra.mxu0 0
        %2512 = vmatprep.subr.bf16.mxu0 0
        %2513 = vmatpush2.bf16.msra.mxu0 0
        %2514 = vmatprep.subr.bf16.mxu0 0
        %2515 = vmatpush2.bf16.msra.mxu0 0
        %2516 = vmatprep.subr.bf16.mxu0 0
        %2517 = vmatpush2.bf16.msra.mxu0 0
        %2518 = vmatprep.subr.bf16.mxu0 0
        %2519 = vmatpush2.bf16.msra.mxu0 0
        %2520 = vmatprep.subr.bf16.mxu0 0
        %2521 = vmatpush2.bf16.msra.mxu0 0
        %2522 = vmatprep.mubr.bf16.mxu0 0
        %2523 = vmatmul.mubr.bf16.gmra.mxu0 %v2310
        %v2524 = vpop.f32.mrf.mxu0
        %v2525 = vadd.f32 %v2350, %v2524
        %v2526 = vpop.f32.mrf.mxu0
        %v2527 = vadd.f32 %v2354, %v2526
        %v2528 = vpop.f32.mrf.mxu0
        %v2529 = vadd.f32 %v2350, %v2528
        %v2530 = vpop.f32.mrf.mxu0
        %v2531 = vadd.f32 %v2354, %v2530
        %2532 = vdwg.mxu0
        %2533 = vmatprep.subr.bf16.mxu0 0
        %2534 = vmatpush1.bf16.msra.mxu0 %v2465
        %2535 = vmatprep.subr.bf16.mxu0 0
        %2536 = vmatpush1.bf16.msra.mxu0 %v2462
        %2537 = vmatprep.subr.bf16.mxu0 0
        %2538 = vmatpush1.bf16.msra.mxu0 %v2459
        %2539 = vmatprep.subr.bf16.mxu0 0
        %2540 = vmatpush1.bf16.msra.mxu0 %v2456
        %2541 = vmatprep.subr.bf16.mxu0 0
        %2542 = vmatpush1.bf16.msra.mxu0 %v2453
        %2543 = vmatprep.subr.bf16.mxu0 0
        %2544 = vmatpush1.bf16.msra.mxu0 %v2450
        %2545 = vmatprep.subr.bf16.mxu0 0
        %2546 = vmatpush1.bf16.msra.mxu0 %v2447
        %2547 = vmatprep.subr.bf16.mxu0 0
        %2548 = vmatpush1.bf16.msra.mxu0 %v2444
        %2549 = vmatprep.subr.bf16.mxu0 0
        %2550 = vmatpush2.bf16.msra.mxu0 0
        %2551 = vmatprep.subr.bf16.mxu0 0
        %2552 = vmatpush2.bf16.msra.mxu0 0
        %2553 = vmatprep.subr.bf16.mxu0 0
        %2554 = vmatpush2.bf16.msra.mxu0 0
        %2555 = vmatprep.subr.bf16.mxu0 0
        %2556 = vmatpush2.bf16.msra.mxu0 0
        %2557 = vmatprep.subr.bf16.mxu0 0
        %2558 = vmatpush2.bf16.msra.mxu0 0
        %2559 = vmatprep.subr.bf16.mxu0 0
        %2560 = vmatpush2.bf16.msra.mxu0 0
        %2561 = vmatprep.subr.bf16.mxu0 0
        %2562 = vmatpush2.bf16.msra.mxu0 0
        %2563 = vmatprep.subr.bf16.mxu0 0
        %2564 = vmatpush2.bf16.msra.mxu0 0
        %2565 = vmatprep.mubr.bf16.mxu0 0
        %2566 = vmatmul.mubr.bf16.gmra.mxu0 %v2310
        %v2567 = vpop.f32.mrf.mxu0
        %v2568 = vadd.f32 %v2358, %v2567
        %v2569 = vpop.f32.mrf.mxu0
        %v2570 = vpop.f32.mrf.mxu0
        %v2571 = vadd.f32 %v2358, %v2570
        %v2572 = vpop.f32.mrf.mxu0
        %2573 = vdwg.mxu0
        %v2575 = vsel %vm814, %v2525, 0
        %v2578 = vsel %vm814, %v2529, 0
        %v2581 = vsel %vm814, %v2527, 0
        %v2584 = vsel %vm814, %v2531, 0
        %2586 = vmatprep.subr.mxu0 0.0
        %2587 = vmatpush1.xpose.msra.mxu0 0.0
        %2588 = vmatprep.subr.mxu0 0.0
        %2589 = vmatpush1.xpose.msra.mxu0 0.0
        %2590 = vmatprep.subr.mxu0 0.0
        %2591 = vmatpush1.xpose.msra.mxu0 0.0
        %2592 = vmatprep.subr.mxu0 0.0
        %2593 = vmatpush1.xpose.msra.mxu0 0.0
        %2594 = vmatprep.subr.mxu0 0.0
        %2595 = vmatpush1.xpose.msra.mxu0 0.0
        %2596 = vmatprep.subr.mxu0 0.0
        %2597 = vmatpush1.xpose.msra.mxu0 0.0
        %2598 = vmatprep.subr.mxu0 0.0
        %2599 = vmatpush1.xpose.msra.mxu0 0.0
        %2600 = vmatprep.subr.mxu0 0.0
        %2601 = vmatpush1.xpose.msra.mxu0 0.0
        %2602 = vmatprep.subr.mxu0 0.0
        %2603 = vmatpush1.xpose.msra.mxu0 0.0
        %2604 = vmatprep.subr.mxu0 0.0
        %2605 = vmatpush1.xpose.msra.mxu0 0.0
        %2606 = vmatprep.subr.mxu0 0.0
        %2607 = vmatpush1.xpose.msra.mxu0 0.0
        %2608 = vmatprep.subr.mxu0 0.0
        %2609 = vmatpush1.xpose.msra.mxu0 0.0
        %2610 = vmatprep.subr.mxu0 0.0
        %2611 = vmatpush1.xpose.msra.mxu0 0.0
        %2612 = vmatprep.subr.mxu0 0.0
        %2613 = vmatpush1.xpose.msra.mxu0 0.0
        %2614 = vmatprep.subr.mxu0 0.0
        %2615 = vmatpush1.xpose.msra.mxu0 %v2584
        %2616 = vmatprep.subr.mxu0 0.0
        %2617 = vmatpush1.xpose.msra.mxu0 %v2581
        %2618 = vmatprep.subr.mxu0 0.0
        %2619 = vmatpush2.xpose.msra.mxu0 0.0
        %2620 = vmatprep.subr.mxu0 0.0
        %2621 = vmatpush2.xpose.msra.mxu0 0.0
        %2622 = vmatprep.subr.mxu0 0.0
        %2623 = vmatpush2.xpose.msra.mxu0 0.0
        %2624 = vmatprep.subr.mxu0 0.0
        %2625 = vmatpush2.xpose.msra.mxu0 0.0
        %2626 = vmatprep.subr.mxu0 0.0
        %2627 = vmatpush2.xpose.msra.mxu0 0.0
        %2628 = vmatprep.subr.mxu0 0.0
        %2629 = vmatpush2.xpose.msra.mxu0 0.0
        %2630 = vmatprep.subr.mxu0 0.0
        %2631 = vmatpush2.xpose.msra.mxu0 0.0
        %2632 = vmatprep.subr.mxu0 0.0
        %2633 = vmatpush2.xpose.msra.mxu0 0.0
        %2634 = vmatprep.subr.mxu0 0.0
        %2635 = vmatpush2.xpose.msra.mxu0 0.0
        %2636 = vmatprep.subr.mxu0 0.0
        %2637 = vmatpush2.xpose.msra.mxu0 0.0
        %2638 = vmatprep.subr.mxu0 0.0
        %2639 = vmatpush2.xpose.msra.mxu0 0.0
        %2640 = vmatprep.subr.mxu0 0.0
        %2641 = vmatpush2.xpose.msra.mxu0 0.0
        %2642 = vmatprep.subr.mxu0 0.0
        %2643 = vmatpush2.xpose.msra.mxu0 0.0
        %2644 = vmatprep.subr.mxu0 0.0
        %2645 = vmatpush2.xpose.msra.mxu0 0.0
        %2646 = vmatprep.subr.mxu0 0.0
        %2647 = vmatpush2.xpose.msra.mxu0 0.0
        %2648 = vmatprep.subr.mxu0 0.0
        %2649 = vmatpush2.xpose.msra.mxu0 0.0
        %2650 = vmatprep.mubr.f32.mxu0 0.0
        %2651 = vmatmul.mubr.f32.gmra.mxu0 %v2575
        %v2652 = vpop.f32.mrf.mxu0
        %v2653 = vadd.f32 0.0, %v2652
        %v2654 = vpop.f32.mrf.mxu0
        %2655 = vmatprep.mubr.f32.mxu0 0.0
        %2656 = vmatmul.mubr.f32.gmra.mxu0 %v2578
        %v2657 = vpop.f32.mrf.mxu0
        %v2658 = vadd.f32 0.0, %v2657
        %v2659 = vpop.f32.mrf.mxu0
        %2660 = vdwg.mxu0
        %v2661 = vmul.f32 %v2653, 0.17677669
        %v2662 = vmul.f32 %v2658, 0.17677669
        %v2663 = vsel %vm904, %v2661, -inf
        %2664 = vmax.xlane.f32.xlu0 %v2663
        %v2665 = vpop.xlane.xlu0 %2664
        %v2666 = vsel %vm904, %v2662, -inf
        %2667 = vmax.xlane.f32.xlu0 %v2666
        %v2668 = vpop.xlane.xlu0 %2667
        %v2669 = vsub.f32 %v2661, %v2665
        %v2670 = vsub.f32 %v2662, %v2668
        %v2671 = vmul.f32 %v2669, 1.442695
        %v2672 = vpow.pop %v2671
        %v2673 = vmul.f32 %v2670, 1.442695
        %v2674 = vpow.pop %v2673
        %v2675 = vsel %vm904, %v2672, 0.0
        %2676 = vadd.xlane.f32.xlu0 %v2675
        %v2677 = vpop.xlane.xlu0 %2676
        %v2678 = vsel %vm904, %v2674, 0.0
        %2679 = vadd.xlane.f32.xlu0 %v2678
        %v2680 = vpop.xlane.xlu0 %2679
        %v2681 = vrcp.pop %v2677
        %v2682 = vrcp.pop %v2680
        %v2683 = vmul.f32 %v2672, %v2681
        %v2684 = vmul.f32 %v2674, %v2682
        %v2686 = vsel %vm904, %v2683, 0
        %v2689 = vsel %vm904, %v2684, 0
        %2691 = vmatprep.subr.mxu0 0.0
        %2692 = vmatpush1.msra.mxu0 0.0
        %2693 = vmatprep.subr.mxu0 0.0
        %2694 = vmatpush1.msra.mxu0 0.0
        %2695 = vmatprep.subr.mxu0 0.0
        %2696 = vmatpush1.msra.mxu0 0.0
        %2697 = vmatprep.subr.mxu0 0.0
        %2698 = vmatpush1.msra.mxu0 0.0
        %2699 = vmatprep.subr.mxu0 0.0
        %2700 = vmatpush1.msra.mxu0 0.0
        %2701 = vmatprep.subr.mxu0 0.0
        %2702 = vmatpush1.msra.mxu0 0.0
        %2703 = vmatprep.subr.mxu0 0.0
        %2704 = vmatpush1.msra.mxu0 0.0
        %2705 = vmatprep.subr.mxu0 0.0
        %2706 = vmatpush1.msra.mxu0 0.0
        %2707 = vmatprep.subr.mxu0 0.0
        %2708 = vmatpush1.msra.mxu0 0.0
        %2709 = vmatprep.subr.mxu0 0.0
        %2710 = vmatpush1.msra.mxu0 0.0
        %2711 = vmatprep.subr.mxu0 0.0
        %2712 = vmatpush1.msra.mxu0 0.0
        %2713 = vmatprep.subr.mxu0 0.0
        %2714 = vmatpush1.msra.mxu0 0.0
        %2715 = vmatprep.subr.mxu0 0.0
        %2716 = vmatpush1.msra.mxu0 0.0
        %2717 = vmatprep.subr.mxu0 0.0
        %2718 = vmatpush1.msra.mxu0 0.0
        %2719 = vmatprep.subr.mxu0 0.0
        %2720 = vmatpush1.msra.mxu0 %v2571
        %2721 = vmatprep.subr.mxu0 0.0
        %2722 = vmatpush1.msra.mxu0 %v2568
        %2723 = vmatprep.subr.mxu0 0.0
        %2724 = vmatpush2.msra.mxu0 0.0
        %2725 = vmatprep.subr.mxu0 0.0
        %2726 = vmatpush2.msra.mxu0 0.0
        %2727 = vmatprep.subr.mxu0 0.0
        %2728 = vmatpush2.msra.mxu0 0.0
        %2729 = vmatprep.subr.mxu0 0.0
        %2730 = vmatpush2.msra.mxu0 0.0
        %2731 = vmatprep.subr.mxu0 0.0
        %2732 = vmatpush2.msra.mxu0 0.0
        %2733 = vmatprep.subr.mxu0 0.0
        %2734 = vmatpush2.msra.mxu0 0.0
        %2735 = vmatprep.subr.mxu0 0.0
        %2736 = vmatpush2.msra.mxu0 0.0
        %2737 = vmatprep.subr.mxu0 0.0
        %2738 = vmatpush2.msra.mxu0 0.0
        %2739 = vmatprep.subr.mxu0 0.0
        %2740 = vmatpush2.msra.mxu0 0.0
        %2741 = vmatprep.subr.mxu0 0.0
        %2742 = vmatpush2.msra.mxu0 0.0
        %2743 = vmatprep.subr.mxu0 0.0
        %2744 = vmatpush2.msra.mxu0 0.0
        %2745 = vmatprep.subr.mxu0 0.0
        %2746 = vmatpush2.msra.mxu0 0.0
        %2747 = vmatprep.subr.mxu0 0.0
        %2748 = vmatpush2.msra.mxu0 0.0
        %2749 = vmatprep.subr.mxu0 0.0
        %2750 = vmatpush2.msra.mxu0 0.0
        %2751 = vmatprep.subr.mxu0 0.0
        %2752 = vmatpush2.msra.mxu0 0.0
        %2753 = vmatprep.subr.mxu0 0.0
        %2754 = vmatpush2.msra.mxu0 0.0
        %2755 = vmatprep.mubr.f32.mxu0 0.0
        %2756 = vmatmul.mubr.f32.gmra.mxu0 %v2686
        %v2757 = vpop.f32.mrf.mxu0
        %v2758 = vadd.f32 0.0, %v2757
        %v2759 = vpop.f32.mrf.mxu0
        %2760 = vmatprep.mubr.f32.mxu0 0.0
        %2761 = vmatmul.mubr.f32.gmra.mxu0 %v2689
        %v2762 = vpop.f32.mrf.mxu0
        %v2763 = vadd.f32 0.0, %v2762
        %v2764 = vpop.f32.mrf.mxu0
        %2765 = vdwg.mxu0
        %v2766 = vpack.c.bf16 %v2763, %v2758
        %s2767 = scalar_lea.vmem [#allocation2], 64
        %v2768 = vld [vmem:[%s2767] sm:$0xf]
        %v2769 = vld [vmem:[%s2767 + $0x4] sm:$0xf]
        %v2770 = vld [vmem:[%s2767 + $0x8] sm:$0xf]
        %v2771 = vld [vmem:[%s2767 + $0xc] sm:$0xf]
        %2772 = vrot.lane.b32.xlu0 %v2525, 96
        %v2773 = vpop.permute.xlu0 %2772
        %2774 = vrot.lane.b32.xlu0 %v2529, 96
        %v2775 = vpop.permute.xlu0 %2774
        %2776 = vrot.lane.b32.xlu0 %v2527, 96
        %v2777 = vpop.permute.xlu0 %2776
        %2778 = vrot.lane.b32.xlu0 %v2531, 96
        %v2779 = vpop.permute.xlu0 %2778
        %v2780 = vsel %vm814, %v2773, 0
        %v2782 = vsel %vm814, %v2775, 0
        %v2784 = vsel %vm814, %v2777, 0
        %v2786 = vsel %vm814, %v2779, 0
        %2788 = vmatprep.subr.mxu0 0.0
        %2789 = vmatpush1.xpose.msra.mxu0 0.0
        %2790 = vmatprep.subr.mxu0 0.0
        %2791 = vmatpush1.xpose.msra.mxu0 0.0
        %2792 = vmatprep.subr.mxu0 0.0
        %2793 = vmatpush1.xpose.msra.mxu0 0.0
        %2794 = vmatprep.subr.mxu0 0.0
        %2795 = vmatpush1.xpose.msra.mxu0 0.0
        %2796 = vmatprep.subr.mxu0 0.0
        %2797 = vmatpush1.xpose.msra.mxu0 0.0
        %2798 = vmatprep.subr.mxu0 0.0
        %2799 = vmatpush1.xpose.msra.mxu0 0.0
        %2800 = vmatprep.subr.mxu0 0.0
        %2801 = vmatpush1.xpose.msra.mxu0 0.0
        %2802 = vmatprep.subr.mxu0 0.0
        %2803 = vmatpush1.xpose.msra.mxu0 0.0
        %2804 = vmatprep.subr.mxu0 0.0
        %2805 = vmatpush1.xpose.msra.mxu0 0.0
        %2806 = vmatprep.subr.mxu0 0.0
        %2807 = vmatpush1.xpose.msra.mxu0 0.0
        %2808 = vmatprep.subr.mxu0 0.0
        %2809 = vmatpush1.xpose.msra.mxu0 0.0
        %2810 = vmatprep.subr.mxu0 0.0
        %2811 = vmatpush1.xpose.msra.mxu0 0.0
        %2812 = vmatprep.subr.mxu0 0.0
        %2813 = vmatpush1.xpose.msra.mxu0 0.0
        %2814 = vmatprep.subr.mxu0 0.0
        %2815 = vmatpush1.xpose.msra.mxu0 0.0
        %2816 = vmatprep.subr.mxu0 0.0
        %2817 = vmatpush1.xpose.msra.mxu0 %v2786
        %2818 = vmatprep.subr.mxu0 0.0
        %2819 = vmatpush1.xpose.msra.mxu0 %v2784
        %2820 = vmatprep.subr.mxu0 0.0
        %2821 = vmatpush2.xpose.msra.mxu0 0.0
        %2822 = vmatprep.subr.mxu0 0.0
        %2823 = vmatpush2.xpose.msra.mxu0 0.0
        %2824 = vmatprep.subr.mxu0 0.0
        %2825 = vmatpush2.xpose.msra.mxu0 0.0
        %2826 = vmatprep.subr.mxu0 0.0
        %2827 = vmatpush2.xpose.msra.mxu0 0.0
        %2828 = vmatprep.subr.mxu0 0.0
        %2829 = vmatpush2.xpose.msra.mxu0 0.0
        %2830 = vmatprep.subr.mxu0 0.0
        %2831 = vmatpush2.xpose.msra.mxu0 0.0
        %2832 = vmatprep.subr.mxu0 0.0
        %2833 = vmatpush2.xpose.msra.mxu0 0.0
        %2834 = vmatprep.subr.mxu0 0.0
        %2835 = vmatpush2.xpose.msra.mxu0 0.0
        %2836 = vmatprep.subr.mxu0 0.0
        %2837 = vmatpush2.xpose.msra.mxu0 0.0
        %2838 = vmatprep.subr.mxu0 0.0
        %2839 = vmatpush2.xpose.msra.mxu0 0.0
        %2840 = vmatprep.subr.mxu0 0.0
        %2841 = vmatpush2.xpose.msra.mxu0 0.0
        %2842 = vmatprep.subr.mxu0 0.0
        %2843 = vmatpush2.xpose.msra.mxu0 0.0
        %2844 = vmatprep.subr.mxu0 0.0
        %2845 = vmatpush2.xpose.msra.mxu0 0.0
        %2846 = vmatprep.subr.mxu0 0.0
        %2847 = vmatpush2.xpose.msra.mxu0 0.0
        %2848 = vmatprep.subr.mxu0 0.0
        %2849 = vmatpush2.xpose.msra.mxu0 0.0
        %2850 = vmatprep.subr.mxu0 0.0
        %2851 = vmatpush2.xpose.msra.mxu0 0.0
        %2852 = vmatprep.mubr.f32.mxu0 0.0
        %2853 = vmatmul.mubr.f32.gmra.mxu0 %v2780
        %v2854 = vpop.f32.mrf.mxu0
        %v2855 = vadd.f32 0.0, %v2854
        %v2856 = vpop.f32.mrf.mxu0
        %2857 = vmatprep.mubr.f32.mxu0 0.0
        %2858 = vmatmul.mubr.f32.gmra.mxu0 %v2782
        %v2859 = vpop.f32.mrf.mxu0
        %v2860 = vadd.f32 0.0, %v2859
        %v2861 = vpop.f32.mrf.mxu0
        %2862 = vdwg.mxu0
        %v2863 = vmul.f32 %v2855, 0.17677669
        %v2864 = vmul.f32 %v2860, 0.17677669
        %v2865 = vsel %vm904, %v2863, -inf
        %2866 = vmax.xlane.f32.xlu0 %v2865
        %v2867 = vpop.xlane.xlu0 %2866
        %v2868 = vsel %vm904, %v2864, -inf
        %2869 = vmax.xlane.f32.xlu0 %v2868
        %v2870 = vpop.xlane.xlu0 %2869
        %v2871 = vsub.f32 %v2863, %v2867
        %v2872 = vsub.f32 %v2864, %v2870
        %v2873 = vmul.f32 %v2871, 1.442695
        %v2874 = vpow.pop %v2873
        %v2875 = vmul.f32 %v2872, 1.442695
        %v2876 = vpow.pop %v2875
        %v2877 = vsel %vm904, %v2874, 0.0
        %2878 = vadd.xlane.f32.xlu0 %v2877
        %v2879 = vpop.xlane.xlu0 %2878
        %v2880 = vsel %vm904, %v2876, 0.0
        %2881 = vadd.xlane.f32.xlu0 %v2880
        %v2882 = vpop.xlane.xlu0 %2881
        %v2883 = vrcp.pop %v2879
        %v2884 = vrcp.pop %v2882
        %v2885 = vmul.f32 %v2874, %v2883
        %v2886 = vmul.f32 %v2876, %v2884
        %2889 = vrot.lane.b32.xlu0 %v2568, 96
        %v2890 = vpop.permute.xlu0 %2889
        %2891 = vrot.lane.b32.xlu0 %v2571, 96
        %v2892 = vpop.permute.xlu0 %2891
        %v2896 = vsel %vm904, %v2885, 0
        %v2899 = vsel %vm904, %v2886, 0
        %2901 = vmatprep.subr.mxu0 0.0
        %2902 = vmatpush1.msra.mxu0 0.0
        %2903 = vmatprep.subr.mxu0 0.0
        %2904 = vmatpush1.msra.mxu0 0.0
        %2905 = vmatprep.subr.mxu0 0.0
        %2906 = vmatpush1.msra.mxu0 0.0
        %2907 = vmatprep.subr.mxu0 0.0
        %2908 = vmatpush1.msra.mxu0 0.0
        %2909 = vmatprep.subr.mxu0 0.0
        %2910 = vmatpush1.msra.mxu0 0.0
        %2911 = vmatprep.subr.mxu0 0.0
        %2912 = vmatpush1.msra.mxu0 0.0
        %2913 = vmatprep.subr.mxu0 0.0
        %2914 = vmatpush1.msra.mxu0 0.0
        %2915 = vmatprep.subr.mxu0 0.0
        %2916 = vmatpush1.msra.mxu0 0.0
        %2917 = vmatprep.subr.mxu0 0.0
        %2918 = vmatpush1.msra.mxu0 0.0
        %2919 = vmatprep.subr.mxu0 0.0
        %2920 = vmatpush1.msra.mxu0 0.0
        %2921 = vmatprep.subr.mxu0 0.0
        %2922 = vmatpush1.msra.mxu0 0.0
        %2923 = vmatprep.subr.mxu0 0.0
        %2924 = vmatpush1.msra.mxu0 0.0
        %2925 = vmatprep.subr.mxu0 0.0
        %2926 = vmatpush1.msra.mxu0 0.0
        %2927 = vmatprep.subr.mxu0 0.0
        %2928 = vmatpush1.msra.mxu0 0.0
        %2929 = vmatprep.subr.mxu0 0.0
        %2930 = vmatpush1.msra.mxu0 %v2892
        %2931 = vmatprep.subr.mxu0 0.0
        %2932 = vmatpush1.msra.mxu0 %v2890
        %2933 = vmatprep.subr.mxu0 0.0
        %2934 = vmatpush2.msra.mxu0 0.0
        %2935 = vmatprep.subr.mxu0 0.0
        %2936 = vmatpush2.msra.mxu0 0.0
        %2937 = vmatprep.subr.mxu0 0.0
        %2938 = vmatpush2.msra.mxu0 0.0
        %2939 = vmatprep.subr.mxu0 0.0
        %2940 = vmatpush2.msra.mxu0 0.0
        %2941 = vmatprep.subr.mxu0 0.0
        %2942 = vmatpush2.msra.mxu0 0.0
        %2943 = vmatprep.subr.mxu0 0.0
        %2944 = vmatpush2.msra.mxu0 0.0
        %2945 = vmatprep.subr.mxu0 0.0
        %2946 = vmatpush2.msra.mxu0 0.0
        %2947 = vmatprep.subr.mxu0 0.0
        %2948 = vmatpush2.msra.mxu0 0.0
        %2949 = vmatprep.subr.mxu0 0.0
        %2950 = vmatpush2.msra.mxu0 0.0
        %2951 = vmatprep.subr.mxu0 0.0
        %2952 = vmatpush2.msra.mxu0 0.0
        %2953 = vmatprep.subr.mxu0 0.0
        %2954 = vmatpush2.msra.mxu0 0.0
        %2955 = vmatprep.subr.mxu0 0.0
        %2956 = vmatpush2.msra.mxu0 0.0
        %2957 = vmatprep.subr.mxu0 0.0
        %2958 = vmatpush2.msra.mxu0 0.0
        %2959 = vmatprep.subr.mxu0 0.0
        %2960 = vmatpush2.msra.mxu0 0.0
        %2961 = vmatprep.subr.mxu0 0.0
        %2962 = vmatpush2.msra.mxu0 0.0
        %2963 = vmatprep.subr.mxu0 0.0
        %2964 = vmatpush2.msra.mxu0 0.0
        %2965 = vmatprep.mubr.f32.mxu0 0.0
        %2966 = vmatmul.mubr.f32.gmra.mxu0 %v2896
        %v2967 = vpop.f32.mrf.mxu0
        %v2968 = vadd.f32 0.0, %v2967
        %v2969 = vpop.f32.mrf.mxu0
        %2970 = vmatprep.mubr.f32.mxu0 0.0
        %2971 = vmatmul.mubr.f32.gmra.mxu0 %v2899
        %v2972 = vpop.f32.mrf.mxu0
        %v2973 = vadd.f32 0.0, %v2972
        %v2974 = vpop.f32.mrf.mxu0
        %2975 = vdwg.mxu0
        %v2976 = vpack.c.bf16 %v2973, %v2968
        %s2977 = scalar_lea.vmem [#allocation2], 80
        %v2978 = vld [vmem:[%s2977] sm:$0xf]
        %v2979 = vld [vmem:[%s2977 + $0x4] sm:$0xf]
        %v2980 = vld [vmem:[%s2977 + $0x8] sm:$0xf]
        %v2981 = vld [vmem:[%s2977 + $0xc] sm:$0xf]
        %v2986 = vunpack.c.l.b16 %v2978
        %v2987 = vunpack.c.l.b16 %v2979
        %v2988 = vunpack.c.l.b16 %v2980
        %v2989 = vunpack.c.l.b16 %v2981
        %v2990 = vpack.c.b16 %v2987, %v2986
        %v2991 = vpack.c.b16 %v2989, %v2988
        %v2995 = vsel %vm814, %v2976, 0
        %2997 = vmatprep.subr.bf16.mxu0 0
        %2998 = vmatpush1.bf16.msra.mxu0 0
        %2999 = vmatprep.subr.bf16.mxu0 0
        %3000 = vmatpush1.bf16.msra.mxu0 0
        %3001 = vmatprep.subr.bf16.mxu0 0
        %3002 = vmatpush1.bf16.msra.mxu0 0
        %3003 = vmatprep.subr.bf16.mxu0 0
        %3004 = vmatpush1.bf16.msra.mxu0 0
        %3005 = vmatprep.subr.bf16.mxu0 0
        %3006 = vmatpush1.bf16.msra.mxu0 0
        %3007 = vmatprep.subr.bf16.mxu0 0
        %3008 = vmatpush1.bf16.msra.mxu0 0
        %3009 = vmatprep.subr.bf16.mxu0 0
        %3010 = vmatpush1.bf16.msra.mxu0 %v2991
        %3011 = vmatprep.subr.bf16.mxu0 0
        %3012 = vmatpush1.bf16.msra.mxu0 %v2990
        %3013 = vmatprep.subr.bf16.mxu0 0
        %3014 = vmatpush2.bf16.msra.mxu0 0
        %3015 = vmatprep.subr.bf16.mxu0 0
        %3016 = vmatpush2.bf16.msra.mxu0 0
        %3017 = vmatprep.subr.bf16.mxu0 0
        %3018 = vmatpush2.bf16.msra.mxu0 0
        %3019 = vmatprep.subr.bf16.mxu0 0
        %3020 = vmatpush2.bf16.msra.mxu0 0
        %3021 = vmatprep.subr.bf16.mxu0 0
        %3022 = vmatpush2.bf16.msra.mxu0 0
        %3023 = vmatprep.subr.bf16.mxu0 0
        %3024 = vmatpush2.bf16.msra.mxu0 0
        %3025 = vmatprep.subr.bf16.mxu0 0
        %3026 = vmatpush2.bf16.msra.mxu0 0
        %3027 = vmatprep.subr.bf16.mxu0 0
        %3028 = vmatpush2.bf16.msra.mxu0 0
        %3029 = vmatprep.mubr.bf16.mxu0 0
        %3030 = vmatmul.mubr.bf16.gmra.mxu0 %v2995
        %v3031 = vpop.f32.mrf.mxu0
        %v3032 = vadd.f32 0.0, %v3031
        %v3033 = vpop.f32.mrf.mxu0
        %v3034 = vpop.f32.mrf.mxu0
        %v3035 = vadd.f32 0.0, %v3034
        %v3036 = vpop.f32.mrf.mxu0
        %3037 = vdwg.mxu0
        %v3042 = vunpack.c.l.b16 %v2768
        %v3043 = vunpack.c.l.b16 %v2769
        %v3044 = vunpack.c.l.b16 %v2770
        %v3045 = vunpack.c.l.b16 %v2771
        %v3046 = vpack.c.b16 %v3043, %v3042
        %v3047 = vpack.c.b16 %v3045, %v3044
        %v3051 = vsel %vm814, %v2766, 0
        %3053 = vmatprep.subr.bf16.mxu0 0
        %3054 = vmatpush1.bf16.msra.mxu0 0
        %3055 = vmatprep.subr.bf16.mxu0 0
        %3056 = vmatpush1.bf16.msra.mxu0 0
        %3057 = vmatprep.subr.bf16.mxu0 0
        %3058 = vmatpush1.bf16.msra.mxu0 0
        %3059 = vmatprep.subr.bf16.mxu0 0
        %3060 = vmatpush1.bf16.msra.mxu0 0
        %3061 = vmatprep.subr.bf16.mxu0 0
        %3062 = vmatpush1.bf16.msra.mxu0 0
        %3063 = vmatprep.subr.bf16.mxu0 0
        %3064 = vmatpush1.bf16.msra.mxu0 0
        %3065 = vmatprep.subr.bf16.mxu0 0
        %3066 = vmatpush1.bf16.msra.mxu0 %v3047
        %3067 = vmatprep.subr.bf16.mxu0 0
        %3068 = vmatpush1.bf16.msra.mxu0 %v3046
        %3069 = vmatprep.subr.bf16.mxu0 0
        %3070 = vmatpush2.bf16.msra.mxu0 0
        %3071 = vmatprep.subr.bf16.mxu0 0
        %3072 = vmatpush2.bf16.msra.mxu0 0
        %3073 = vmatprep.subr.bf16.mxu0 0
        %3074 = vmatpush2.bf16.msra.mxu0 0
        %3075 = vmatprep.subr.bf16.mxu0 0
        %3076 = vmatpush2.bf16.msra.mxu0 0
        %3077 = vmatprep.subr.bf16.mxu0 0
        %3078 = vmatpush2.bf16.msra.mxu0 0
        %3079 = vmatprep.subr.bf16.mxu0 0
        %3080 = vmatpush2.bf16.msra.mxu0 0
        %3081 = vmatprep.subr.bf16.mxu0 0
        %3082 = vmatpush2.bf16.msra.mxu0 0
        %3083 = vmatprep.subr.bf16.mxu0 0
        %3084 = vmatpush2.bf16.msra.mxu0 0
        %3085 = vmatprep.mubr.bf16.mxu0 0
        %3086 = vmatmul.mubr.bf16.gmra.mxu0 %v3051
        %v3087 = vpop.f32.mrf.mxu0
        %v3088 = vadd.f32 %v3032, %v3087
        %v3089 = vpop.f32.mrf.mxu0
        %v3090 = vpop.f32.mrf.mxu0
        %v3091 = vadd.f32 %v3035, %v3090
        %v3092 = vpop.f32.mrf.mxu0
        %3093 = vdwg.mxu0
        %3094 = vrot.lane.b32.xlu0 %v2525, 64
        %v3095 = vpop.permute.xlu0 %3094
        %3096 = vrot.lane.b32.xlu0 %v2529, 64
        %v3097 = vpop.permute.xlu0 %3096
        %3098 = vrot.lane.b32.xlu0 %v2527, 64
        %v3099 = vpop.permute.xlu0 %3098
        %3100 = vrot.lane.b32.xlu0 %v2531, 64
        %v3101 = vpop.permute.xlu0 %3100
        %v3102 = vsel %vm814, %v3095, 0
        %v3104 = vsel %vm814, %v3097, 0
        %v3106 = vsel %vm814, %v3099, 0
        %v3108 = vsel %vm814, %v3101, 0
        %3110 = vmatprep.subr.mxu0 0.0
        %3111 = vmatpush1.xpose.msra.mxu0 0.0
        %3112 = vmatprep.subr.mxu0 0.0
        %3113 = vmatpush1.xpose.msra.mxu0 0.0
        %3114 = vmatprep.subr.mxu0 0.0
        %3115 = vmatpush1.xpose.msra.mxu0 0.0
        %3116 = vmatprep.subr.mxu0 0.0
        %3117 = vmatpush1.xpose.msra.mxu0 0.0
        %3118 = vmatprep.subr.mxu0 0.0
        %3119 = vmatpush1.xpose.msra.mxu0 0.0
        %3120 = vmatprep.subr.mxu0 0.0
        %3121 = vmatpush1.xpose.msra.mxu0 0.0
        %3122 = vmatprep.subr.mxu0 0.0
        %3123 = vmatpush1.xpose.msra.mxu0 0.0
        %3124 = vmatprep.subr.mxu0 0.0
        %3125 = vmatpush1.xpose.msra.mxu0 0.0
        %3126 = vmatprep.subr.mxu0 0.0
        %3127 = vmatpush1.xpose.msra.mxu0 0.0
        %3128 = vmatprep.subr.mxu0 0.0
        %3129 = vmatpush1.xpose.msra.mxu0 0.0
        %3130 = vmatprep.subr.mxu0 0.0
        %3131 = vmatpush1.xpose.msra.mxu0 0.0
        %3132 = vmatprep.subr.mxu0 0.0
        %3133 = vmatpush1.xpose.msra.mxu0 0.0
        %3134 = vmatprep.subr.mxu0 0.0
        %3135 = vmatpush1.xpose.msra.mxu0 0.0
        %3136 = vmatprep.subr.mxu0 0.0
        %3137 = vmatpush1.xpose.msra.mxu0 0.0
        %3138 = vmatprep.subr.mxu0 0.0
        %3139 = vmatpush1.xpose.msra.mxu0 %v3108
        %3140 = vmatprep.subr.mxu0 0.0
        %3141 = vmatpush1.xpose.msra.mxu0 %v3106
        %3142 = vmatprep.subr.mxu0 0.0
        %3143 = vmatpush2.xpose.msra.mxu0 0.0
        %3144 = vmatprep.subr.mxu0 0.0
        %3145 = vmatpush2.xpose.msra.mxu0 0.0
        %3146 = vmatprep.subr.mxu0 0.0
        %3147 = vmatpush2.xpose.msra.mxu0 0.0
        %3148 = vmatprep.subr.mxu0 0.0
        %3149 = vmatpush2.xpose.msra.mxu0 0.0
        %3150 = vmatprep.subr.mxu0 0.0
        %3151 = vmatpush2.xpose.msra.mxu0 0.0
        %3152 = vmatprep.subr.mxu0 0.0
        %3153 = vmatpush2.xpose.msra.mxu0 0.0
        %3154 = vmatprep.subr.mxu0 0.0
        %3155 = vmatpush2.xpose.msra.mxu0 0.0
        %3156 = vmatprep.subr.mxu0 0.0
        %3157 = vmatpush2.xpose.msra.mxu0 0.0
        %3158 = vmatprep.subr.mxu0 0.0
        %3159 = vmatpush2.xpose.msra.mxu0 0.0
        %3160 = vmatprep.subr.mxu0 0.0
        %3161 = vmatpush2.xpose.msra.mxu0 0.0
        %3162 = vmatprep.subr.mxu0 0.0
        %3163 = vmatpush2.xpose.msra.mxu0 0.0
        %3164 = vmatprep.subr.mxu0 0.0
        %3165 = vmatpush2.xpose.msra.mxu0 0.0
        %3166 = vmatprep.subr.mxu0 0.0
        %3167 = vmatpush2.xpose.msra.mxu0 0.0
        %3168 = vmatprep.subr.mxu0 0.0
        %3169 = vmatpush2.xpose.msra.mxu0 0.0
        %3170 = vmatprep.subr.mxu0 0.0
        %3171 = vmatpush2.xpose.msra.mxu0 0.0
        %3172 = vmatprep.subr.mxu0 0.0
        %3173 = vmatpush2.xpose.msra.mxu0 0.0
        %3174 = vmatprep.mubr.f32.mxu0 0.0
        %3175 = vmatmul.mubr.f32.gmra.mxu0 %v3102
        %v3176 = vpop.f32.mrf.mxu0
        %v3177 = vadd.f32 0.0, %v3176
        %v3178 = vpop.f32.mrf.mxu0
        %3179 = vmatprep.mubr.f32.mxu0 0.0
        %3180 = vmatmul.mubr.f32.gmra.mxu0 %v3104
        %v3181 = vpop.f32.mrf.mxu0
        %v3182 = vadd.f32 0.0, %v3181
        %v3183 = vpop.f32.mrf.mxu0
        %3184 = vdwg.mxu0
        %v3185 = vmul.f32 %v3177, 0.17677669
        %v3186 = vmul.f32 %v3182, 0.17677669
        %v3187 = vsel %vm904, %v3185, -inf
        %3188 = vmax.xlane.f32.xlu0 %v3187
        %v3189 = vpop.xlane.xlu0 %3188
        %v3190 = vsel %vm904, %v3186, -inf
        %3191 = vmax.xlane.f32.xlu0 %v3190
        %v3192 = vpop.xlane.xlu0 %3191
        %v3193 = vsub.f32 %v3185, %v3189
        %v3194 = vsub.f32 %v3186, %v3192
        %v3195 = vmul.f32 %v3193, 1.442695
        %v3196 = vpow.pop %v3195
        %v3197 = vmul.f32 %v3194, 1.442695
        %v3198 = vpow.pop %v3197
        %v3199 = vsel %vm904, %v3196, 0.0
        %3200 = vadd.xlane.f32.xlu0 %v3199
        %v3201 = vpop.xlane.xlu0 %3200
        %v3202 = vsel %vm904, %v3198, 0.0
        %3203 = vadd.xlane.f32.xlu0 %v3202
        %v3204 = vpop.xlane.xlu0 %3203
        %v3205 = vrcp.pop %v3201
        %v3206 = vrcp.pop %v3204
        %v3207 = vmul.f32 %v3196, %v3205
        %v3208 = vmul.f32 %v3198, %v3206
        %3209 = vrot.lane.b32.xlu0 %v2568, 64
        %v3210 = vpop.permute.xlu0 %3209
        %3211 = vrot.lane.b32.xlu0 %v2571, 64
        %v3212 = vpop.permute.xlu0 %3211
        %v3216 = vsel %vm904, %v3207, 0
        %v3219 = vsel %vm904, %v3208, 0
        %3221 = vmatprep.subr.mxu0 0.0
        %3222 = vmatpush1.msra.mxu0 0.0
        %3223 = vmatprep.subr.mxu0 0.0
        %3224 = vmatpush1.msra.mxu0 0.0
        %3225 = vmatprep.subr.mxu0 0.0
        %3226 = vmatpush1.msra.mxu0 0.0
        %3227 = vmatprep.subr.mxu0 0.0
        %3228 = vmatpush1.msra.mxu0 0.0
        %3229 = vmatprep.subr.mxu0 0.0
        %3230 = vmatpush1.msra.mxu0 0.0
        %3231 = vmatprep.subr.mxu0 0.0
        %3232 = vmatpush1.msra.mxu0 0.0
        %3233 = vmatprep.subr.mxu0 0.0
        %3234 = vmatpush1.msra.mxu0 0.0
        %3235 = vmatprep.subr.mxu0 0.0
        %3236 = vmatpush1.msra.mxu0 0.0
        %3237 = vmatprep.subr.mxu0 0.0
        %3238 = vmatpush1.msra.mxu0 0.0
        %3239 = vmatprep.subr.mxu0 0.0
        %3240 = vmatpush1.msra.mxu0 0.0
        %3241 = vmatprep.subr.mxu0 0.0
        %3242 = vmatpush1.msra.mxu0 0.0
        %3243 = vmatprep.subr.mxu0 0.0
        %3244 = vmatpush1.msra.mxu0 0.0
        %3245 = vmatprep.subr.mxu0 0.0
        %3246 = vmatpush1.msra.mxu0 0.0
        %3247 = vmatprep.subr.mxu0 0.0
        %3248 = vmatpush1.msra.mxu0 0.0
        %3249 = vmatprep.subr.mxu0 0.0
        %3250 = vmatpush1.msra.mxu0 %v3212
        %3251 = vmatprep.subr.mxu0 0.0
        %3252 = vmatpush1.msra.mxu0 %v3210
        %3253 = vmatprep.subr.mxu0 0.0
        %3254 = vmatpush2.msra.mxu0 0.0
        %3255 = vmatprep.subr.mxu0 0.0
        %3256 = vmatpush2.msra.mxu0 0.0
        %3257 = vmatprep.subr.mxu0 0.0
        %3258 = vmatpush2.msra.mxu0 0.0
        %3259 = vmatprep.subr.mxu0 0.0
        %3260 = vmatpush2.msra.mxu0 0.0
        %3261 = vmatprep.subr.mxu0 0.0
        %3262 = vmatpush2.msra.mxu0 0.0
        %3263 = vmatprep.subr.mxu0 0.0
        %3264 = vmatpush2.msra.mxu0 0.0
        %3265 = vmatprep.subr.mxu0 0.0
        %3266 = vmatpush2.msra.mxu0 0.0
        %3267 = vmatprep.subr.mxu0 0.0
        %3268 = vmatpush2.msra.mxu0 0.0
        %3269 = vmatprep.subr.mxu0 0.0
        %3270 = vmatpush2.msra.mxu0 0.0
        %3271 = vmatprep.subr.mxu0 0.0
        %3272 = vmatpush2.msra.mxu0 0.0
        %3273 = vmatprep.subr.mxu0 0.0
        %3274 = vmatpush2.msra.mxu0 0.0
        %3275 = vmatprep.subr.mxu0 0.0
        %3276 = vmatpush2.msra.mxu0 0.0
        %3277 = vmatprep.subr.mxu0 0.0
        %3278 = vmatpush2.msra.mxu0 0.0
        %3279 = vmatprep.subr.mxu0 0.0
        %3280 = vmatpush2.msra.mxu0 0.0
        %3281 = vmatprep.subr.mxu0 0.0
        %3282 = vmatpush2.msra.mxu0 0.0
        %3283 = vmatprep.subr.mxu0 0.0
        %3284 = vmatpush2.msra.mxu0 0.0
        %3285 = vmatprep.mubr.f32.mxu0 0.0
        %3286 = vmatmul.mubr.f32.gmra.mxu0 %v3216
        %v3287 = vpop.f32.mrf.mxu0
        %v3288 = vadd.f32 0.0, %v3287
        %v3289 = vpop.f32.mrf.mxu0
        %3290 = vmatprep.mubr.f32.mxu0 0.0
        %3291 = vmatmul.mubr.f32.gmra.mxu0 %v3219
        %v3292 = vpop.f32.mrf.mxu0
        %v3293 = vadd.f32 0.0, %v3292
        %v3294 = vpop.f32.mrf.mxu0
        %3295 = vdwg.mxu0
        %v3296 = vpack.c.bf16 %v3293, %v3288
        %s3297 = scalar_lea.vmem [#allocation2], 96
        %v3298 = vld [vmem:[%s3297] sm:$0xf]
        %v3299 = vld [vmem:[%s3297 + $0x4] sm:$0xf]
        %v3300 = vld [vmem:[%s3297 + $0x8] sm:$0xf]
        %v3301 = vld [vmem:[%s3297 + $0xc] sm:$0xf]
        %v3306 = vunpack.c.l.b16 %v3298
        %v3307 = vunpack.c.l.b16 %v3299
        %v3308 = vunpack.c.l.b16 %v3300
        %v3309 = vunpack.c.l.b16 %v3301
        %v3310 = vpack.c.b16 %v3307, %v3306
        %v3311 = vpack.c.b16 %v3309, %v3308
        %v3315 = vsel %vm814, %v3296, 0
        %3317 = vmatprep.subr.bf16.mxu0 0
        %3318 = vmatpush1.bf16.msra.mxu0 0
        %3319 = vmatprep.subr.bf16.mxu0 0
        %3320 = vmatpush1.bf16.msra.mxu0 0
        %3321 = vmatprep.subr.bf16.mxu0 0
        %3322 = vmatpush1.bf16.msra.mxu0 0
        %3323 = vmatprep.subr.bf16.mxu0 0
        %3324 = vmatpush1.bf16.msra.mxu0 0
        %3325 = vmatprep.subr.bf16.mxu0 0
        %3326 = vmatpush1.bf16.msra.mxu0 0
        %3327 = vmatprep.subr.bf16.mxu0 0
        %3328 = vmatpush1.bf16.msra.mxu0 0
        %3329 = vmatprep.subr.bf16.mxu0 0
        %3330 = vmatpush1.bf16.msra.mxu0 %v3311
        %3331 = vmatprep.subr.bf16.mxu0 0
        %3332 = vmatpush1.bf16.msra.mxu0 %v3310
        %3333 = vmatprep.subr.bf16.mxu0 0
        %3334 = vmatpush2.bf16.msra.mxu0 0
        %3335 = vmatprep.subr.bf16.mxu0 0
        %3336 = vmatpush2.bf16.msra.mxu0 0
        %3337 = vmatprep.subr.bf16.mxu0 0
        %3338 = vmatpush2.bf16.msra.mxu0 0
        %3339 = vmatprep.subr.bf16.mxu0 0
        %3340 = vmatpush2.bf16.msra.mxu0 0
        %3341 = vmatprep.subr.bf16.mxu0 0
        %3342 = vmatpush2.bf16.msra.mxu0 0
        %3343 = vmatprep.subr.bf16.mxu0 0
        %3344 = vmatpush2.bf16.msra.mxu0 0
        %3345 = vmatprep.subr.bf16.mxu0 0
        %3346 = vmatpush2.bf16.msra.mxu0 0
        %3347 = vmatprep.subr.bf16.mxu0 0
        %3348 = vmatpush2.bf16.msra.mxu0 0
        %3349 = vmatprep.mubr.bf16.mxu0 0
        %3350 = vmatmul.mubr.bf16.gmra.mxu0 %v3315
        %v3351 = vpop.f32.mrf.mxu0
        %v3352 = vadd.f32 0.0, %v3351
        %v3353 = vpop.f32.mrf.mxu0
        %v3354 = vpop.f32.mrf.mxu0
        %v3355 = vadd.f32 0.0, %v3354
        %v3356 = vpop.f32.mrf.mxu0
        %3357 = vdwg.mxu0
        %v3358 = vadd.f32 %v3088, %v3352
        %v3359 = vadd.f32 %v3091, %v3355
        %3360 = vrot.lane.b32.xlu0 %v2525, 32
        %v3361 = vpop.permute.xlu0 %3360
        %3362 = vrot.lane.b32.xlu0 %v2529, 32
        %v3363 = vpop.permute.xlu0 %3362
        %3364 = vrot.lane.b32.xlu0 %v2527, 32
        %v3365 = vpop.permute.xlu0 %3364
        %3366 = vrot.lane.b32.xlu0 %v2531, 32
        %v3367 = vpop.permute.xlu0 %3366
        %v3368 = vsel %vm814, %v3361, 0
        %v3370 = vsel %vm814, %v3363, 0
        %v3372 = vsel %vm814, %v3365, 0
        %v3374 = vsel %vm814, %v3367, 0
        %3376 = vmatprep.subr.mxu0 0.0
        %3377 = vmatpush1.xpose.msra.mxu0 0.0
        %3378 = vmatprep.subr.mxu0 0.0
        %3379 = vmatpush1.xpose.msra.mxu0 0.0
        %3380 = vmatprep.subr.mxu0 0.0
        %3381 = vmatpush1.xpose.msra.mxu0 0.0
        %3382 = vmatprep.subr.mxu0 0.0
        %3383 = vmatpush1.xpose.msra.mxu0 0.0
        %3384 = vmatprep.subr.mxu0 0.0
        %3385 = vmatpush1.xpose.msra.mxu0 0.0
        %3386 = vmatprep.subr.mxu0 0.0
        %3387 = vmatpush1.xpose.msra.mxu0 0.0
        %3388 = vmatprep.subr.mxu0 0.0
        %3389 = vmatpush1.xpose.msra.mxu0 0.0
        %3390 = vmatprep.subr.mxu0 0.0
        %3391 = vmatpush1.xpose.msra.mxu0 0.0
        %3392 = vmatprep.subr.mxu0 0.0
        %3393 = vmatpush1.xpose.msra.mxu0 0.0
        %3394 = vmatprep.subr.mxu0 0.0
        %3395 = vmatpush1.xpose.msra.mxu0 0.0
        %3396 = vmatprep.subr.mxu0 0.0
        %3397 = vmatpush1.xpose.msra.mxu0 0.0
        %3398 = vmatprep.subr.mxu0 0.0
        %3399 = vmatpush1.xpose.msra.mxu0 0.0
        %3400 = vmatprep.subr.mxu0 0.0
        %3401 = vmatpush1.xpose.msra.mxu0 0.0
        %3402 = vmatprep.subr.mxu0 0.0
        %3403 = vmatpush1.xpose.msra.mxu0 0.0
        %3404 = vmatprep.subr.mxu0 0.0
        %3405 = vmatpush1.xpose.msra.mxu0 %v3374
        %3406 = vmatprep.subr.mxu0 0.0
        %3407 = vmatpush1.xpose.msra.mxu0 %v3372
        %3408 = vmatprep.subr.mxu0 0.0
        %3409 = vmatpush2.xpose.msra.mxu0 0.0
        %3410 = vmatprep.subr.mxu0 0.0
        %3411 = vmatpush2.xpose.msra.mxu0 0.0
        %3412 = vmatprep.subr.mxu0 0.0
        %3413 = vmatpush2.xpose.msra.mxu0 0.0
        %3414 = vmatprep.subr.mxu0 0.0
        %3415 = vmatpush2.xpose.msra.mxu0 0.0
        %3416 = vmatprep.subr.mxu0 0.0
        %3417 = vmatpush2.xpose.msra.mxu0 0.0
        %3418 = vmatprep.subr.mxu0 0.0
        %3419 = vmatpush2.xpose.msra.mxu0 0.0
        %3420 = vmatprep.subr.mxu0 0.0
        %3421 = vmatpush2.xpose.msra.mxu0 0.0
        %3422 = vmatprep.subr.mxu0 0.0
        %3423 = vmatpush2.xpose.msra.mxu0 0.0
        %3424 = vmatprep.subr.mxu0 0.0
        %3425 = vmatpush2.xpose.msra.mxu0 0.0
        %3426 = vmatprep.subr.mxu0 0.0
        %3427 = vmatpush2.xpose.msra.mxu0 0.0
        %3428 = vmatprep.subr.mxu0 0.0
        %3429 = vmatpush2.xpose.msra.mxu0 0.0
        %3430 = vmatprep.subr.mxu0 0.0
        %3431 = vmatpush2.xpose.msra.mxu0 0.0
        %3432 = vmatprep.subr.mxu0 0.0
        %3433 = vmatpush2.xpose.msra.mxu0 0.0
        %3434 = vmatprep.subr.mxu0 0.0
        %3435 = vmatpush2.xpose.msra.mxu0 0.0
        %3436 = vmatprep.subr.mxu0 0.0
        %3437 = vmatpush2.xpose.msra.mxu0 0.0
        %3438 = vmatprep.subr.mxu0 0.0
        %3439 = vmatpush2.xpose.msra.mxu0 0.0
        %3440 = vmatprep.mubr.f32.mxu0 0.0
        %3441 = vmatmul.mubr.f32.gmra.mxu0 %v3368
        %v3442 = vpop.f32.mrf.mxu0
        %v3443 = vadd.f32 0.0, %v3442
        %v3444 = vpop.f32.mrf.mxu0
        %3445 = vmatprep.mubr.f32.mxu0 0.0
        %3446 = vmatmul.mubr.f32.gmra.mxu0 %v3370
        %v3447 = vpop.f32.mrf.mxu0
        %v3448 = vadd.f32 0.0, %v3447
        %v3449 = vpop.f32.mrf.mxu0
        %3450 = vdwg.mxu0
        %v3451 = vmul.f32 %v3443, 0.17677669
        %v3452 = vmul.f32 %v3448, 0.17677669
        %v3453 = vsel %vm904, %v3451, -inf
        %3454 = vmax.xlane.f32.xlu0 %v3453
        %v3455 = vpop.xlane.xlu0 %3454
        %v3456 = vsel %vm904, %v3452, -inf
        %3457 = vmax.xlane.f32.xlu0 %v3456
        %v3458 = vpop.xlane.xlu0 %3457
        %v3459 = vsub.f32 %v3451, %v3455
        %v3460 = vsub.f32 %v3452, %v3458
        %v3461 = vmul.f32 %v3459, 1.442695
        %v3462 = vpow.pop %v3461
        %v3463 = vmul.f32 %v3460, 1.442695
        %v3464 = vpow.pop %v3463
        %v3465 = vsel %vm904, %v3462, 0.0
        %3466 = vadd.xlane.f32.xlu0 %v3465
        %v3467 = vpop.xlane.xlu0 %3466
        %v3468 = vsel %vm904, %v3464, 0.0
        %3469 = vadd.xlane.f32.xlu0 %v3468
        %v3470 = vpop.xlane.xlu0 %3469
        %v3471 = vrcp.pop %v3467
        %v3472 = vrcp.pop %v3470
        %v3473 = vmul.f32 %v3462, %v3471
        %v3474 = vmul.f32 %v3464, %v3472
        %3475 = vrot.lane.b32.xlu0 %v2568, 32
        %v3476 = vpop.permute.xlu0 %3475
        %3477 = vrot.lane.b32.xlu0 %v2571, 32
        %v3478 = vpop.permute.xlu0 %3477
        %v3482 = vsel %vm904, %v3473, 0
        %v3485 = vsel %vm904, %v3474, 0
        %3487 = vmatprep.subr.mxu0 0.0
        %3488 = vmatpush1.msra.mxu0 0.0
        %3489 = vmatprep.subr.mxu0 0.0
        %3490 = vmatpush1.msra.mxu0 0.0
        %3491 = vmatprep.subr.mxu0 0.0
        %3492 = vmatpush1.msra.mxu0 0.0
        %3493 = vmatprep.subr.mxu0 0.0
        %3494 = vmatpush1.msra.mxu0 0.0
        %3495 = vmatprep.subr.mxu0 0.0
        %3496 = vmatpush1.msra.mxu0 0.0
        %3497 = vmatprep.subr.mxu0 0.0
        %3498 = vmatpush1.msra.mxu0 0.0
        %3499 = vmatprep.subr.mxu0 0.0
        %3500 = vmatpush1.msra.mxu0 0.0
        %3501 = vmatprep.subr.mxu0 0.0
        %3502 = vmatpush1.msra.mxu0 0.0
        %3503 = vmatprep.subr.mxu0 0.0
        %3504 = vmatpush1.msra.mxu0 0.0
        %3505 = vmatprep.subr.mxu0 0.0
        %3506 = vmatpush1.msra.mxu0 0.0
        %3507 = vmatprep.subr.mxu0 0.0
        %3508 = vmatpush1.msra.mxu0 0.0
        %3509 = vmatprep.subr.mxu0 0.0
        %3510 = vmatpush1.msra.mxu0 0.0
        %3511 = vmatprep.subr.mxu0 0.0
        %3512 = vmatpush1.msra.mxu0 0.0
        %3513 = vmatprep.subr.mxu0 0.0
        %3514 = vmatpush1.msra.mxu0 0.0
        %3515 = vmatprep.subr.mxu0 0.0
        %3516 = vmatpush1.msra.mxu0 %v3478
        %3517 = vmatprep.subr.mxu0 0.0
        %3518 = vmatpush1.msra.mxu0 %v3476
        %3519 = vmatprep.subr.mxu0 0.0
        %3520 = vmatpush2.msra.mxu0 0.0
        %3521 = vmatprep.subr.mxu0 0.0
        %3522 = vmatpush2.msra.mxu0 0.0
        %3523 = vmatprep.subr.mxu0 0.0
        %3524 = vmatpush2.msra.mxu0 0.0
        %3525 = vmatprep.subr.mxu0 0.0
        %3526 = vmatpush2.msra.mxu0 0.0
        %3527 = vmatprep.subr.mxu0 0.0
        %3528 = vmatpush2.msra.mxu0 0.0
        %3529 = vmatprep.subr.mxu0 0.0
        %3530 = vmatpush2.msra.mxu0 0.0
        %3531 = vmatprep.subr.mxu0 0.0
        %3532 = vmatpush2.msra.mxu0 0.0
        %3533 = vmatprep.subr.mxu0 0.0
        %3534 = vmatpush2.msra.mxu0 0.0
        %3535 = vmatprep.subr.mxu0 0.0
        %3536 = vmatpush2.msra.mxu0 0.0
        %3537 = vmatprep.subr.mxu0 0.0
        %3538 = vmatpush2.msra.mxu0 0.0
        %3539 = vmatprep.subr.mxu0 0.0
        %3540 = vmatpush2.msra.mxu0 0.0
        %3541 = vmatprep.subr.mxu0 0.0
        %3542 = vmatpush2.msra.mxu0 0.0
        %3543 = vmatprep.subr.mxu0 0.0
        %3544 = vmatpush2.msra.mxu0 0.0
        %3545 = vmatprep.subr.mxu0 0.0
        %3546 = vmatpush2.msra.mxu0 0.0
        %3547 = vmatprep.subr.mxu0 0.0
        %3548 = vmatpush2.msra.mxu0 0.0
        %3549 = vmatprep.subr.mxu0 0.0
        %3550 = vmatpush2.msra.mxu0 0.0
        %3551 = vmatprep.mubr.f32.mxu0 0.0
        %3552 = vmatmul.mubr.f32.gmra.mxu0 %v3482
        %v3553 = vpop.f32.mrf.mxu0
        %v3554 = vadd.f32 0.0, %v3553
        %v3555 = vpop.f32.mrf.mxu0
        %3556 = vmatprep.mubr.f32.mxu0 0.0
        %3557 = vmatmul.mubr.f32.gmra.mxu0 %v3485
        %v3558 = vpop.f32.mrf.mxu0
        %v3559 = vadd.f32 0.0, %v3558
        %v3560 = vpop.f32.mrf.mxu0
        %3561 = vdwg.mxu0
        %v3562 = vpack.c.bf16 %v3559, %v3554
        %s3563 = scalar_lea.vmem [#allocation2], 112
        %v3564 = vld [vmem:[%s3563] sm:$0xf]
        %v3565 = vld [vmem:[%s3563 + $0x4] sm:$0xf]
        %v3566 = vld [vmem:[%s3563 + $0x8] sm:$0xf]
        %v3567 = vld [vmem:[%s3563 + $0xc] sm:$0xf]
        %v3572 = vunpack.c.l.b16 %v3564
        %v3573 = vunpack.c.l.b16 %v3565
        %v3574 = vunpack.c.l.b16 %v3566
        %v3575 = vunpack.c.l.b16 %v3567
        %v3576 = vpack.c.b16 %v3573, %v3572
        %v3577 = vpack.c.b16 %v3575, %v3574
        %v3581 = vsel %vm814, %v3562, 0
        %3583 = vmatprep.subr.bf16.mxu0 0
        %3584 = vmatpush1.bf16.msra.mxu0 0
        %3585 = vmatprep.subr.bf16.mxu0 0
        %3586 = vmatpush1.bf16.msra.mxu0 0
        %3587 = vmatprep.subr.bf16.mxu0 0
        %3588 = vmatpush1.bf16.msra.mxu0 0
        %3589 = vmatprep.subr.bf16.mxu0 0
        %3590 = vmatpush1.bf16.msra.mxu0 0
        %3591 = vmatprep.subr.bf16.mxu0 0
        %3592 = vmatpush1.bf16.msra.mxu0 0
        %3593 = vmatprep.subr.bf16.mxu0 0
        %3594 = vmatpush1.bf16.msra.mxu0 0
        %3595 = vmatprep.subr.bf16.mxu0 0
        %3596 = vmatpush1.bf16.msra.mxu0 %v3577
        %3597 = vmatprep.subr.bf16.mxu0 0
        %3598 = vmatpush1.bf16.msra.mxu0 %v3576
        %3599 = vmatprep.subr.bf16.mxu0 0
        %3600 = vmatpush2.bf16.msra.mxu0 0
        %3601 = vmatprep.subr.bf16.mxu0 0
        %3602 = vmatpush2.bf16.msra.mxu0 0
        %3603 = vmatprep.subr.bf16.mxu0 0
        %3604 = vmatpush2.bf16.msra.mxu0 0
        %3605 = vmatprep.subr.bf16.mxu0 0
        %3606 = vmatpush2.bf16.msra.mxu0 0
        %3607 = vmatprep.subr.bf16.mxu0 0
        %3608 = vmatpush2.bf16.msra.mxu0 0
        %3609 = vmatprep.subr.bf16.mxu0 0
        %3610 = vmatpush2.bf16.msra.mxu0 0
        %3611 = vmatprep.subr.bf16.mxu0 0
        %3612 = vmatpush2.bf16.msra.mxu0 0
        %3613 = vmatprep.subr.bf16.mxu0 0
        %3614 = vmatpush2.bf16.msra.mxu0 0
        %3615 = vmatprep.mubr.bf16.mxu0 0
        %3616 = vmatmul.mubr.bf16.gmra.mxu0 %v3581
        %v3617 = vpop.f32.mrf.mxu0
        %v3618 = vadd.f32 0.0, %v3617
        %v3619 = vpop.f32.mrf.mxu0
        %v3620 = vpop.f32.mrf.mxu0
        %v3621 = vadd.f32 0.0, %v3620
        %v3622 = vpop.f32.mrf.mxu0
        %3623 = vdwg.mxu0
        %v3624 = vadd.f32 %v3358, %v3618
        %v3625 = vadd.f32 %v3359, %v3621
        %v3626 = vadd.f32 %v2272, %v3624
        %v3627 = vadd.f32 %v2273, %v3625
        %v3628 = vlaneseq
        %v3629 = vshrl.u32 %v3628, 7
        %v3630 = vsub.s32 4, %v3629
        %v3631 = vrot.slane %v2275, %v3630
        %v3632 = vadd.f32 %v3626, %v3631
        %v3633 = vadd.f32 %v3627, %v3631
        %3634 = vadd.xlane.f32.xlu0 %v3632
        %v3635 = vpop.xlane.xlu0 %3634
        %3636 = vadd.xlane.f32.xlu0 %v3633
        %v3637 = vpop.xlane.xlu0 %3636
        %v3638 = vmul.f32 %v3635, %v521
        %v3639 = vmul.f32 %v3637, %v521
        %v3640 = vsub.f32 %v3632, %v3638
        %v3641 = vsub.f32 %v3633, %v3639
        %v3642 = vmul.f32 %v3640, %v3640
        %v3643 = vmul.f32 %v3641, %v3641
        %3644 = vadd.xlane.f32.xlu0 %v3642
        %v3645 = vpop.xlane.xlu0 %3644
        %3646 = vadd.xlane.f32.xlu0 %v3643
        %v3647 = vpop.xlane.xlu0 %3646
        %v3648 = vmul.f32 %v3645, %v521
        %v3649 = vmul.f32 %v3647, %v521
        %v3650 = vadd.f32 %v3648, 1e-06
        %v3651 = vadd.f32 %v3649, 1e-06
        %v3652 = vrsqrt.pop %v3650
        %v3653 = vrsqrt.pop %v3651
        %v3654 = vmul.f32 %v3640, %v3652
        %v3655 = vmul.f32 %v3641, %v3653
        %v3656 = vlaneseq
        %v3657 = vshrl.u32 %v3656, 7
        %v3658 = vsub.s32 2, %v3657
        %v3659 = vrot.slane %v2275, %v3658
        %v3660 = vmul.f32 %v3654, %v3659
        %v3661 = vmul.f32 %v3655, %v3659
        %v3662 = vlaneseq
        %v3663 = vshrl.u32 %v3662, 7
        %v3664 = vsub.s32 3, %v3663
        %v3665 = vrot.slane %v2275, %v3664
        %v3666 = vadd.f32 %v3660, %v3665
        %v3667 = vadd.f32 %v3661, %v3665
        %v3668 = vpack.c.bf16 %v3667, %v3666
        %s3669 = scalar_lea.vmem %s6, 128
        %v3670 = vld [vmem:[%s3669] sm:$0xff]
        %v3671 = vld [vmem:[%s3669 + $0x8] sm:$0xff]
        %v3672 = vld [vmem:[%s3669 + $0x10] sm:$0xff]
        %v3673 = vld [vmem:[%s3669 + $0x18] sm:$0xff]
        %v3674 = vld [vmem:[%s3669 + $0x20] sm:$0xff]
        %v3675 = vld [vmem:[%s3669 + $0x28] sm:$0xff]
        %v3676 = vld [vmem:[%s3669 + $0x30] sm:$0xff]
        %v3677 = vld [vmem:[%s3669 + $0x38] sm:$0xff]
        %v3678 = vld [vmem:[%s3669 + $0x40] sm:$0xff]
        %v3679 = vld [vmem:[%s3669 + $0x48] sm:$0xff]
        %v3680 = vld [vmem:[%s3669 + $0x50] sm:$0xff]
        %v3681 = vld [vmem:[%s3669 + $0x58] sm:$0xff]
        %v3682 = vld [vmem:[%s3669 + $0x60] sm:$0xff]
        %v3683 = vld [vmem:[%s3669 + $0x68] sm:$0xff]
        %v3684 = vld [vmem:[%s3669 + $0x70] sm:$0xff]
        %v3685 = vld [vmem:[%s3669 + $0x78] sm:$0xff]
        %s3686 = scalar_lea.vmem %s7, 2
        %v3687 = vld [vmem:[%s3686] sm:$0x3]
        %v3689 = vlaneseq
        %v3690 = vshrl.u32 %v3689, 7
        %v3691 = vsub.s32 0, %v3690
        %v3692 = vrot.slane %v3687, %v3691
        %v3693 = vlaneseq
        %v3694 = vshrl.u32 %v3693, 7
        %v3695 = vsub.s32 1, %v3694
        %v3696 = vrot.slane %v3687, %v3695
        %v3715 = vunpack.c.l.b16 %v3670
        %v3716 = vunpack.c.h.b16 %v3670
        %v3717 = vunpack.c.l.b16 %v3671
        %v3718 = vunpack.c.h.b16 %v3671
        %v3719 = vunpack.c.l.b16 %v3672
        %v3720 = vunpack.c.h.b16 %v3672
        %v3721 = vunpack.c.l.b16 %v3673
        %v3722 = vunpack.c.h.b16 %v3673
        %v3723 = vunpack.c.l.b16 %v3674
        %v3724 = vunpack.c.h.b16 %v3674
        %v3725 = vunpack.c.l.b16 %v3675
        %v3726 = vunpack.c.h.b16 %v3675
        %v3727 = vunpack.c.l.b16 %v3676
        %v3728 = vunpack.c.h.b16 %v3676
        %v3729 = vunpack.c.l.b16 %v3677
        %v3730 = vunpack.c.h.b16 %v3677
        %v3731 = vunpack.c.l.b16 %v3678
        %v3732 = vunpack.c.h.b16 %v3678
        %v3733 = vunpack.c.l.b16 %v3679
        %v3734 = vunpack.c.h.b16 %v3679
        %v3735 = vunpack.c.l.b16 %v3680
        %v3736 = vunpack.c.h.b16 %v3680
        %v3737 = vunpack.c.l.b16 %v3681
        %v3738 = vunpack.c.h.b16 %v3681
        %v3739 = vunpack.c.l.b16 %v3682
        %v3740 = vunpack.c.h.b16 %v3682
        %v3741 = vunpack.c.l.b16 %v3683
        %v3742 = vunpack.c.h.b16 %v3683
        %v3743 = vunpack.c.l.b16 %v3684
        %v3744 = vunpack.c.h.b16 %v3684
        %v3745 = vunpack.c.l.b16 %v3685
        %v3746 = vunpack.c.h.b16 %v3685
        %v3747 = vpack.c.b16 %v3717, %v3715
        %v3748 = vpack.c.b16 %v3718, %v3716
        %v3749 = vpack.c.b16 %v3721, %v3719
        %v3750 = vpack.c.b16 %v3722, %v3720
        %v3751 = vpack.c.b16 %v3725, %v3723
        %v3752 = vpack.c.b16 %v3726, %v3724
        %v3753 = vpack.c.b16 %v3729, %v3727
        %v3754 = vpack.c.b16 %v3730, %v3728
        %v3755 = vpack.c.b16 %v3733, %v3731
        %v3756 = vpack.c.b16 %v3734, %v3732
        %v3757 = vpack.c.b16 %v3737, %v3735
        %v3758 = vpack.c.b16 %v3738, %v3736
        %v3759 = vpack.c.b16 %v3741, %v3739
        %v3760 = vpack.c.b16 %v3742, %v3740
        %v3761 = vpack.c.b16 %v3745, %v3743
        %v3762 = vpack.c.b16 %v3746, %v3744
        %3779 = vmatprep.subr.bf16.mxu0 %v3762
        %3780 = vmatpush1.bf16.msra.mxu0 %v3761
        %3781 = vmatprep.subr.bf16.mxu0 %v3760
        %3782 = vmatpush1.bf16.msra.mxu0 %v3759
        %3783 = vmatprep.subr.bf16.mxu0 %v3758
        %3784 = vmatpush1.bf16.msra.mxu0 %v3757
        %3785 = vmatprep.subr.bf16.mxu0 %v3756
        %3786 = vmatpush1.bf16.msra.mxu0 %v3755
        %3787 = vmatprep.subr.bf16.mxu0 %v3754
        %3788 = vmatpush1.bf16.msra.mxu0 %v3753
        %3789 = vmatprep.subr.bf16.mxu0 %v3752
        %3790 = vmatpush1.bf16.msra.mxu0 %v3751
        %3791 = vmatprep.subr.bf16.mxu0 %v3750
        %3792 = vmatpush1.bf16.msra.mxu0 %v3749
        %3793 = vmatprep.subr.bf16.mxu0 %v3748
        %3794 = vmatpush1.bf16.msra.mxu0 %v3747
        %3795 = vmatprep.subr.bf16.mxu0 0
        %3796 = vmatpush2.bf16.msra.mxu0 0
        %3797 = vmatprep.subr.bf16.mxu0 0
        %3798 = vmatpush2.bf16.msra.mxu0 0
        %3799 = vmatprep.subr.bf16.mxu0 0
        %3800 = vmatpush2.bf16.msra.mxu0 0
        %3801 = vmatprep.subr.bf16.mxu0 0
        %3802 = vmatpush2.bf16.msra.mxu0 0
        %3803 = vmatprep.subr.bf16.mxu0 0
        %3804 = vmatpush2.bf16.msra.mxu0 0
        %3805 = vmatprep.subr.bf16.mxu0 0
        %3806 = vmatpush2.bf16.msra.mxu0 0
        %3807 = vmatprep.subr.bf16.mxu0 0
        %3808 = vmatpush2.bf16.msra.mxu0 0
        %3809 = vmatprep.subr.bf16.mxu0 0
        %3810 = vmatpush2.bf16.msra.mxu0 0
        %3811 = vmatprep.mubr.bf16.mxu0 0
        %3812 = vmatmul.mubr.bf16.gmra.mxu0 %v3668
        %v3813 = vpop.f32.mrf.mxu0
        %v3814 = vadd.f32 %v3692, %v3813
        %v3815 = vpop.f32.mrf.mxu0
        %v3816 = vadd.f32 %v3696, %v3815
        %v3817 = vpop.f32.mrf.mxu0
        %v3818 = vadd.f32 %v3692, %v3817
        %v3819 = vpop.f32.mrf.mxu0
        %v3820 = vadd.f32 %v3696, %v3819
        %3821 = vdwg.mxu0
        %v3822 = vmul.f32 %v3814, 0.5
        %v3823 = vmul.f32 %v3816, 0.5
        %v3824 = vmul.f32 %v3818, 0.5
        %v3825 = vmul.f32 %v3820, 0.5
        %v3826 = vmul.f32 %v3814, 0.044715
        %v3827 = vmul.f32 %v3816, 0.044715
        %v3828 = vmul.f32 %v3818, 0.044715
        %v3829 = vmul.f32 %v3820, 0.044715
        %v3830 = vmul.f32 %v3826, %v3814
        %v3831 = vmul.f32 %v3827, %v3816
        %v3832 = vmul.f32 %v3828, %v3818
        %v3833 = vmul.f32 %v3829, %v3820
        %v3834 = vmul.f32 %v3830, %v3814
        %v3835 = vmul.f32 %v3831, %v3816
        %v3836 = vmul.f32 %v3832, %v3818
        %v3837 = vmul.f32 %v3833, %v3820
        %v3838 = vadd.f32 %v3814, %v3834
        %v3839 = vadd.f32 %v3816, %v3835
        %v3840 = vadd.f32 %v3818, %v3836
        %v3841 = vadd.f32 %v3820, %v3837
        %v3842 = vmul.f32 %v3838, 0.7978846
        %v3843 = vmul.f32 %v3839, 0.7978846
        %v3844 = vmul.f32 %v3840, 0.7978846
        %v3845 = vmul.f32 %v3841, 0.7978846
        %v3846 = vtanh.pop %v3842
        %v3847 = vtanh.pop %v3843
        %v3848 = vtanh.pop %v3844
        %v3849 = vtanh.pop %v3845
        %v3850 = vadd.f32 %v3846, 1.0
        %v3851 = vadd.f32 %v3847, 1.0
        %v3852 = vadd.f32 %v3848, 1.0
        %v3853 = vadd.f32 %v3849, 1.0
        %v3854 = vmul.f32 %v3822, %v3850
        %v3855 = vmul.f32 %v3823, %v3851
        %v3856 = vmul.f32 %v3824, %v3852
        %v3857 = vmul.f32 %v3825, %v3853
        %v3858 = vpack.c.bf16 %v3856, %v3854
        %v3859 = vpack.c.bf16 %v3857, %v3855
        %s3860 = scalar_lea.vmem %s8, 128
        %v3861 = vld [vmem:[%s3860] sm:$0xf]
        %v3862 = vld [vmem:[%s3860 + $0x4] sm:$0xf]
        %v3863 = vld [vmem:[%s3860 + $0x8] sm:$0xf]
        %v3864 = vld [vmem:[%s3860 + $0xc] sm:$0xf]
        %v3865 = vld [vmem:[%s3860 + $0x10] sm:$0xf]
        %v3866 = vld [vmem:[%s3860 + $0x14] sm:$0xf]
        %v3867 = vld [vmem:[%s3860 + $0x18] sm:$0xf]
        %v3868 = vld [vmem:[%s3860 + $0x1c] sm:$0xf]
        %v3869 = vld [vmem:[%s3860 + $0x20] sm:$0xf]
        %v3870 = vld [vmem:[%s3860 + $0x24] sm:$0xf]
        %v3871 = vld [vmem:[%s3860 + $0x28] sm:$0xf]
        %v3872 = vld [vmem:[%s3860 + $0x2c] sm:$0xf]
        %v3873 = vld [vmem:[%s3860 + $0x30] sm:$0xf]
        %v3874 = vld [vmem:[%s3860 + $0x34] sm:$0xf]
        %v3875 = vld [vmem:[%s3860 + $0x38] sm:$0xf]
        %v3876 = vld [vmem:[%s3860 + $0x3c] sm:$0xf]
        %v3877 = vld [vmem:[%s3860 + $0x40] sm:$0xf]
        %v3878 = vld [vmem:[%s3860 + $0x44] sm:$0xf]
        %v3879 = vld [vmem:[%s3860 + $0x48] sm:$0xf]
        %v3880 = vld [vmem:[%s3860 + $0x4c] sm:$0xf]
        %v3881 = vld [vmem:[%s3860 + $0x50] sm:$0xf]
        %v3882 = vld [vmem:[%s3860 + $0x54] sm:$0xf]
        %v3883 = vld [vmem:[%s3860 + $0x58] sm:$0xf]
        %v3884 = vld [vmem:[%s3860 + $0x5c] sm:$0xf]
        %v3885 = vld [vmem:[%s3860 + $0x60] sm:$0xf]
        %v3886 = vld [vmem:[%s3860 + $0x64] sm:$0xf]
        %v3887 = vld [vmem:[%s3860 + $0x68] sm:$0xf]
        %v3888 = vld [vmem:[%s3860 + $0x6c] sm:$0xf]
        %v3889 = vld [vmem:[%s3860 + $0x70] sm:$0xf]
        %v3890 = vld [vmem:[%s3860 + $0x74] sm:$0xf]
        %v3891 = vld [vmem:[%s3860 + $0x78] sm:$0xf]
        %v3892 = vld [vmem:[%s3860 + $0x7c] sm:$0xf]
        %v3893 = vlaneseq
        %v3894 = vshrl.u32 %v3893, 7
        %v3895 = vsub.s32 5, %v3894
        %v3896 = vrot.slane %v2275, %v3895
        %v3929 = vunpack.c.l.b16 %v3861
        %v3930 = vunpack.c.l.b16 %v3862
        %v3931 = vunpack.c.l.b16 %v3863
        %v3932 = vunpack.c.l.b16 %v3864
        %v3933 = vunpack.c.l.b16 %v3865
        %v3934 = vunpack.c.l.b16 %v3866
        %v3935 = vunpack.c.l.b16 %v3867
        %v3936 = vunpack.c.l.b16 %v3868
        %v3937 = vunpack.c.l.b16 %v3869
        %v3938 = vunpack.c.l.b16 %v3870
        %v3939 = vunpack.c.l.b16 %v3871
        %v3940 = vunpack.c.l.b16 %v3872
        %v3941 = vunpack.c.l.b16 %v3873
        %v3942 = vunpack.c.l.b16 %v3874
        %v3943 = vunpack.c.l.b16 %v3875
        %v3944 = vunpack.c.l.b16 %v3876
        %v3945 = vunpack.c.l.b16 %v3877
        %v3946 = vunpack.c.l.b16 %v3878
        %v3947 = vunpack.c.l.b16 %v3879
        %v3948 = vunpack.c.l.b16 %v3880
        %v3949 = vunpack.c.l.b16 %v3881
        %v3950 = vunpack.c.l.b16 %v3882
        %v3951 = vunpack.c.l.b16 %v3883
        %v3952 = vunpack.c.l.b16 %v3884
        %v3953 = vunpack.c.l.b16 %v3885
        %v3954 = vunpack.c.l.b16 %v3886
        %v3955 = vunpack.c.l.b16 %v3887
        %v3956 = vunpack.c.l.b16 %v3888
        %v3957 = vunpack.c.l.b16 %v3889
        %v3958 = vunpack.c.l.b16 %v3890
        %v3959 = vunpack.c.l.b16 %v3891
        %v3960 = vunpack.c.l.b16 %v3892
        %v3961 = vpack.c.b16 %v3930, %v3929
        %v3962 = vpack.c.b16 %v3932, %v3931
        %v3963 = vpack.c.b16 %v3934, %v3933
        %v3964 = vpack.c.b16 %v3936, %v3935
        %v3965 = vpack.c.b16 %v3938, %v3937
        %v3966 = vpack.c.b16 %v3940, %v3939
        %v3967 = vpack.c.b16 %v3942, %v3941
        %v3968 = vpack.c.b16 %v3944, %v3943
        %v3969 = vpack.c.b16 %v3946, %v3945
        %v3970 = vpack.c.b16 %v3948, %v3947
        %v3971 = vpack.c.b16 %v3950, %v3949
        %v3972 = vpack.c.b16 %v3952, %v3951
        %v3973 = vpack.c.b16 %v3954, %v3953
        %v3974 = vpack.c.b16 %v3956, %v3955
        %v3975 = vpack.c.b16 %v3958, %v3957
        %v3976 = vpack.c.b16 %v3960, %v3959
        %3993 = vmatprep.subr.bf16.mxu0 0
        %3994 = vmatpush1.bf16.msra.mxu0 %v3968
        %3995 = vmatprep.subr.bf16.mxu0 0
        %3996 = vmatpush1.bf16.msra.mxu0 %v3967
        %3997 = vmatprep.subr.bf16.mxu0 0
        %3998 = vmatpush1.bf16.msra.mxu0 %v3966
        %3999 = vmatprep.subr.bf16.mxu0 0
        %4000 = vmatpush1.bf16.msra.mxu0 %v3965
        %4001 = vmatprep.subr.bf16.mxu0 0
        %4002 = vmatpush1.bf16.msra.mxu0 %v3964
        %4003 = vmatprep.subr.bf16.mxu0 0
        %4004 = vmatpush1.bf16.msra.mxu0 %v3963
        %4005 = vmatprep.subr.bf16.mxu0 0
        %4006 = vmatpush1.bf16.msra.mxu0 %v3962
        %4007 = vmatprep.subr.bf16.mxu0 0
        %4008 = vmatpush1.bf16.msra.mxu0 %v3961
        %4009 = vmatprep.subr.bf16.mxu0 0
        %4010 = vmatpush2.bf16.msra.mxu0 %v3976
        %4011 = vmatprep.subr.bf16.mxu0 0
        %4012 = vmatpush2.bf16.msra.mxu0 %v3975
        %4013 = vmatprep.subr.bf16.mxu0 0
        %4014 = vmatpush2.bf16.msra.mxu0 %v3974
        %4015 = vmatprep.subr.bf16.mxu0 0
        %4016 = vmatpush2.bf16.msra.mxu0 %v3973
        %4017 = vmatprep.subr.bf16.mxu0 0
        %4018 = vmatpush2.bf16.msra.mxu0 %v3972
        %4019 = vmatprep.subr.bf16.mxu0 0
        %4020 = vmatpush2.bf16.msra.mxu0 %v3971
        %4021 = vmatprep.subr.bf16.mxu0 0
        %4022 = vmatpush2.bf16.msra.mxu0 %v3970
        %4023 = vmatprep.subr.bf16.mxu0 0
        %4024 = vmatpush2.bf16.msra.mxu0 %v3969
        %4025 = vmatprep.mubr.bf16.mxu0 %v3859
        %4026 = vmatmul.mubr.bf16.gmra.mxu0 %v3858
        %v4027 = vpop.f32.mrf.mxu0
        %v4028 = vadd.f32 %v3896, %v4027
        %v4029 = vpop.f32.mrf.mxu0
        %v4030 = vpop.f32.mrf.mxu0
        %v4031 = vadd.f32 %v3896, %v4030
        %v4032 = vpop.f32.mrf.mxu0
        %4033 = vdwg.mxu0
        %v4034 = vadd.f32 %v3632, %v4028
        %v4035 = vadd.f32 %v3633, %v4031
        %v4036 = vld [vmem:[%s10] sm:$0x3]
        %4037 = vadd.xlane.f32.xlu0 %v4034
        %v4038 = vpop.xlane.xlu0 %4037
        %4039 = vadd.xlane.f32.xlu0 %v4035
        %v4040 = vpop.xlane.xlu0 %4039
        %v4041 = vmul.f32 %v4038, %v521
        %v4042 = vmul.f32 %v4040, %v521
        %v4043 = vsub.f32 %v4034, %v4041
        %v4044 = vsub.f32 %v4035, %v4042
        %v4045 = vmul.f32 %v4043, %v4043
        %v4046 = vmul.f32 %v4044, %v4044
        %4047 = vadd.xlane.f32.xlu0 %v4045
        %v4048 = vpop.xlane.xlu0 %4047
        %4049 = vadd.xlane.f32.xlu0 %v4046
        %v4050 = vpop.xlane.xlu0 %4049
        %v4051 = vmul.f32 %v4048, %v521
        %v4052 = vmul.f32 %v4050, %v521
        %v4053 = vadd.f32 %v4051, 1e-06
        %v4054 = vadd.f32 %v4052, 1e-06
        %v4055 = vrsqrt.pop %v4053
        %v4056 = vrsqrt.pop %v4054
        %v4057 = vmul.f32 %v4043, %v4055
        %v4058 = vmul.f32 %v4044, %v4056
        %v4059 = vlaneseq
        %v4060 = vshrl.u32 %v4059, 7
        %v4061 = vsub.s32 0, %v4060
        %v4062 = vrot.slane %v4036, %v4061
        %v4063 = vmul.f32 %v4057, %v4062
        %v4064 = vmul.f32 %v4058, %v4062
        %v4065 = vlaneseq
        %v4066 = vshrl.u32 %v4065, 7
        %v4067 = vsub.s32 1, %v4066
        %v4068 = vrot.slane %v4036, %v4067
        %v4069 = vadd.f32 %v4063, %v4068
        %v4070 = vadd.f32 %v4064, %v4068
        %4071 = vst [vmem:[%s394] sm:$0xff] %v4069
        %4072 = vst [vmem:[%s394 + $0x8] sm:$0xff] %v4070
        %s4073 = sand.u32 %s270, 1
        %s4074 = scalar_lea.sflag [#allocation4], %s4073
        %s4075 = sand.u32 %s270, 1
        %s4076 = smul.addr %s4075, 16
        %s4077 = scalar_lea.vmem [#allocation5], %s4076
        // Predicated region
        $region69: #{siglip_vision_model.1} parent=63 // pred_check
          %p4078 = pneg %p280
        $region70: #{siglip_vision_model.1} parent=63 // pred_check_branch
          %4080 = sbr.rel (%p4078) target = $region72
        $region71: #{siglip_vision_model.1} parent=63 // pred_region
          %s4082 = ssub.s32 256, 256
          %4083 = vsyncadd %s4074, %s4082
          %s4084 = smul.addr %s26, 2
          %s4085 = smul.addr %s4084, 128
          %s4086 = scalar_lea.hbm %s11, %s4085
          %s4087 = sshll.u32 %s4077, 4
          %s4088 = int_to_ptr.vmem [resolvable:$true] %s4087
          %4093 = dma.vmem_to_hbm [thread:$0]  %s4088, 256, %s4086, %s4074, 128, 128, 8
        $region72: #{siglip_vision_model.1} parent=63 // pred_fallthru
          _
      $region64: #{siglip_vision_model.1} parent=5 // pred_fallthru
        _
      %p4094 = scmp.le.s32.totalorder 2, %s21
      // Predicated region
      $region73: #{siglip_vision_model.1} parent=5 // pred_check
        %p4095 = pneg %p4094
      $region74: #{siglip_vision_model.1} parent=5 // pred_check_branch
        %4097 = sbr.rel (%p4095) target = $region76
      $region75: #{siglip_vision_model.1} parent=5 // pred_region
        %s4098 = ssub.s32 %s21, 2
        // Predicated region
        $region77: #{siglip_vision_model.1} parent=75 // pred_check
          %p4099 = pneg %p286
        $region78: #{siglip_vision_model.1} parent=75 // pred_check_branch
          %4101 = sbr.rel (%p4099) target = $region80
        $region79: #{siglip_vision_model.1} parent=75 // pred_region
          %s4102 = sand.u32 %s271, 1
          %s4103 = scalar_lea.sflag [#allocation4], %s4102
          %s4104 = sand.u32 %s271, 1
          %s4105 = smul.addr %s4104, 16
          %s4106 = scalar_lea.vmem [#allocation5], %s4105
          %4107 = dma.done %s4103, 256
        $region80: #{siglip_vision_model.1} parent=75 // pred_fallthru
          _
      $region76: #{siglip_vision_model.1} parent=5 // pred_fallthru
        _
    $region6: #{siglip_vision_model.1} parent=1 // loop_footer
      %s25 = sadd.s32 1, %s21
    $region7: #{siglip_vision_model.1} parent=1 // loop_footer_branch
      %20 = sbr.rel target = $region3
    $region8: #{siglip_vision_model.1} parent=1 // loop_exit
      _
    %4108 = vsyncpa [#allocation3], 1
    %s4109 = scalar_lea.sflag [#allocation3], 1
    %4110 = vsyncpa %s4109, 1
    %4111 = vsyncpa [#allocation4], 1
    %s4112 = scalar_lea.sflag [#allocation4], 1
    %4113 = vsyncpa %s4112, 1

</llo_original>
